<compile_context>
chip_gen: v7x
topology: tpu7x:2x2x1
jax: 0.10.0
libtpu: 0.0.40
codegen_flags: <defaults>
</compile_context>

<pallas_src>
import jax
import jax.numpy as jnp
from jax.experimental import pallas as pl
from jax.experimental.pallas import tpu as pltpu


HIDDEN = (1240, 930, 610, 320)
_LANE = 128      # vreg lane width
_SUBLANE = 8     # f32 sublane count


def _round_up(n, m):
    return ((n + m - 1) // m) * m


def _qnet_kernel(x_ref, *refs):
    """Fused MLP: (linear -> ReLU) x4 followed by a final linear.

    refs = (w1, s1, b1, ..., w5, s5, b5, out_ref).
    w*: bf16 or int8 (dequantized via per-output-channel scale s*).
    s*, b*: f32 row vectors (1, out_p).
    Matmuls run bf16 x bf16 on the MXU with f32 accumulation; scale + bias
    are applied in f32, ReLU in f32, and activations are carried to the next
    layer in bf16 to halve spill traffic.
    """
    out_ref = refs[-1]
    param_refs = refs[:-1]
    n_layers = len(param_refs) // 3

    h = x_ref[...]                                    # bf16 (tb, in_dim)
    for l in range(n_layers):
        w_ref, s_ref, b_ref = param_refs[3 * l:3 * l + 3]
        acc = jnp.dot(h, w_ref[...].astype(jnp.bfloat16),
                      preferred_element_type=jnp.float32)
        y = acc * s_ref[...] + b_ref[...]             # scale BEFORE bias
        if l < n_layers - 1:
            h = jnp.maximum(y, 0.0).astype(jnp.bfloat16)
        else:
            out_ref[...] = y.astype(out_ref.dtype)


def init_qnet_params(key, input_dim, output_dim):
    """Deterministic init mirroring nn.Linear's U(-1/sqrt(fan_in), 1/sqrt(fan_in)).

    Returns f32 params; weights are [in, out] (transpose of PyTorch [out, in]).
    """
    dims = [input_dim, *HIDDEN, output_dim]
    params = []
    for i in range(len(dims) - 1):
        fan_in, fan_out = dims[i], dims[i + 1]
        key, kw, kb = jax.random.split(key, 3)
        bound = float(fan_in) ** -0.5
        w = jax.random.uniform(kw, (fan_in, fan_out), jnp.float32, -bound, bound)
        b = jax.random.uniform(kb, (1, fan_out), jnp.float32, -bound, bound)
        params.append((w, b))
    return params


def prepare_qnet_params(params, quantize_hidden=True):
    """One-time prep.

    * fc1: bf16 weight of shape (in_dim, 1280) — raw input dim kept unpadded.
    * fc2..fc5: int8 per-output-channel weights + f32 scales (halves HBM bytes).
    * Output widths (and hidden input widths) zero-padded to 128-lane multiples.
      Padded weights are 0, padded biases 0, padded scales 1 -> exact padding.
    Returns a list of (weight, scale, bias) triples.
    """
    prepared = []
    for idx, (w, b) in enumerate(params):
        fan_in, fan_out = w.shape
        in_p = fan_in if idx == 0 else _round_up(fan_in, _LANE)
        out_p = _round_up(fan_out, _LANE)

        bias = jnp.zeros((1, out_p), jnp.float32).at[:, :fan_out].set(b)

        if quantize_hidden and idx > 0:
            absmax = jnp.max(jnp.abs(w), axis=0)                       # (fan_out,)
            s = jnp.where(absmax > 0, absmax / 127.0, 1.0)
            q = jnp.clip(jnp.round(w / s[None, :]), -127.0, 127.0).astype(jnp.int8)
            w_p = jnp.zeros((in_p, out_p), jnp.int8).at[:fan_in, :fan_out].set(q)
            s_p = jnp.ones((1, out_p), jnp.float32).at[:, :fan_out].set(s)
        else:
            w_p = (jnp.zeros((in_p, out_p), jnp.bfloat16)
                   .at[:fan_in, :fan_out].set(w.astype(jnp.bfloat16)))
            s_p = jnp.ones((1, out_p), jnp.float32)

        prepared.append((w_p, s_p, bias))
    return prepared


def _resident_spec(shape):
    """Full-array block, constant index_map (weight resident across batch grid).

    Single-buffered: the block never changes across grid steps, so the default
    double buffering only wastes VMEM.  Falls back to the default pipeline mode
    if this JAX version rejects Buffered(1).
    """
    try:
        return pl.BlockSpec(shape, lambda i: (0, 0), pipeline_mode=pl.Buffered(1))
    except Exception:
        return pl.BlockSpec(shape, lambda i: (0, 0))


def qnet_forward(x, prepared_params, out_dim, *, batch_tile=256):
    """x: [B, input_dim] float.  prepared_params: output of prepare_qnet_params."""
    batch, in_dim = x.shape
    assert in_dim == prepared_params[0][0].shape[0], "input_dim mismatch"
    out_pad = prepared_params[-1][0].shape[1]

    # Batch tile: sublane-aligned (multiple of 8), at most `batch_tile` rows.
    tb = min(_round_up(batch, _SUBLANE), _round_up(batch_tile, _SUBLANE))
    padded_batch = _round_up(batch, tb)
    grid = (padded_batch // tb,)

    # Feed the kernel bf16 activations; pad the batch only when needed.
    if padded_batch == batch:
        x_p = x.astype(jnp.bfloat16)
    else:
        x_p = (jnp.zeros((padded_batch, in_dim), jnp.bfloat16)
               .at[:batch, :].set(x.astype(jnp.bfloat16)))

    flat_params = []
    param_specs = []
    for w, s, b in prepared_params:
        flat_params.extend([w, s, b])
        param_specs.extend([_resident_spec(w.shape),
                            _resident_spec(s.shape),
                            _resident_spec(b.shape)])

    out_padded = pl.pallas_call(
        _qnet_kernel,
        out_shape=jax.ShapeDtypeStruct((padded_batch, out_pad), jnp.float32),
        grid=grid,
        in_specs=[pl.BlockSpec((tb, in_dim), lambda i: (i, 0))] + param_specs,
        out_specs=pl.BlockSpec((tb, out_pad), lambda i: (i, 0)),
        compiler_params=pltpu.CompilerParams(
            dimension_semantics=("parallel",),   # shard batch tiles across TCs
            vmem_limit_bytes=32 << 20,           # well above the ~5 MiB needed
        ),
    )(x_p, *flat_params)

    return out_padded[:batch, :out_dim]


def qnet_reference(x, prepared_params, out_dim):
    """Pure-JAX reference mirroring the kernel's quantized math exactly."""
    h = x.astype(jnp.bfloat16)
    n = len(prepared_params)
    y = None
    for i, (w, s, b) in enumerate(prepared_params):
        acc = jnp.dot(h, w.astype(jnp.bfloat16),
                      preferred_element_type=jnp.float32)
        y = acc * s + b
        if i < n - 1:
            h = jnp.maximum(y, 0.0).astype(jnp.bfloat16)
    return y[:, :out_dim]


if __name__ == "__main__":
    key = jax.random.PRNGKey(0)

    batch = 2
    input_dim = 8     # small observation vector
    output_dim = 4    # small action space

    kp, kx = jax.random.split(key)
    params = init_qnet_params(kp, input_dim, output_dim)
    prepared = prepare_qnet_params(params)   # one-time: pad + int8/bf16 quantize
    x = jax.random.normal(kx, (batch, input_dim), jnp.float32)

    out = qnet_forward(x, prepared, output_dim)
    out = jax.block_until_ready(out)

    ref = qnet_reference(x, prepared, output_dim)
    assert out.shape == (batch, output_dim)
    assert jnp.allclose(out, ref, atol=1e-2, rtol=1e-2), "mismatch vs reference"

    print("KERNEL_OK")
</pallas_src>

<mosaic_0001>
module attributes {stable_mosaic.version = 11 : i64} {
  func.func @_qnet_kernel(%arg0: i32, %arg1: memref<8x8xbf16, #tpu.memory_space<vmem>>, %arg2: memref<8x1280xbf16, #tpu.memory_space<vmem>>, %arg3: memref<1x1280xf32, #tpu.memory_space<vmem>>, %arg4: memref<1x1280xf32, #tpu.memory_space<vmem>>, %arg5: memref<1280x1024xi8, #tpu.memory_space<vmem>>, %arg6: memref<1x1024xf32, #tpu.memory_space<vmem>>, %arg7: memref<1x1024xf32, #tpu.memory_space<vmem>>, %arg8: memref<1024x640xi8, #tpu.memory_space<vmem>>, %arg9: memref<1x640xf32, #tpu.memory_space<vmem>>, %arg10: memref<1x640xf32, #tpu.memory_space<vmem>>, %arg11: memref<640x384xi8, #tpu.memory_space<vmem>>, %arg12: memref<1x384xf32, #tpu.memory_space<vmem>>, %arg13: memref<1x384xf32, #tpu.memory_space<vmem>>, %arg14: memref<384x128xi8, #tpu.memory_space<vmem>>, %arg15: memref<1x128xf32, #tpu.memory_space<vmem>>, %arg16: memref<1x128xf32, #tpu.memory_space<vmem>>, %arg17: memref<8x128xf32, #tpu.memory_space<vmem>>) attributes {dimension_semantics = [#tpu.dimension_semantics<parallel>], iteration_bounds = array<i64: 1>, scalar_prefetch = 0 : i64, scratch_operands = 0 : i64, tpu.core_type = #tpu.core_type<tc>, window_params = [{transform_indices = @transform_0, window_bounds = array<i64: 8, 8>}, {pipeline_mode = #tpu.pipeline_mode<synchronous>, transform_indices = @transform_1, window_bounds = array<i64: 8, 1280>}, {pipeline_mode = #tpu.pipeline_mode<synchronous>, transform_indices = @transform_2, window_bounds = array<i64: 1, 1280>}, {pipeline_mode = #tpu.pipeline_mode<synchronous>, transform_indices = @transform_3, window_bounds = array<i64: 1, 1280>}, {pipeline_mode = #tpu.pipeline_mode<synchronous>, transform_indices = @transform_4, window_bounds = array<i64: 1280, 1024>}, {pipeline_mode = #tpu.pipeline_mode<synchronous>, transform_indices = @transform_5, window_bounds = array<i64: 1, 1024>}, {pipeline_mode = #tpu.pipeline_mode<synchronous>, transform_indices = @transform_6, window_bounds = array<i64: 1, 1024>}, {pipeline_mode = #tpu.pipeline_mode<synchronous>, transform_indices = @transform_7, window_bounds = array<i64: 1024, 640>}, {pipeline_mode = #tpu.pipeline_mode<synchronous>, transform_indices = @transform_8, window_bounds = array<i64: 1, 640>}, {pipeline_mode = #tpu.pipeline_mode<synchronous>, transform_indices = @transform_9, window_bounds = array<i64: 1, 640>}, {pipeline_mode = #tpu.pipeline_mode<synchronous>, transform_indices = @transform_10, window_bounds = array<i64: 640, 384>}, {pipeline_mode = #tpu.pipeline_mode<synchronous>, transform_indices = @transform_11, window_bounds = array<i64: 1, 384>}, {pipeline_mode = #tpu.pipeline_mode<synchronous>, transform_indices = @transform_12, window_bounds = array<i64: 1, 384>}, {pipeline_mode = #tpu.pipeline_mode<synchronous>, transform_indices = @transform_13, window_bounds = array<i64: 384, 128>}, {pipeline_mode = #tpu.pipeline_mode<synchronous>, transform_indices = @transform_14, window_bounds = array<i64: 1, 128>}, {pipeline_mode = #tpu.pipeline_mode<synchronous>, transform_indices = @transform_15, window_bounds = array<i64: 1, 128>}, {transform_indices = @transform_16, window_bounds = array<i64: 8, 128>}]} {
    %c0 = arith.constant 0 : index
    %c0_0 = arith.constant 0 : index
    %0 = vector.load %arg1[%c0, %c0_0] : memref<8x8xbf16, #tpu.memory_space<vmem>>, vector<8x8xbf16>
    %c0_1 = arith.constant 0 : index
    %c0_2 = arith.constant 0 : index
    %1 = vector.load %arg2[%c0_1, %c0_2] : memref<8x1280xbf16, #tpu.memory_space<vmem>>, vector<8x1280xbf16>
    %cst = arith.constant dense<0.000000e+00> : vector<8x1280xf32>
    %2 = tpu.matmul %0, %1, %cst {dimension_numbers = #tpu.dot_dimension_numbers<[1], [0], [0], [1], [0, 0, 1, 1], [], []>} : vector<8x8xbf16>, vector<8x1280xbf16>, vector<8x1280xf32> -> vector<8x1280xf32>
    %c0_3 = arith.constant 0 : index
    %c0_4 = arith.constant 0 : index
    %3 = vector.load %arg3[%c0_3, %c0_4] : memref<1x1280xf32, #tpu.memory_space<vmem>>, vector<1x1280xf32>
    %4 = vector.broadcast %3 : vector<1x1280xf32> to vector<8x1280xf32>
    %5 = arith.mulf %2, %4 : vector<8x1280xf32>
    %c0_5 = arith.constant 0 : index
    %c0_6 = arith.constant 0 : index
    %6 = vector.load %arg4[%c0_5, %c0_6] : memref<1x1280xf32, #tpu.memory_space<vmem>>, vector<1x1280xf32>
    %7 = vector.broadcast %6 : vector<1x1280xf32> to vector<8x1280xf32>
    %8 = arith.addf %5, %7 : vector<8x1280xf32>
    %cst_7 = arith.constant 0.000000e+00 : f32
    %9 = vector.broadcast %cst_7 : f32 to vector<8x1280xf32>
    %10 = arith.maximumf %8, %9 : vector<8x1280xf32>
    %11 = arith.truncf %10 : vector<8x1280xf32> to vector<8x1280xbf16>
    %c0_8 = arith.constant 0 : index
    %c0_9 = arith.constant 0 : index
    %12 = vector.load %arg5[%c0_8, %c0_9] : memref<1280x1024xi8, #tpu.memory_space<vmem>>, vector<1280x1024xi8>
    %13 = arith.sitofp %12 : vector<1280x1024xi8> to vector<1280x1024xbf16>
    %cst_10 = arith.constant dense<0.000000e+00> : vector<8x1024xf32>
    %14 = tpu.matmul %11, %13, %cst_10 {dimension_numbers = #tpu.dot_dimension_numbers<[1], [0], [0], [1], [0, 0, 1, 1], [], []>} : vector<8x1280xbf16>, vector<1280x1024xbf16>, vector<8x1024xf32> -> vector<8x1024xf32>
    %c0_11 = arith.constant 0 : index
    %c0_12 = arith.constant 0 : index
    %15 = vector.load %arg6[%c0_11, %c0_12] : memref<1x1024xf32, #tpu.memory_space<vmem>>, vector<1x1024xf32>
    %16 = vector.broadcast %15 : vector<1x1024xf32> to vector<8x1024xf32>
    %17 = arith.mulf %14, %16 : vector<8x1024xf32>
    %c0_13 = arith.constant 0 : index
    %c0_14 = arith.constant 0 : index
    %18 = vector.load %arg7[%c0_13, %c0_14] : memref<1x1024xf32, #tpu.memory_space<vmem>>, vector<1x1024xf32>
    %19 = vector.broadcast %18 : vector<1x1024xf32> to vector<8x1024xf32>
    %20 = arith.addf %17, %19 : vector<8x1024xf32>
    %cst_15 = arith.constant 0.000000e+00 : f32
    %21 = vector.broadcast %cst_15 : f32 to vector<8x1024xf32>
    %22 = arith.maximumf %20, %21 : vector<8x1024xf32>
    %23 = arith.truncf %22 : vector<8x1024xf32> to vector<8x1024xbf16>
    %c0_16 = arith.constant 0 : index
    %c0_17 = arith.constant 0 : index
    %24 = vector.load %arg8[%c0_16, %c0_17] : memref<1024x640xi8, #tpu.memory_space<vmem>>, vector<1024x640xi8>
    %25 = arith.sitofp %24 : vector<1024x640xi8> to vector<1024x640xbf16>
    %cst_18 = arith.constant dense<0.000000e+00> : vector<8x640xf32>
    %26 = tpu.matmul %23, %25, %cst_18 {dimension_numbers = #tpu.dot_dimension_numbers<[1], [0], [0], [1], [0, 0, 1, 1], [], []>} : vector<8x1024xbf16>, vector<1024x640xbf16>, vector<8x640xf32> -> vector<8x640xf32>
    %c0_19 = arith.constant 0 : index
    %c0_20 = arith.constant 0 : index
    %27 = vector.load %arg9[%c0_19, %c0_20] : memref<1x640xf32, #tpu.memory_space<vmem>>, vector<1x640xf32>
    %28 = vector.broadcast %27 : vector<1x640xf32> to vector<8x640xf32>
    %29 = arith.mulf %26, %28 : vector<8x640xf32>
    %c0_21 = arith.constant 0 : index
    %c0_22 = arith.constant 0 : index
    %30 = vector.load %arg10[%c0_21, %c0_22] : memref<1x640xf32, #tpu.memory_space<vmem>>, vector<1x640xf32>
    %31 = vector.broadcast %30 : vector<1x640xf32> to vector<8x640xf32>
    %32 = arith.addf %29, %31 : vector<8x640xf32>
    %cst_23 = arith.constant 0.000000e+00 : f32
    %33 = vector.broadcast %cst_23 : f32 to vector<8x640xf32>
    %34 = arith.maximumf %32, %33 : vector<8x640xf32>
    %35 = arith.truncf %34 : vector<8x640xf32> to vector<8x640xbf16>
    %c0_24 = arith.constant 0 : index
    %c0_25 = arith.constant 0 : index
    %36 = vector.load %arg11[%c0_24, %c0_25] : memref<640x384xi8, #tpu.memory_space<vmem>>, vector<640x384xi8>
    %37 = arith.sitofp %36 : vector<640x384xi8> to vector<640x384xbf16>
    %cst_26 = arith.constant dense<0.000000e+00> : vector<8x384xf32>
    %38 = tpu.matmul %35, %37, %cst_26 {dimension_numbers = #tpu.dot_dimension_numbers<[1], [0], [0], [1], [0, 0, 1, 1], [], []>} : vector<8x640xbf16>, vector<640x384xbf16>, vector<8x384xf32> -> vector<8x384xf32>
    %c0_27 = arith.constant 0 : index
    %c0_28 = arith.constant 0 : index
    %39 = vector.load %arg12[%c0_27, %c0_28] : memref<1x384xf32, #tpu.memory_space<vmem>>, vector<1x384xf32>
    %40 = vector.broadcast %39 : vector<1x384xf32> to vector<8x384xf32>
    %41 = arith.mulf %38, %40 : vector<8x384xf32>
    %c0_29 = arith.constant 0 : index
    %c0_30 = arith.constant 0 : index
    %42 = vector.load %arg13[%c0_29, %c0_30] : memref<1x384xf32, #tpu.memory_space<vmem>>, vector<1x384xf32>
    %43 = vector.broadcast %42 : vector<1x384xf32> to vector<8x384xf32>
    %44 = arith.addf %41, %43 : vector<8x384xf32>
    %cst_31 = arith.constant 0.000000e+00 : f32
    %45 = vector.broadcast %cst_31 : f32 to vector<8x384xf32>
    %46 = arith.maximumf %44, %45 : vector<8x384xf32>
    %47 = arith.truncf %46 : vector<8x384xf32> to vector<8x384xbf16>
    %c0_32 = arith.constant 0 : index
    %c0_33 = arith.constant 0 : index
    %48 = vector.load %arg14[%c0_32, %c0_33] : memref<384x128xi8, #tpu.memory_space<vmem>>, vector<384x128xi8>
    %49 = arith.sitofp %48 : vector<384x128xi8> to vector<384x128xbf16>
    %cst_34 = arith.constant dense<0.000000e+00> : vector<8x128xf32>
    %50 = tpu.matmul %47, %49, %cst_34 {dimension_numbers = #tpu.dot_dimension_numbers<[1], [0], [0], [1], [0, 0, 1, 1], [], []>} : vector<8x384xbf16>, vector<384x128xbf16>, vector<8x128xf32> -> vector<8x128xf32>
    %c0_35 = arith.constant 0 : index
    %c0_36 = arith.constant 0 : index
    %51 = vector.load %arg15[%c0_35, %c0_36] : memref<1x128xf32, #tpu.memory_space<vmem>>, vector<1x128xf32>
    %52 = vector.broadcast %51 : vector<1x128xf32> to vector<8x128xf32>
    %53 = arith.mulf %50, %52 : vector<8x128xf32>
    %c0_37 = arith.constant 0 : index
    %c0_38 = arith.constant 0 : index
    %54 = vector.load %arg16[%c0_37, %c0_38] : memref<1x128xf32, #tpu.memory_space<vmem>>, vector<1x128xf32>
    %55 = vector.broadcast %54 : vector<1x128xf32> to vector<8x128xf32>
    %56 = arith.addf %53, %55 : vector<8x128xf32>
    %c0_39 = arith.constant 0 : index
    %c0_40 = arith.constant 0 : index
    %57 = vector.load %arg17[%c0_39, %c0_40] : memref<8x128xf32, #tpu.memory_space<vmem>>, vector<8x128xf32>
    tpu.vector_store %arg17[%c0_39, %c0_40], %56 {strides = array<i32>} : memref<8x128xf32, #tpu.memory_space<vmem>>, vector<8x128xf32>,
    return
  }
  func.func @transform_0(%arg0: i32) -> (i32, i32) {
    %c0_i32 = arith.constant 0 : i32
    %c0_i32_0 = arith.constant 0 : i32
    return %arg0, %c0_i32 : i32, i32
  }
  func.func @transform_1(%arg0: i32) -> (i32, i32) {
    %c0_i32 = arith.constant 0 : i32
    %c0_i32_0 = arith.constant 0 : i32
    %c0_i32_1 = arith.constant 0 : i32
    return %c0_i32, %c0_i32_0 : i32, i32
  }
  func.func @transform_2(%arg0: i32) -> (i32, i32) {
    %c0_i32 = arith.constant 0 : i32
    %c0_i32_0 = arith.constant 0 : i32
    %c0_i32_1 = arith.constant 0 : i32
    return %c0_i32, %c0_i32_0 : i32, i32
  }
  func.func @transform_3(%arg0: i32) -> (i32, i32) {
    %c0_i32 = arith.constant 0 : i32
    %c0_i32_0 = arith.constant 0 : i32
    %c0_i32_1 = arith.constant 0 : i32
    return %c0_i32, %c0_i32_0 : i32, i32
  }
  func.func @transform_4(%arg0: i32) -> (i32, i32) {
    %c0_i32 = arith.constant 0 : i32
    %c0_i32_0 = arith.constant 0 : i32
    %c0_i32_1 = arith.constant 0 : i32
    return %c0_i32, %c0_i32_0 : i32, i32
  }
  func.func @transform_5(%arg0: i32) -> (i32, i32) {
    %c0_i32 = arith.constant 0 : i32
    %c0_i32_0 = arith.constant 0 : i32
    %c0_i32_1 = arith.constant 0 : i32
    return %c0_i32, %c0_i32_0 : i32, i32
  }
  func.func @transform_6(%arg0: i32) -> (i32, i32) {
    %c0_i32 = arith.constant 0 : i32
    %c0_i32_0 = arith.constant 0 : i32
    %c0_i32_1 = arith.constant 0 : i32
    return %c0_i32, %c0_i32_0 : i32, i32
  }
  func.func @transform_7(%arg0: i32) -> (i32, i32) {
    %c0_i32 = arith.constant 0 : i32
    %c0_i32_0 = arith.constant 0 : i32
    %c0_i32_1 = arith.constant 0 : i32
    return %c0_i32, %c0_i32_0 : i32, i32
  }
  func.func @transform_8(%arg0: i32) -> (i32, i32) {
    %c0_i32 = arith.constant 0 : i32
    %c0_i32_0 = arith.constant 0 : i32
    %c0_i32_1 = arith.constant 0 : i32
    return %c0_i32, %c0_i32_0 : i32, i32
  }
  func.func @transform_9(%arg0: i32) -> (i32, i32) {
    %c0_i32 = arith.constant 0 : i32
    %c0_i32_0 = arith.constant 0 : i32
    %c0_i32_1 = arith.constant 0 : i32
    return %c0_i32, %c0_i32_0 : i32, i32
  }
  func.func @transform_10(%arg0: i32) -> (i32, i32) {
    %c0_i32 = arith.constant 0 : i32
    %c0_i32_0 = arith.constant 0 : i32
    %c0_i32_1 = arith.constant 0 : i32
    return %c0_i32, %c0_i32_0 : i32, i32
  }
  func.func @transform_11(%arg0: i32) -> (i32, i32) {
    %c0_i32 = arith.constant 0 : i32
    %c0_i32_0 = arith.constant 0 : i32
    %c0_i32_1 = arith.constant 0 : i32
    return %c0_i32, %c0_i32_0 : i32, i32
  }
  func.func @transform_12(%arg0: i32) -> (i32, i32) {
    %c0_i32 = arith.constant 0 : i32
    %c0_i32_0 = arith.constant 0 : i32
    %c0_i32_1 = arith.constant 0 : i32
    return %c0_i32, %c0_i32_0 : i32, i32
  }
  func.func @transform_13(%arg0: i32) -> (i32, i32) {
    %c0_i32 = arith.constant 0 : i32
    %c0_i32_0 = arith.constant 0 : i32
    %c0_i32_1 = arith.constant 0 : i32
    return %c0_i32, %c0_i32_0 : i32, i32
  }
  func.func @transform_14(%arg0: i32) -> (i32, i32) {
    %c0_i32 = arith.constant 0 : i32
    %c0_i32_0 = arith.constant 0 : i32
    %c0_i32_1 = arith.constant 0 : i32
    return %c0_i32, %c0_i32_0 : i32, i32
  }
  func.func @transform_15(%arg0: i32) -> (i32, i32) {
    %c0_i32 = arith.constant 0 : i32
    %c0_i32_0 = arith.constant 0 : i32
    %c0_i32_1 = arith.constant 0 : i32
    return %c0_i32, %c0_i32_0 : i32, i32
  }
  func.func @transform_16(%arg0: i32) -> (i32, i32) {
    %c0_i32 = arith.constant 0 : i32
    %c0_i32_0 = arith.constant 0 : i32
    return %arg0, %c0_i32 : i32, i32
  }
}

</mosaic_0001>

<llo_original>
// kernel: tpu_custom_call.1
$region0: #{tpu_custom_call.1}
  #allocation0 [shape = 'u32[]', space=smem, size = 0x4, offset = 0x4, fixed_abs, tag = 'smem constant byte address 0x4 - core index']
  #allocation1 [shape = 'u32[144,128]{1,0:T(1,128)}', space=vmem, size = 0x12000, scoped, tag = 'internal scratch']
  %s0 = inlined_call_operand.hbm [shape: bf16[8,8], index: 0, kind: input, shape index: {}]
  %s1 = inlined_call_operand.hbm [shape: bf16[8,1280], index: 1, kind: input, shape index: {}]
  %s2 = inlined_call_operand.hbm [shape: f32[1,1280], index: 2, kind: input, shape index: {}]
  %s3 = inlined_call_operand.hbm [shape: f32[1,1280], index: 3, kind: input, shape index: {}]
  %s4 = inlined_call_operand.hbm [shape: s8[1280,1024], index: 4, kind: input, shape index: {}]
  %s5 = inlined_call_operand.hbm [shape: f32[1,1024], index: 5, kind: input, shape index: {}]
  %s6 = inlined_call_operand.hbm [shape: f32[1,1024], index: 6, kind: input, shape index: {}]
  %s7 = inlined_call_operand.hbm [shape: s8[1024,640], index: 7, kind: input, shape index: {}]
  %s8 = inlined_call_operand.hbm [shape: f32[1,640], index: 8, kind: input, shape index: {}]
  %s9 = inlined_call_operand.hbm [shape: f32[1,640], index: 9, kind: input, shape index: {}]
  %s10 = inlined_call_operand.hbm [shape: s8[640,384], index: 10, kind: input, shape index: {}]
  %s11 = inlined_call_operand.hbm [shape: f32[1,384], index: 11, kind: input, shape index: {}]
  %s12 = inlined_call_operand.hbm [shape: f32[1,384], index: 12, kind: input, shape index: {}]
  %s13 = inlined_call_operand.hbm [shape: s8[384,128], index: 13, kind: input, shape index: {}]
  %s14 = inlined_call_operand.hbm [shape: f32[1,128], index: 14, kind: input, shape index: {}]
  %s15 = inlined_call_operand.hbm [shape: f32[1,128], index: 15, kind: input, shape index: {}]
  %s16 = inlined_call_operand.hbm [shape: f32[8,128], index: 16, kind: output, shape index: {}]
  %s17 = sld [smem:[#allocation0]]
  $region138: #{tpu_custom_call.1} parent=0
    _
  %s19 = ssub.s32 1, %s17
  %s20 = scalar_select 0, %s19, %s17
  $region1: #{tpu_custom_call.1} parent=0
    #allocation2 [shape = 'u8[2048]{0}', space=vmem, size = 0x800, scoped, tag = 'input window, operand 0, single buffered']
    #allocation3 [shape = 's32[1]{0}', space=sflag, size = 0x4, scoped, tag = 'scoped memory for tpu_custom_call.1']
    #allocation4 [shape = 's32[1]{0}', space=sflag, size = 0x4, scoped, tag = 'scoped memory for tpu_custom_call.1']
    #allocation5 [shape = 'u8[20480]{0}', space=vmem, size = 0x5000, scoped, tag = 'input window, operand 1, single buffered']
    #allocation6 [shape = 's32[1]{0}', space=sflag, size = 0x4, scoped, tag = 'scoped memory for tpu_custom_call.1']
    #allocation7 [shape = 'u8[5120]{0}', space=vmem, size = 0x1400, scoped, tag = 'input window, operand 2, single buffered']
    #allocation8 [shape = 'u8[5120]{0}', space=vmem, size = 0x1400, scoped, tag = 'input window, operand 3, single buffered']
    #allocation9 [shape = 's32[1]{0}', space=sflag, size = 0x4, scoped, tag = 'scoped memory for tpu_custom_call.1']
    #allocation10 [shape = 'u8[1310720]{0}', space=vmem, size = 0x140000, scoped, tag = 'input window, operand 4, single buffered']
    #allocation11 [shape = 'u8[4096]{0}', space=vmem, size = 0x1000, scoped, tag = 'input window, operand 5, single buffered']
    #allocation12 [shape = 's32[1]{0}', space=sflag, size = 0x4, scoped, tag = 'scoped memory for tpu_custom_call.1']
    #allocation13 [shape = 'u8[4096]{0}', space=vmem, size = 0x1000, scoped, tag = 'input window, operand 6, single buffered']
    #allocation14 [shape = 'u8[655360]{0}', space=vmem, size = 0xa0000, scoped, tag = 'input window, operand 7, single buffered']
    #allocation15 [shape = 's32[1]{0}', space=sflag, size = 0x4, scoped, tag = 'scoped memory for tpu_custom_call.1']
    #allocation16 [shape = 'u8[2560]{0}', space=vmem, size = 0xc00, scoped, tag = 'input window, operand 8, single buffered']
    #allocation17 [shape = 'u8[2560]{0}', space=vmem, size = 0xc00, scoped, tag = 'input window, operand 9, single buffered']
    #allocation18 [shape = 's32[1]{0}', space=sflag, size = 0x4, scoped, tag = 'scoped memory for tpu_custom_call.1']
    #allocation19 [shape = 'u8[245760]{0}', space=vmem, size = 0x3c000, scoped, tag = 'input window, operand 10, single buffered']
    #allocation20 [shape = 'u8[1536]{0}', space=vmem, size = 0x800, scoped, tag = 'input window, operand 11, single buffered']
    #allocation21 [shape = 's32[1]{0}', space=sflag, size = 0x4, scoped, tag = 'scoped memory for tpu_custom_call.1']
    #allocation22 [shape = 'u8[1536]{0}', space=vmem, size = 0x800, scoped, tag = 'input window, operand 12, single buffered']
    #allocation23 [shape = 'u8[49152]{0}', space=vmem, size = 0xc000, scoped, tag = 'input window, operand 13, single buffered']
    #allocation24 [shape = 's32[1]{0}', space=sflag, size = 0x4, scoped, tag = 'scoped memory for tpu_custom_call.1']
    #allocation25 [shape = 'u8[512]{0}', space=vmem, size = 0x400, scoped, tag = 'input window, operand 14, single buffered']
    #allocation26 [shape = 'u8[512]{0}', space=vmem, size = 0x400, scoped, tag = 'input window, operand 15, single buffered']
    #allocation27 [shape = 's32[1]{0}', space=sflag, size = 0x4, scoped, tag = 'scoped memory for tpu_custom_call.1']
    #allocation28 [shape = 'u8[4096]{0}', space=vmem, size = 0x1000, scoped, tag = 'output window, operand 0, single buffered']
    %21 = vsyncpa [#allocation3], 0
    %22 = vsyncpa [#allocation6], 0
    %23 = vsyncpa [#allocation9], 0
    %24 = vsyncpa [#allocation12], 0
    %25 = vsyncpa [#allocation15], 0
    %26 = vsyncpa [#allocation18], 0
    %27 = vsyncpa [#allocation21], 0
    %28 = vsyncpa [#allocation24], 0
    %29 = vsyncpa [#allocation27], 0
    %30 = vsyncpa [#allocation4], 0
    // Predicated region
    $region2: #{tpu_custom_call.1} parent=1 // pred_check
      _
    $region3: #{tpu_custom_call.1} parent=1 // pred_check_branch
      %32 = sbr.rel (0) target = $region5
    $region4: #{tpu_custom_call.1} parent=1 // pred_region
      %s34 = ssub.s32 64, 64
      %35 = vsyncadd [#allocation3], %s34
      %s37 = sshll.u32 [#allocation2], 4
      %s38 = int_to_ptr.vmem [resolvable:$true] %s37
      %40 = dma.hbm_to_vmem [thread:$0]  %s0, 64, %s38, [#allocation3]
    $region5: #{tpu_custom_call.1} parent=1 // pred_fallthru
      _
    // Predicated region
    $region6: #{tpu_custom_call.1} parent=1 // pred_check
      _
    $region7: #{tpu_custom_call.1} parent=1 // pred_check_branch
      %42 = sbr.rel (0) target = $region9
    $region8: #{tpu_custom_call.1} parent=1 // pred_region
      %s44 = ssub.s32 640, 640
      %45 = vsyncadd [#allocation6], %s44
      %s47 = sshll.u32 [#allocation5], 4
      %s48 = int_to_ptr.vmem [resolvable:$true] %s47
      %50 = dma.hbm_to_vmem [thread:$0]  %s1, 640, %s48, [#allocation6]
    $region9: #{tpu_custom_call.1} parent=1 // pred_fallthru
      _
    // Predicated region
    $region10: #{tpu_custom_call.1} parent=1 // pred_check
      _
    $region11: #{tpu_custom_call.1} parent=1 // pred_check_branch
      %52 = sbr.rel (0) target = $region13
    $region12: #{tpu_custom_call.1} parent=1 // pred_region
      %s54 = ssub.s32 160, 160
      %55 = vsyncadd [#allocation6], %s54
      %s57 = sshll.u32 [#allocation7], 4
      %s58 = int_to_ptr.vmem [resolvable:$true] %s57
      %60 = dma.hbm_to_vmem [thread:$0]  %s2, 160, %s58, [#allocation6]
    $region13: #{tpu_custom_call.1} parent=1 // pred_fallthru
      _
    // Predicated region
    $region14: #{tpu_custom_call.1} parent=1 // pred_check
      _
    $region15: #{tpu_custom_call.1} parent=1 // pred_check_branch
      %62 = sbr.rel (0) target = $region17
    $region16: #{tpu_custom_call.1} parent=1 // pred_region
      %s64 = ssub.s32 160, 160
      %65 = vsyncadd [#allocation9], %s64
      %s67 = sshll.u32 [#allocation8], 4
      %s68 = int_to_ptr.vmem [resolvable:$true] %s67
      %70 = dma.hbm_to_vmem [thread:$0]  %s3, 160, %s68, [#allocation9]
    $region17: #{tpu_custom_call.1} parent=1 // pred_fallthru
      _
    // Predicated region
    $region18: #{tpu_custom_call.1} parent=1 // pred_check
      _
    $region19: #{tpu_custom_call.1} parent=1 // pred_check_branch
      %72 = sbr.rel (0) target = $region21
    $region20: #{tpu_custom_call.1} parent=1 // pred_region
      %s74 = ssub.s32 40960, 40960
      %75 = vsyncadd [#allocation9], %s74
      %s76 = sshll.u32 [#allocation10], 4
      %s77 = int_to_ptr.vmem [resolvable:$true] %s76
      %82 = dma.hbm_to_vmem [thread:$0]  %s4, 40960, %s77, [#allocation9], 1024, 1024, 64
    $region21: #{tpu_custom_call.1} parent=1 // pred_fallthru
      _
    // Predicated region
    $region22: #{tpu_custom_call.1} parent=1 // pred_check
      _
    $region23: #{tpu_custom_call.1} parent=1 // pred_check_branch
      %84 = sbr.rel (0) target = $region25
    $region24: #{tpu_custom_call.1} parent=1 // pred_region
      %s86 = ssub.s32 128, 128
      %87 = vsyncadd [#allocation12], %s86
      %s89 = sshll.u32 [#allocation11], 4
      %s90 = int_to_ptr.vmem [resolvable:$true] %s89
      %92 = dma.hbm_to_vmem [thread:$0]  %s5, 128, %s90, [#allocation12]
    $region25: #{tpu_custom_call.1} parent=1 // pred_fallthru
      _
    // Predicated region
    $region26: #{tpu_custom_call.1} parent=1 // pred_check
      _
    $region27: #{tpu_custom_call.1} parent=1 // pred_check_branch
      %94 = sbr.rel (0) target = $region29
    $region28: #{tpu_custom_call.1} parent=1 // pred_region
      %s96 = ssub.s32 128, 128
      %97 = vsyncadd [#allocation12], %s96
      %s99 = sshll.u32 [#allocation13], 4
      %s100 = int_to_ptr.vmem [resolvable:$true] %s99
      %102 = dma.hbm_to_vmem [thread:$0]  %s6, 128, %s100, [#allocation12]
    $region29: #{tpu_custom_call.1} parent=1 // pred_fallthru
      _
    // Predicated region
    $region30: #{tpu_custom_call.1} parent=1 // pred_check
      _
    $region31: #{tpu_custom_call.1} parent=1 // pred_check_branch
      %104 = sbr.rel (0) target = $region33
    $region32: #{tpu_custom_call.1} parent=1 // pred_region
      %s106 = ssub.s32 20480, 20480
      %107 = vsyncadd [#allocation15], %s106
      %s108 = sshll.u32 [#allocation14], 4
      %s109 = int_to_ptr.vmem [resolvable:$true] %s108
      %114 = dma.hbm_to_vmem [thread:$0]  %s7, 20480, %s109, [#allocation15], 640, 640, 40
    $region33: #{tpu_custom_call.1} parent=1 // pred_fallthru
      _
    // Predicated region
    $region34: #{tpu_custom_call.1} parent=1 // pred_check
      _
    $region35: #{tpu_custom_call.1} parent=1 // pred_check_branch
      %116 = sbr.rel (0) target = $region37
    $region36: #{tpu_custom_call.1} parent=1 // pred_region
      %s118 = ssub.s32 80, 80
      %119 = vsyncadd [#allocation15], %s118
      %s121 = sshll.u32 [#allocation16], 4
      %s122 = int_to_ptr.vmem [resolvable:$true] %s121
      %124 = dma.hbm_to_vmem [thread:$0]  %s8, 80, %s122, [#allocation15]
    $region37: #{tpu_custom_call.1} parent=1 // pred_fallthru
      _
    // Predicated region
    $region38: #{tpu_custom_call.1} parent=1 // pred_check
      _
    $region39: #{tpu_custom_call.1} parent=1 // pred_check_branch
      %126 = sbr.rel (0) target = $region41
    $region40: #{tpu_custom_call.1} parent=1 // pred_region
      %s128 = ssub.s32 80, 80
      %129 = vsyncadd [#allocation18], %s128
      %s131 = sshll.u32 [#allocation17], 4
      %s132 = int_to_ptr.vmem [resolvable:$true] %s131
      %134 = dma.hbm_to_vmem [thread:$0]  %s9, 80, %s132, [#allocation18]
    $region41: #{tpu_custom_call.1} parent=1 // pred_fallthru
      _
    // Predicated region
    $region42: #{tpu_custom_call.1} parent=1 // pred_check
      _
    $region43: #{tpu_custom_call.1} parent=1 // pred_check_branch
      %136 = sbr.rel (0) target = $region45
    $region44: #{tpu_custom_call.1} parent=1 // pred_region
      %s138 = ssub.s32 7680, 7680
      %139 = vsyncadd [#allocation18], %s138
      %s140 = sshll.u32 [#allocation19], 4
      %s141 = int_to_ptr.vmem [resolvable:$true] %s140
      %146 = dma.hbm_to_vmem [thread:$0]  %s10, 7680, %s141, [#allocation18], 384, 384, 24
    $region45: #{tpu_custom_call.1} parent=1 // pred_fallthru
      _
    // Predicated region
    $region46: #{tpu_custom_call.1} parent=1 // pred_check
      _
    $region47: #{tpu_custom_call.1} parent=1 // pred_check_branch
      %148 = sbr.rel (0) target = $region49
    $region48: #{tpu_custom_call.1} parent=1 // pred_region
      %s150 = ssub.s32 48, 48
      %151 = vsyncadd [#allocation21], %s150
      %s153 = sshll.u32 [#allocation20], 4
      %s154 = int_to_ptr.vmem [resolvable:$true] %s153
      %156 = dma.hbm_to_vmem [thread:$0]  %s11, 48, %s154, [#allocation21]
    $region49: #{tpu_custom_call.1} parent=1 // pred_fallthru
      _
    // Predicated region
    $region50: #{tpu_custom_call.1} parent=1 // pred_check
      _
    $region51: #{tpu_custom_call.1} parent=1 // pred_check_branch
      %158 = sbr.rel (0) target = $region53
    $region52: #{tpu_custom_call.1} parent=1 // pred_region
      %s160 = ssub.s32 48, 48
      %161 = vsyncadd [#allocation21], %s160
      %s163 = sshll.u32 [#allocation22], 4
      %s164 = int_to_ptr.vmem [resolvable:$true] %s163
      %166 = dma.hbm_to_vmem [thread:$0]  %s12, 48, %s164, [#allocation21]
    $region53: #{tpu_custom_call.1} parent=1 // pred_fallthru
      _
    // Predicated region
    $region54: #{tpu_custom_call.1} parent=1 // pred_check
      _
    $region55: #{tpu_custom_call.1} parent=1 // pred_check_branch
      %168 = sbr.rel (0) target = $region57
    $region56: #{tpu_custom_call.1} parent=1 // pred_region
      %s170 = ssub.s32 1536, 1536
      %171 = vsyncadd [#allocation24], %s170
      %s172 = sshll.u32 [#allocation23], 4
      %s173 = int_to_ptr.vmem [resolvable:$true] %s172
      %178 = dma.hbm_to_vmem [thread:$0]  %s13, 1536, %s173, [#allocation24], 128, 128, 8
    $region57: #{tpu_custom_call.1} parent=1 // pred_fallthru
      _
    // Predicated region
    $region58: #{tpu_custom_call.1} parent=1 // pred_check
      _
    $region59: #{tpu_custom_call.1} parent=1 // pred_check_branch
      %180 = sbr.rel (0) target = $region61
    $region60: #{tpu_custom_call.1} parent=1 // pred_region
      %s182 = ssub.s32 16, 16
      %183 = vsyncadd [#allocation24], %s182
      %s185 = sshll.u32 [#allocation25], 4
      %s186 = int_to_ptr.vmem [resolvable:$true] %s185
      %188 = dma.hbm_to_vmem [thread:$0]  %s14, 16, %s186, [#allocation24]
    $region61: #{tpu_custom_call.1} parent=1 // pred_fallthru
      _
    // Predicated region
    $region62: #{tpu_custom_call.1} parent=1 // pred_check
      _
    $region63: #{tpu_custom_call.1} parent=1 // pred_check_branch
      %190 = sbr.rel (0) target = $region65
    $region64: #{tpu_custom_call.1} parent=1 // pred_region
      %s192 = ssub.s32 16, 16
      %193 = vsyncadd [#allocation27], %s192
      %s195 = sshll.u32 [#allocation26], 4
      %s196 = int_to_ptr.vmem [resolvable:$true] %s195
      %198 = dma.hbm_to_vmem [thread:$0]  %s15, 16, %s196, [#allocation27]
    $region65: #{tpu_custom_call.1} parent=1 // pred_fallthru
      _
    // Predicated region
    $region66: #{tpu_custom_call.1} parent=1 // pred_check
      _
    $region67: #{tpu_custom_call.1} parent=1 // pred_check_branch
      %200 = sbr.rel (0) target = $region69
    $region68: #{tpu_custom_call.1} parent=1 // pred_region
      %201 = dma.done [#allocation3], 64
    $region69: #{tpu_custom_call.1} parent=1 // pred_fallthru
      _
    // Predicated region
    $region70: #{tpu_custom_call.1} parent=1 // pred_check
      _
    $region71: #{tpu_custom_call.1} parent=1 // pred_check_branch
      %203 = sbr.rel (0) target = $region73
    $region72: #{tpu_custom_call.1} parent=1 // pred_region
      %204 = dma.done [#allocation6], 640
    $region73: #{tpu_custom_call.1} parent=1 // pred_fallthru
      _
    // Predicated region
    $region74: #{tpu_custom_call.1} parent=1 // pred_check
      _
    $region75: #{tpu_custom_call.1} parent=1 // pred_check_branch
      %206 = sbr.rel (0) target = $region77
    $region76: #{tpu_custom_call.1} parent=1 // pred_region
      %207 = dma.done [#allocation6], 160
    $region77: #{tpu_custom_call.1} parent=1 // pred_fallthru
      _
    // Predicated region
    $region78: #{tpu_custom_call.1} parent=1 // pred_check
      _
    $region79: #{tpu_custom_call.1} parent=1 // pred_check_branch
      %209 = sbr.rel (0) target = $region81
    $region80: #{tpu_custom_call.1} parent=1 // pred_region
      %210 = dma.done [#allocation9], 160
    $region81: #{tpu_custom_call.1} parent=1 // pred_fallthru
      _
    // Predicated region
    $region82: #{tpu_custom_call.1} parent=1 // pred_check
      _
    $region83: #{tpu_custom_call.1} parent=1 // pred_check_branch
      %212 = sbr.rel (0) target = $region85
    $region84: #{tpu_custom_call.1} parent=1 // pred_region
      %213 = dma.done [#allocation9], 40960
    $region85: #{tpu_custom_call.1} parent=1 // pred_fallthru
      _
    // Predicated region
    $region86: #{tpu_custom_call.1} parent=1 // pred_check
      _
    $region87: #{tpu_custom_call.1} parent=1 // pred_check_branch
      %215 = sbr.rel (0) target = $region89
    $region88: #{tpu_custom_call.1} parent=1 // pred_region
      %216 = dma.done [#allocation12], 128
    $region89: #{tpu_custom_call.1} parent=1 // pred_fallthru
      _
    // Predicated region
    $region90: #{tpu_custom_call.1} parent=1 // pred_check
      _
    $region91: #{tpu_custom_call.1} parent=1 // pred_check_branch
      %218 = sbr.rel (0) target = $region93
    $region92: #{tpu_custom_call.1} parent=1 // pred_region
      %219 = dma.done [#allocation12], 128
    $region93: #{tpu_custom_call.1} parent=1 // pred_fallthru
      _
    // Predicated region
    $region94: #{tpu_custom_call.1} parent=1 // pred_check
      _
    $region95: #{tpu_custom_call.1} parent=1 // pred_check_branch
      %221 = sbr.rel (0) target = $region97
    $region96: #{tpu_custom_call.1} parent=1 // pred_region
      %222 = dma.done [#allocation15], 20480
    $region97: #{tpu_custom_call.1} parent=1 // pred_fallthru
      _
    // Predicated region
    $region98: #{tpu_custom_call.1} parent=1 // pred_check
      _
    $region99: #{tpu_custom_call.1} parent=1 // pred_check_branch
      %224 = sbr.rel (0) target = $region101
    $region100: #{tpu_custom_call.1} parent=1 // pred_region
      %225 = dma.done [#allocation15], 80
    $region101: #{tpu_custom_call.1} parent=1 // pred_fallthru
      _
    // Predicated region
    $region102: #{tpu_custom_call.1} parent=1 // pred_check
      _
    $region103: #{tpu_custom_call.1} parent=1 // pred_check_branch
      %227 = sbr.rel (0) target = $region105
    $region104: #{tpu_custom_call.1} parent=1 // pred_region
      %228 = dma.done [#allocation18], 80
    $region105: #{tpu_custom_call.1} parent=1 // pred_fallthru
      _
    // Predicated region
    $region106: #{tpu_custom_call.1} parent=1 // pred_check
      _
    $region107: #{tpu_custom_call.1} parent=1 // pred_check_branch
      %230 = sbr.rel (0) target = $region109
    $region108: #{tpu_custom_call.1} parent=1 // pred_region
      %231 = dma.done [#allocation18], 7680
    $region109: #{tpu_custom_call.1} parent=1 // pred_fallthru
      _
    // Predicated region
    $region110: #{tpu_custom_call.1} parent=1 // pred_check
      _
    $region111: #{tpu_custom_call.1} parent=1 // pred_check_branch
      %233 = sbr.rel (0) target = $region113
    $region112: #{tpu_custom_call.1} parent=1 // pred_region
      %234 = dma.done [#allocation21], 48
    $region113: #{tpu_custom_call.1} parent=1 // pred_fallthru
      _
    // Predicated region
    $region114: #{tpu_custom_call.1} parent=1 // pred_check
      _
    $region115: #{tpu_custom_call.1} parent=1 // pred_check_branch
      %236 = sbr.rel (0) target = $region117
    $region116: #{tpu_custom_call.1} parent=1 // pred_region
      %237 = dma.done [#allocation21], 48
    $region117: #{tpu_custom_call.1} parent=1 // pred_fallthru
      _
    // Predicated region
    $region118: #{tpu_custom_call.1} parent=1 // pred_check
      _
    $region119: #{tpu_custom_call.1} parent=1 // pred_check_branch
      %239 = sbr.rel (0) target = $region121
    $region120: #{tpu_custom_call.1} parent=1 // pred_region
      %240 = dma.done [#allocation24], 1536
    $region121: #{tpu_custom_call.1} parent=1 // pred_fallthru
      _
    // Predicated region
    $region122: #{tpu_custom_call.1} parent=1 // pred_check
      _
    $region123: #{tpu_custom_call.1} parent=1 // pred_check_branch
      %242 = sbr.rel (0) target = $region125
    $region124: #{tpu_custom_call.1} parent=1 // pred_region
      %243 = dma.done [#allocation24], 16
    $region125: #{tpu_custom_call.1} parent=1 // pred_fallthru
      _
    // Predicated region
    $region126: #{tpu_custom_call.1} parent=1 // pred_check
      _
    $region127: #{tpu_custom_call.1} parent=1 // pred_check_branch
      %245 = sbr.rel (0) target = $region129
    $region128: #{tpu_custom_call.1} parent=1 // pred_region
      %246 = dma.done [#allocation27], 16
    $region129: #{tpu_custom_call.1} parent=1 // pred_fallthru
      _
    %v248 = vld [vmem:[#allocation2] sm:$0xf]
    %v249 = vld [vmem:[#allocation5] sm:$0xff]
    %v250 = vld [vmem:[#allocation5 + $0x8] sm:$0xff]
    %v251 = vld [vmem:[#allocation5 + $0x10] sm:$0xff]
    %v252 = vld [vmem:[#allocation5 + $0x18] sm:$0xff]
    %v253 = vld [vmem:[#allocation5 + $0x20] sm:$0xff]
    %v259 = vunpack.c.l.b16 %v249
    %v260 = vunpack.c.h.b16 %v249
    %v261 = vunpack.c.l.b16 %v250
    %v262 = vunpack.c.h.b16 %v250
    %v263 = vunpack.c.l.b16 %v251
    %v264 = vunpack.c.h.b16 %v251
    %v265 = vunpack.c.l.b16 %v252
    %v266 = vunpack.c.h.b16 %v252
    %v267 = vunpack.c.l.b16 %v253
    %v268 = vunpack.c.h.b16 %v253
    %v269 = vpack.c.b16 %v259, %v259
    %v270 = vpack.c.b16 %v260, %v260
    %v271 = vpack.c.b16 %v261, %v261
    %v272 = vpack.c.b16 %v262, %v262
    %v273 = vpack.c.b16 %v263, %v263
    %v274 = vpack.c.b16 %v264, %v264
    %v275 = vpack.c.b16 %v265, %v265
    %v276 = vpack.c.b16 %v266, %v266
    %v277 = vpack.c.b16 %v267, %v267
    %v278 = vpack.c.b16 %v268, %v268
    %vm279 = vcmask 64512
    %v281 = vsel %vm279, %v248, 0
    %vm283 = vcmask 1043456
    %v285 = vsel %vm283, %v269, 0
    %v288 = vsel %vm283, %v270, 0
    %v291 = vsel %vm283, %v271, 0
    %v294 = vsel %vm283, %v272, 0
    %v297 = vsel %vm283, %v273, 0
    %v300 = vsel %vm283, %v274, 0
    %v303 = vsel %vm283, %v275, 0
    %v306 = vsel %vm283, %v276, 0
    %v309 = vsel %vm283, %v277, 0
    %v312 = vsel %vm283, %v278, 0
    %314 = vmatprep.subr.bf16.mxu0 %v288
    %315 = vmatpush1.bf16.msra.mxu0 %v285
    %316 = vmatprep.subr.bf16.mxu0 0
    %317 = vmatpush1.bf16.msra.mxu0 0
    %318 = vmatprep.subr.bf16.mxu0 0
    %319 = vmatpush1.bf16.msra.mxu0 0
    %320 = vmatprep.subr.bf16.mxu0 0
    %321 = vmatpush1.bf16.msra.mxu0 0
    %322 = vmatprep.subr.bf16.mxu0 0
    %323 = vmatpush1.bf16.msra.mxu0 0
    %324 = vmatprep.subr.bf16.mxu0 0
    %325 = vmatpush1.bf16.msra.mxu0 0
    %326 = vmatprep.subr.bf16.mxu0 0
    %327 = vmatpush1.bf16.msra.mxu0 0
    %328 = vmatprep.subr.bf16.mxu0 0
    %329 = vmatpush1.bf16.msra.mxu0 0
    %330 = vmatprep.subr.bf16.mxu0 0
    %331 = vmatpush1.bf16.msra.mxu0 0
    %332 = vmatprep.subr.bf16.mxu0 0
    %333 = vmatpush1.bf16.msra.mxu0 0
    %334 = vmatprep.subr.bf16.mxu0 0
    %335 = vmatpush1.bf16.msra.mxu0 0
    %336 = vmatprep.subr.bf16.mxu0 0
    %337 = vmatpush1.bf16.msra.mxu0 0
    %338 = vmatprep.subr.bf16.mxu0 0
    %339 = vmatpush1.bf16.msra.mxu0 0
    %340 = vmatprep.subr.bf16.mxu0 0
    %341 = vmatpush1.bf16.msra.mxu0 0
    %342 = vmatprep.subr.bf16.mxu0 0
    %343 = vmatpush1.bf16.msra.mxu0 0
    %344 = vmatprep.subr.bf16.mxu0 0
    %345 = vmatpush1.bf16.msra.mxu0 0
    %346 = vmatprep.mubr.bf16.mxu0 0
    %347 = vmatmul.mubr.bf16.gmra.mrb[0].mxu0 %v281
    %v348 = vpop.f32.mrb[0].mxu0
    %v349 = vadd.f32 0.0, %v348
    %v350 = vpop.f32.mrb[0].mxu0
    %v351 = vadd.f32 0.0, %v350
    %v352 = vpop.f32.mrb[0].mxu0
    %v353 = vpop.f32.mrb[0].mxu0
    %354 = vdwg.mxu0
    %355 = vmatprep.subr.bf16.mxu0 %v294
    %356 = vmatpush1.bf16.msra.mxu0 %v291
    %357 = vmatprep.subr.bf16.mxu0 0
    %358 = vmatpush1.bf16.msra.mxu0 0
    %359 = vmatprep.subr.bf16.mxu0 0
    %360 = vmatpush1.bf16.msra.mxu0 0
    %361 = vmatprep.subr.bf16.mxu0 0
    %362 = vmatpush1.bf16.msra.mxu0 0
    %363 = vmatprep.subr.bf16.mxu0 0
    %364 = vmatpush1.bf16.msra.mxu0 0
    %365 = vmatprep.subr.bf16.mxu0 0
    %366 = vmatpush1.bf16.msra.mxu0 0
    %367 = vmatprep.subr.bf16.mxu0 0
    %368 = vmatpush1.bf16.msra.mxu0 0
    %369 = vmatprep.subr.bf16.mxu0 0
    %370 = vmatpush1.bf16.msra.mxu0 0
    %371 = vmatprep.subr.bf16.mxu0 0
    %372 = vmatpush1.bf16.msra.mxu0 0
    %373 = vmatprep.subr.bf16.mxu0 0
    %374 = vmatpush1.bf16.msra.mxu0 0
    %375 = vmatprep.subr.bf16.mxu0 0
    %376 = vmatpush1.bf16.msra.mxu0 0
    %377 = vmatprep.subr.bf16.mxu0 0
    %378 = vmatpush1.bf16.msra.mxu0 0
    %379 = vmatprep.subr.bf16.mxu0 0
    %380 = vmatpush1.bf16.msra.mxu0 0
    %381 = vmatprep.subr.bf16.mxu0 0
    %382 = vmatpush1.bf16.msra.mxu0 0
    %383 = vmatprep.subr.bf16.mxu0 0
    %384 = vmatpush1.bf16.msra.mxu0 0
    %385 = vmatprep.subr.bf16.mxu0 0
    %386 = vmatpush1.bf16.msra.mxu0 0
    %387 = vmatprep.mubr.bf16.mxu0 0
    %388 = vmatmul.mubr.bf16.gmra.mrb[0].mxu0 %v281
    %v389 = vpop.f32.mrb[0].mxu0
    %v390 = vadd.f32 0.0, %v389
    %v391 = vpop.f32.mrb[0].mxu0
    %v392 = vadd.f32 0.0, %v391
    %v393 = vpop.f32.mrb[0].mxu0
    %v394 = vpop.f32.mrb[0].mxu0
    %395 = vdwg.mxu0
    %396 = vmatprep.subr.bf16.mxu0 %v300
    %397 = vmatpush1.bf16.msra.mxu0 %v297
    %398 = vmatprep.subr.bf16.mxu0 0
    %399 = vmatpush1.bf16.msra.mxu0 0
    %400 = vmatprep.subr.bf16.mxu0 0
    %401 = vmatpush1.bf16.msra.mxu0 0
    %402 = vmatprep.subr.bf16.mxu0 0
    %403 = vmatpush1.bf16.msra.mxu0 0
    %404 = vmatprep.subr.bf16.mxu0 0
    %405 = vmatpush1.bf16.msra.mxu0 0
    %406 = vmatprep.subr.bf16.mxu0 0
    %407 = vmatpush1.bf16.msra.mxu0 0
    %408 = vmatprep.subr.bf16.mxu0 0
    %409 = vmatpush1.bf16.msra.mxu0 0
    %410 = vmatprep.subr.bf16.mxu0 0
    %411 = vmatpush1.bf16.msra.mxu0 0
    %412 = vmatprep.subr.bf16.mxu0 0
    %413 = vmatpush1.bf16.msra.mxu0 0
    %414 = vmatprep.subr.bf16.mxu0 0
    %415 = vmatpush1.bf16.msra.mxu0 0
    %416 = vmatprep.subr.bf16.mxu0 0
    %417 = vmatpush1.bf16.msra.mxu0 0
    %418 = vmatprep.subr.bf16.mxu0 0
    %419 = vmatpush1.bf16.msra.mxu0 0
    %420 = vmatprep.subr.bf16.mxu0 0
    %421 = vmatpush1.bf16.msra.mxu0 0
    %422 = vmatprep.subr.bf16.mxu0 0
    %423 = vmatpush1.bf16.msra.mxu0 0
    %424 = vmatprep.subr.bf16.mxu0 0
    %425 = vmatpush1.bf16.msra.mxu0 0
    %426 = vmatprep.subr.bf16.mxu0 0
    %427 = vmatpush1.bf16.msra.mxu0 0
    %428 = vmatprep.mubr.bf16.mxu0 0
    %429 = vmatmul.mubr.bf16.gmra.mrb[0].mxu0 %v281
    %v430 = vpop.f32.mrb[0].mxu0
    %v431 = vadd.f32 0.0, %v430
    %v432 = vpop.f32.mrb[0].mxu0
    %v433 = vadd.f32 0.0, %v432
    %v434 = vpop.f32.mrb[0].mxu0
    %v435 = vpop.f32.mrb[0].mxu0
    %436 = vdwg.mxu0
    %437 = vmatprep.subr.bf16.mxu0 %v306
    %438 = vmatpush1.bf16.msra.mxu0 %v303
    %439 = vmatprep.subr.bf16.mxu0 0
    %440 = vmatpush1.bf16.msra.mxu0 0
    %441 = vmatprep.subr.bf16.mxu0 0
    %442 = vmatpush1.bf16.msra.mxu0 0
    %443 = vmatprep.subr.bf16.mxu0 0
    %444 = vmatpush1.bf16.msra.mxu0 0
    %445 = vmatprep.subr.bf16.mxu0 0
    %446 = vmatpush1.bf16.msra.mxu0 0
    %447 = vmatprep.subr.bf16.mxu0 0
    %448 = vmatpush1.bf16.msra.mxu0 0
    %449 = vmatprep.subr.bf16.mxu0 0
    %450 = vmatpush1.bf16.msra.mxu0 0
    %451 = vmatprep.subr.bf16.mxu0 0
    %452 = vmatpush1.bf16.msra.mxu0 0
    %453 = vmatprep.subr.bf16.mxu0 0
    %454 = vmatpush1.bf16.msra.mxu0 0
    %455 = vmatprep.subr.bf16.mxu0 0
    %456 = vmatpush1.bf16.msra.mxu0 0
    %457 = vmatprep.subr.bf16.mxu0 0
    %458 = vmatpush1.bf16.msra.mxu0 0
    %459 = vmatprep.subr.bf16.mxu0 0
    %460 = vmatpush1.bf16.msra.mxu0 0
    %461 = vmatprep.subr.bf16.mxu0 0
    %462 = vmatpush1.bf16.msra.mxu0 0
    %463 = vmatprep.subr.bf16.mxu0 0
    %464 = vmatpush1.bf16.msra.mxu0 0
    %465 = vmatprep.subr.bf16.mxu0 0
    %466 = vmatpush1.bf16.msra.mxu0 0
    %467 = vmatprep.subr.bf16.mxu0 0
    %468 = vmatpush1.bf16.msra.mxu0 0
    %469 = vmatprep.mubr.bf16.mxu0 0
    %470 = vmatmul.mubr.bf16.gmra.mrb[0].mxu0 %v281
    %v471 = vpop.f32.mrb[0].mxu0
    %v472 = vadd.f32 0.0, %v471
    %v473 = vpop.f32.mrb[0].mxu0
    %v474 = vadd.f32 0.0, %v473
    %v475 = vpop.f32.mrb[0].mxu0
    %v476 = vpop.f32.mrb[0].mxu0
    %477 = vdwg.mxu0
    %478 = vmatprep.subr.bf16.mxu0 %v312
    %479 = vmatpush1.bf16.msra.mxu0 %v309
    %480 = vmatprep.subr.bf16.mxu0 0
    %481 = vmatpush1.bf16.msra.mxu0 0
    %482 = vmatprep.subr.bf16.mxu0 0
    %483 = vmatpush1.bf16.msra.mxu0 0
    %484 = vmatprep.subr.bf16.mxu0 0
    %485 = vmatpush1.bf16.msra.mxu0 0
    %486 = vmatprep.subr.bf16.mxu0 0
    %487 = vmatpush1.bf16.msra.mxu0 0
    %488 = vmatprep.subr.bf16.mxu0 0
    %489 = vmatpush1.bf16.msra.mxu0 0
    %490 = vmatprep.subr.bf16.mxu0 0
    %491 = vmatpush1.bf16.msra.mxu0 0
    %492 = vmatprep.subr.bf16.mxu0 0
    %493 = vmatpush1.bf16.msra.mxu0 0
    %494 = vmatprep.subr.bf16.mxu0 0
    %495 = vmatpush1.bf16.msra.mxu0 0
    %496 = vmatprep.subr.bf16.mxu0 0
    %497 = vmatpush1.bf16.msra.mxu0 0
    %498 = vmatprep.subr.bf16.mxu0 0
    %499 = vmatpush1.bf16.msra.mxu0 0
    %500 = vmatprep.subr.bf16.mxu0 0
    %501 = vmatpush1.bf16.msra.mxu0 0
    %502 = vmatprep.subr.bf16.mxu0 0
    %503 = vmatpush1.bf16.msra.mxu0 0
    %504 = vmatprep.subr.bf16.mxu0 0
    %505 = vmatpush1.bf16.msra.mxu0 0
    %506 = vmatprep.subr.bf16.mxu0 0
    %507 = vmatpush1.bf16.msra.mxu0 0
    %508 = vmatprep.subr.bf16.mxu0 0
    %509 = vmatpush1.bf16.msra.mxu0 0
    %510 = vmatprep.mubr.bf16.mxu0 0
    %511 = vmatmul.mubr.bf16.gmra.mrb[0].mxu0 %v281
    %v512 = vpop.f32.mrb[0].mxu0
    %v513 = vadd.f32 0.0, %v512
    %v514 = vpop.f32.mrb[0].mxu0
    %v515 = vadd.f32 0.0, %v514
    %v516 = vpop.f32.mrb[0].mxu0
    %v517 = vpop.f32.mrb[0].mxu0
    %518 = vdwg.mxu0
    %v519 = vld [vmem:[#allocation7] sm:$0xff]
    %v520 = vld [vmem:[#allocation7 + $0x8] sm:$0x3]
    %v523 = vlaneseq
    %v524 = vshrl.u32 %v523, 7
    %v525 = vsub.s32 0, %v524
    %v526 = vrot.slane %v519, %v525
    %v527 = vlaneseq
    %v528 = vshrl.u32 %v527, 7
    %v529 = vsub.s32 1, %v528
    %v530 = vrot.slane %v519, %v529
    %v531 = vlaneseq
    %v532 = vshrl.u32 %v531, 7
    %v533 = vsub.s32 2, %v532
    %v534 = vrot.slane %v519, %v533
    %v535 = vlaneseq
    %v536 = vshrl.u32 %v535, 7
    %v537 = vsub.s32 3, %v536
    %v538 = vrot.slane %v519, %v537
    %v539 = vlaneseq
    %v540 = vshrl.u32 %v539, 7
    %v541 = vsub.s32 4, %v540
    %v542 = vrot.slane %v519, %v541
    %v543 = vlaneseq
    %v544 = vshrl.u32 %v543, 7
    %v545 = vsub.s32 5, %v544
    %v546 = vrot.slane %v519, %v545
    %v547 = vlaneseq
    %v548 = vshrl.u32 %v547, 7
    %v549 = vsub.s32 6, %v548
    %v550 = vrot.slane %v519, %v549
    %v551 = vlaneseq
    %v552 = vshrl.u32 %v551, 7
    %v553 = vsub.s32 7, %v552
    %v554 = vrot.slane %v519, %v553
    %v555 = vlaneseq
    %v556 = vshrl.u32 %v555, 7
    %v557 = vsub.s32 0, %v556
    %v558 = vrot.slane %v520, %v557
    %v559 = vlaneseq
    %v560 = vshrl.u32 %v559, 7
    %v561 = vsub.s32 1, %v560
    %v562 = vrot.slane %v520, %v561
    %v573 = vmul.f32 %v349, %v526
    %v574 = vmul.f32 %v351, %v530
    %v575 = vmul.f32 %v390, %v534
    %v576 = vmul.f32 %v392, %v538
    %v577 = vmul.f32 %v431, %v542
    %v578 = vmul.f32 %v433, %v546
    %v579 = vmul.f32 %v472, %v550
    %v580 = vmul.f32 %v474, %v554
    %v581 = vmul.f32 %v513, %v558
    %v582 = vmul.f32 %v515, %v562
    %v583 = vld [vmem:[#allocation8] sm:$0xff]
    %v584 = vld [vmem:[#allocation8 + $0x8] sm:$0x3]
    %v587 = vlaneseq
    %v588 = vshrl.u32 %v587, 7
    %v589 = vsub.s32 0, %v588
    %v590 = vrot.slane %v583, %v589
    %v591 = vlaneseq
    %v592 = vshrl.u32 %v591, 7
    %v593 = vsub.s32 1, %v592
    %v594 = vrot.slane %v583, %v593
    %v595 = vlaneseq
    %v596 = vshrl.u32 %v595, 7
    %v597 = vsub.s32 2, %v596
    %v598 = vrot.slane %v583, %v597
    %v599 = vlaneseq
    %v600 = vshrl.u32 %v599, 7
    %v601 = vsub.s32 3, %v600
    %v602 = vrot.slane %v583, %v601
    %v603 = vlaneseq
    %v604 = vshrl.u32 %v603, 7
    %v605 = vsub.s32 4, %v604
    %v606 = vrot.slane %v583, %v605
    %v607 = vlaneseq
    %v608 = vshrl.u32 %v607, 7
    %v609 = vsub.s32 5, %v608
    %v610 = vrot.slane %v583, %v609
    %v611 = vlaneseq
    %v612 = vshrl.u32 %v611, 7
    %v613 = vsub.s32 6, %v612
    %v614 = vrot.slane %v583, %v613
    %v615 = vlaneseq
    %v616 = vshrl.u32 %v615, 7
    %v617 = vsub.s32 7, %v616
    %v618 = vrot.slane %v583, %v617
    %v619 = vlaneseq
    %v620 = vshrl.u32 %v619, 7
    %v621 = vsub.s32 0, %v620
    %v622 = vrot.slane %v584, %v621
    %v623 = vlaneseq
    %v624 = vshrl.u32 %v623, 7
    %v625 = vsub.s32 1, %v624
    %v626 = vrot.slane %v584, %v625
    %v637 = vadd.f32 %v573, %v590
    %v638 = vadd.f32 %v574, %v594
    %v639 = vadd.f32 %v575, %v598
    %v640 = vadd.f32 %v576, %v602
    %v641 = vadd.f32 %v577, %v606
    %v642 = vadd.f32 %v578, %v610
    %v643 = vadd.f32 %v579, %v614
    %v644 = vadd.f32 %v580, %v618
    %v645 = vadd.f32 %v581, %v622
    %v646 = vadd.f32 %v582, %v626
    %v647 = vmax.f32 %v637, 0.0
    %v648 = vmax.f32 %v638, 0.0
    %v649 = vmax.f32 %v639, 0.0
    %v650 = vmax.f32 %v640, 0.0
    %v651 = vmax.f32 %v641, 0.0
    %v652 = vmax.f32 %v642, 0.0
    %v653 = vmax.f32 %v643, 0.0
    %v654 = vmax.f32 %v644, 0.0
    %v655 = vmax.f32 %v645, 0.0
    %v656 = vmax.f32 %v646, 0.0
    %v657 = vpack.c.bf16 %v647, %v647
    %v658 = vpack.c.bf16 %v648, %v648
    %v659 = vpack.c.bf16 %v649, %v649
    %v660 = vpack.c.bf16 %v650, %v650
    %v661 = vpack.c.bf16 %v651, %v651
    %v662 = vpack.c.bf16 %v652, %v652
    %v663 = vpack.c.bf16 %v653, %v653
    %v664 = vpack.c.bf16 %v654, %v654
    %v665 = vpack.c.bf16 %v655, %v655
    %v666 = vpack.c.bf16 %v656, %v656
    %v667 = vld [vmem:[#allocation10] sm:$0xff]
    %v668 = vld [vmem:[#allocation10 + $0x8] sm:$0xff]
    %v669 = vld [vmem:[#allocation10 + $0x10] sm:$0xff]
    %v670 = vld [vmem:[#allocation10 + $0x18] sm:$0xff]
    %v671 = vld [vmem:[#allocation10 + $0x20] sm:$0xff]
    %v672 = vld [vmem:[#allocation10 + $0x28] sm:$0xff]
    %v673 = vld [vmem:[#allocation10 + $0x30] sm:$0xff]
    %v674 = vld [vmem:[#allocation10 + $0x38] sm:$0xff]
    %v675 = vld [vmem:[#allocation10 + $0x40] sm:$0xff]
    %v676 = vld [vmem:[#allocation10 + $0x48] sm:$0xff]
    %v677 = vld [vmem:[#allocation10 + $0x50] sm:$0xff]
    %v678 = vld [vmem:[#allocation10 + $0x58] sm:$0xff]
    %v679 = vld [vmem:[#allocation10 + $0x60] sm:$0xff]
    %v680 = vld [vmem:[#allocation10 + $0x68] sm:$0xff]
    %v681 = vld [vmem:[#allocation10 + $0x70] sm:$0xff]
    %v682 = vld [vmem:[#allocation10 + $0x78] sm:$0xff]
    %v683 = vld [vmem:[#allocation10 + $0x80] sm:$0xff]
    %v684 = vld [vmem:[#allocation10 + $0x88] sm:$0xff]
    %v685 = vld [vmem:[#allocation10 + $0x90] sm:$0xff]
    %v686 = vld [vmem:[#allocation10 + $0x98] sm:$0xff]
    %v687 = vld [vmem:[#allocation10 + $0xa0] sm:$0xff]
    %v688 = vld [vmem:[#allocation10 + $0xa8] sm:$0xff]
    %v689 = vld [vmem:[#allocation10 + $0xb0] sm:$0xff]
    %v690 = vld [vmem:[#allocation10 + $0xb8] sm:$0xff]
    %v691 = vld [vmem:[#allocation10 + $0xc0] sm:$0xff]
    %v692 = vld [vmem:[#allocation10 + $0xc8] sm:$0xff]
    %v693 = vld [vmem:[#allocation10 + $0xd0] sm:$0xff]
    %v694 = vld [vmem:[#allocation10 + $0xd8] sm:$0xff]
    %v695 = vld [vmem:[#allocation10 + $0xe0] sm:$0xff]
    %v696 = vld [vmem:[#allocation10 + $0xe8] sm:$0xff]
    %v697 = vld [vmem:[#allocation10 + $0xf0] sm:$0xff]
    %v698 = vld [vmem:[#allocation10 + $0xf8] sm:$0xff]
    %v699 = vld [vmem:[#allocation10 + $0x100] sm:$0xff]
    %v700 = vld [vmem:[#allocation10 + $0x108] sm:$0xff]
    %v701 = vld [vmem:[#allocation10 + $0x110] sm:$0xff]
    %v702 = vld [vmem:[#allocation10 + $0x118] sm:$0xff]
    %v703 = vld [vmem:[#allocation10 + $0x120] sm:$0xff]
    %v704 = vld [vmem:[#allocation10 + $0x128] sm:$0xff]
    %v705 = vld [vmem:[#allocation10 + $0x130] sm:$0xff]
    %v706 = vld [vmem:[#allocation10 + $0x138] sm:$0xff]
    %v707 = vld [vmem:[#allocation10 + $0x140] sm:$0xff]
    %v708 = vld [vmem:[#allocation10 + $0x148] sm:$0xff]
    %v709 = vld [vmem:[#allocation10 + $0x150] sm:$0xff]
    %v710 = vld [vmem:[#allocation10 + $0x158] sm:$0xff]
    %v711 = vld [vmem:[#allocation10 + $0x160] sm:$0xff]
    %v712 = vld [vmem:[#allocation10 + $0x168] sm:$0xff]
    %v713 = vld [vmem:[#allocation10 + $0x170] sm:$0xff]
    %v714 = vld [vmem:[#allocation10 + $0x178] sm:$0xff]
    %v715 = vld [vmem:[#allocation10 + $0x180] sm:$0xff]
    %v716 = vld [vmem:[#allocation10 + $0x188] sm:$0xff]
    %v717 = vld [vmem:[#allocation10 + $0x190] sm:$0xff]
    %v718 = vld [vmem:[#allocation10 + $0x198] sm:$0xff]
    %v719 = vld [vmem:[#allocation10 + $0x1a0] sm:$0xff]
    %v720 = vld [vmem:[#allocation10 + $0x1a8] sm:$0xff]
    %v721 = vld [vmem:[#allocation10 + $0x1b0] sm:$0xff]
    %v722 = vld [vmem:[#allocation10 + $0x1b8] sm:$0xff]
    %v723 = vld [vmem:[#allocation10 + $0x1c0] sm:$0xff]
    %v724 = vld [vmem:[#allocation10 + $0x1c8] sm:$0xff]
    %v725 = vld [vmem:[#allocation10 + $0x1d0] sm:$0xff]
    %v726 = vld [vmem:[#allocation10 + $0x1d8] sm:$0xff]
    %v727 = vld [vmem:[#allocation10 + $0x1e0] sm:$0xff]
    %v728 = vld [vmem:[#allocation10 + $0x1e8] sm:$0xff]
    %v729 = vld [vmem:[#allocation10 + $0x1f0] sm:$0xff]
    %v730 = vld [vmem:[#allocation10 + $0x1f8] sm:$0xff]
    %v731 = vld [vmem:[#allocation10 + $0x200] sm:$0xff]
    %v732 = vld [vmem:[#allocation10 + $0x208] sm:$0xff]
    %v733 = vld [vmem:[#allocation10 + $0x210] sm:$0xff]
    %v734 = vld [vmem:[#allocation10 + $0x218] sm:$0xff]
    %v735 = vld [vmem:[#allocation10 + $0x220] sm:$0xff]
    %v736 = vld [vmem:[#allocation10 + $0x228] sm:$0xff]
    %v737 = vld [vmem:[#allocation10 + $0x230] sm:$0xff]
    %v738 = vld [vmem:[#allocation10 + $0x238] sm:$0xff]
    %v739 = vld [vmem:[#allocation10 + $0x240] sm:$0xff]
    %v740 = vld [vmem:[#allocation10 + $0x248] sm:$0xff]
    %v741 = vld [vmem:[#allocation10 + $0x250] sm:$0xff]
    %v742 = vld [vmem:[#allocation10 + $0x258] sm:$0xff]
    %v743 = vld [vmem:[#allocation10 + $0x260] sm:$0xff]
    %v744 = vld [vmem:[#allocation10 + $0x268] sm:$0xff]
    %v745 = vld [vmem:[#allocation10 + $0x270] sm:$0xff]
    %v746 = vld [vmem:[#allocation10 + $0x278] sm:$0xff]
    %v747 = vld [vmem:[#allocation10 + $0x280] sm:$0xff]
    %v748 = vld [vmem:[#allocation10 + $0x288] sm:$0xff]
    %v749 = vld [vmem:[#allocation10 + $0x290] sm:$0xff]
    %v750 = vld [vmem:[#allocation10 + $0x298] sm:$0xff]
    %v751 = vld [vmem:[#allocation10 + $0x2a0] sm:$0xff]
    %v752 = vld [vmem:[#allocation10 + $0x2a8] sm:$0xff]
    %v753 = vld [vmem:[#allocation10 + $0x2b0] sm:$0xff]
    %v754 = vld [vmem:[#allocation10 + $0x2b8] sm:$0xff]
    %v755 = vld [vmem:[#allocation10 + $0x2c0] sm:$0xff]
    %v756 = vld [vmem:[#allocation10 + $0x2c8] sm:$0xff]
    %v757 = vld [vmem:[#allocation10 + $0x2d0] sm:$0xff]
    %v758 = vld [vmem:[#allocation10 + $0x2d8] sm:$0xff]
    %v759 = vld [vmem:[#allocation10 + $0x2e0] sm:$0xff]
    %v760 = vld [vmem:[#allocation10 + $0x2e8] sm:$0xff]
    %v761 = vld [vmem:[#allocation10 + $0x2f0] sm:$0xff]
    %v762 = vld [vmem:[#allocation10 + $0x2f8] sm:$0xff]
    %v763 = vld [vmem:[#allocation10 + $0x300] sm:$0xff]
    %v764 = vld [vmem:[#allocation10 + $0x308] sm:$0xff]
    %v765 = vld [vmem:[#allocation10 + $0x310] sm:$0xff]
    %v766 = vld [vmem:[#allocation10 + $0x318] sm:$0xff]
    %v767 = vld [vmem:[#allocation10 + $0x320] sm:$0xff]
    %v768 = vld [vmem:[#allocation10 + $0x328] sm:$0xff]
    %v769 = vld [vmem:[#allocation10 + $0x330] sm:$0xff]
    %v770 = vld [vmem:[#allocation10 + $0x338] sm:$0xff]
    %v771 = vld [vmem:[#allocation10 + $0x340] sm:$0xff]
    %v772 = vld [vmem:[#allocation10 + $0x348] sm:$0xff]
    %v773 = vld [vmem:[#allocation10 + $0x350] sm:$0xff]
    %v774 = vld [vmem:[#allocation10 + $0x358] sm:$0xff]
    %v775 = vld [vmem:[#allocation10 + $0x360] sm:$0xff]
    %v776 = vld [vmem:[#allocation10 + $0x368] sm:$0xff]
    %v777 = vld [vmem:[#allocation10 + $0x370] sm:$0xff]
    %v778 = vld [vmem:[#allocation10 + $0x378] sm:$0xff]
    %v779 = vld [vmem:[#allocation10 + $0x380] sm:$0xff]
    %v780 = vld [vmem:[#allocation10 + $0x388] sm:$0xff]
    %v781 = vld [vmem:[#allocation10 + $0x390] sm:$0xff]
    %v782 = vld [vmem:[#allocation10 + $0x398] sm:$0xff]
    %v783 = vld [vmem:[#allocation10 + $0x3a0] sm:$0xff]
    %v784 = vld [vmem:[#allocation10 + $0x3a8] sm:$0xff]
    %v785 = vld [vmem:[#allocation10 + $0x3b0] sm:$0xff]
    %v786 = vld [vmem:[#allocation10 + $0x3b8] sm:$0xff]
    %v787 = vld [vmem:[#allocation10 + $0x3c0] sm:$0xff]
    %v788 = vld [vmem:[#allocation10 + $0x3c8] sm:$0xff]
    %v789 = vld [vmem:[#allocation10 + $0x3d0] sm:$0xff]
    %v790 = vld [vmem:[#allocation10 + $0x3d8] sm:$0xff]
    %v791 = vld [vmem:[#allocation10 + $0x3e0] sm:$0xff]
    %v792 = vld [vmem:[#allocation10 + $0x3e8] sm:$0xff]
    %v793 = vld [vmem:[#allocation10 + $0x3f0] sm:$0xff]
    %v794 = vld [vmem:[#allocation10 + $0x3f8] sm:$0xff]
    %v795 = vld [vmem:[#allocation10 + $0x400] sm:$0xff]
    %v796 = vld [vmem:[#allocation10 + $0x408] sm:$0xff]
    %v797 = vld [vmem:[#allocation10 + $0x410] sm:$0xff]
    %v798 = vld [vmem:[#allocation10 + $0x418] sm:$0xff]
    %v799 = vld [vmem:[#allocation10 + $0x420] sm:$0xff]
    %v800 = vld [vmem:[#allocation10 + $0x428] sm:$0xff]
    %v801 = vld [vmem:[#allocation10 + $0x430] sm:$0xff]
    %v802 = vld [vmem:[#allocation10 + $0x438] sm:$0xff]
    %v803 = vld [vmem:[#allocation10 + $0x440] sm:$0xff]
    %v804 = vld [vmem:[#allocation10 + $0x448] sm:$0xff]
    %v805 = vld [vmem:[#allocation10 + $0x450] sm:$0xff]
    %v806 = vld [vmem:[#allocation10 + $0x458] sm:$0xff]
    %v807 = vld [vmem:[#allocation10 + $0x460] sm:$0xff]
    %v808 = vld [vmem:[#allocation10 + $0x468] sm:$0xff]
    %v809 = vld [vmem:[#allocation10 + $0x470] sm:$0xff]
    %v810 = vld [vmem:[#allocation10 + $0x478] sm:$0xff]
    %v811 = vld [vmem:[#allocation10 + $0x480] sm:$0xff]
    %v812 = vld [vmem:[#allocation10 + $0x488] sm:$0xff]
    %v813 = vld [vmem:[#allocation10 + $0x490] sm:$0xff]
    %v814 = vld [vmem:[#allocation10 + $0x498] sm:$0xff]
    %v815 = vld [vmem:[#allocation10 + $0x4a0] sm:$0xff]
    %v816 = vld [vmem:[#allocation10 + $0x4a8] sm:$0xff]
    %v817 = vld [vmem:[#allocation10 + $0x4b0] sm:$0xff]
    %v818 = vld [vmem:[#allocation10 + $0x4b8] sm:$0xff]
    %v819 = vld [vmem:[#allocation10 + $0x4c0] sm:$0xff]
    %v820 = vld [vmem:[#allocation10 + $0x4c8] sm:$0xff]
    %v821 = vld [vmem:[#allocation10 + $0x4d0] sm:$0xff]
    %v822 = vld [vmem:[#allocation10 + $0x4d8] sm:$0xff]
    %v823 = vld [vmem:[#allocation10 + $0x4e0] sm:$0xff]
    %v824 = vld [vmem:[#allocation10 + $0x4e8] sm:$0xff]
    %v825 = vld [vmem:[#allocation10 + $0x4f0] sm:$0xff]
    %v826 = vld [vmem:[#allocation10 + $0x4f8] sm:$0xff]
    %v827 = vld [vmem:[#allocation10 + $0x500] sm:$0xff]
    %v828 = vld [vmem:[#allocation10 + $0x508] sm:$0xff]
    %v829 = vld [vmem:[#allocation10 + $0x510] sm:$0xff]
    %v830 = vld [vmem:[#allocation10 + $0x518] sm:$0xff]
    %v831 = vld [vmem:[#allocation10 + $0x520] sm:$0xff]
    %v832 = vld [vmem:[#allocation10 + $0x528] sm:$0xff]
    %v833 = vld [vmem:[#allocation10 + $0x530] sm:$0xff]
    %v834 = vld [vmem:[#allocation10 + $0x538] sm:$0xff]
    %v835 = vld [vmem:[#allocation10 + $0x540] sm:$0xff]
    %v836 = vld [vmem:[#allocation10 + $0x548] sm:$0xff]
    %v837 = vld [vmem:[#allocation10 + $0x550] sm:$0xff]
    %v838 = vld [vmem:[#allocation10 + $0x558] sm:$0xff]
    %v839 = vld [vmem:[#allocation10 + $0x560] sm:$0xff]
    %v840 = vld [vmem:[#allocation10 + $0x568] sm:$0xff]
    %v841 = vld [vmem:[#allocation10 + $0x570] sm:$0xff]
    %v842 = vld [vmem:[#allocation10 + $0x578] sm:$0xff]
    %v843 = vld [vmem:[#allocation10 + $0x580] sm:$0xff]
    %v844 = vld [vmem:[#allocation10 + $0x588] sm:$0xff]
    %v845 = vld [vmem:[#allocation10 + $0x590] sm:$0xff]
    %v846 = vld [vmem:[#allocation10 + $0x598] sm:$0xff]
    %v847 = vld [vmem:[#allocation10 + $0x5a0] sm:$0xff]
    %v848 = vld [vmem:[#allocation10 + $0x5a8] sm:$0xff]
    %v849 = vld [vmem:[#allocation10 + $0x5b0] sm:$0xff]
    %v850 = vld [vmem:[#allocation10 + $0x5b8] sm:$0xff]
    %v851 = vld [vmem:[#allocation10 + $0x5c0] sm:$0xff]
    %v852 = vld [vmem:[#allocation10 + $0x5c8] sm:$0xff]
    %v853 = vld [vmem:[#allocation10 + $0x5d0] sm:$0xff]
    %v854 = vld [vmem:[#allocation10 + $0x5d8] sm:$0xff]
    %v855 = vld [vmem:[#allocation10 + $0x5e0] sm:$0xff]
    %v856 = vld [vmem:[#allocation10 + $0x5e8] sm:$0xff]
    %v857 = vld [vmem:[#allocation10 + $0x5f0] sm:$0xff]
    %v858 = vld [vmem:[#allocation10 + $0x5f8] sm:$0xff]
    %v859 = vld [vmem:[#allocation10 + $0x600] sm:$0xff]
    %v860 = vld [vmem:[#allocation10 + $0x608] sm:$0xff]
    %v861 = vld [vmem:[#allocation10 + $0x610] sm:$0xff]
    %v862 = vld [vmem:[#allocation10 + $0x618] sm:$0xff]
    %v863 = vld [vmem:[#allocation10 + $0x620] sm:$0xff]
    %v864 = vld [vmem:[#allocation10 + $0x628] sm:$0xff]
    %v865 = vld [vmem:[#allocation10 + $0x630] sm:$0xff]
    %v866 = vld [vmem:[#allocation10 + $0x638] sm:$0xff]
    %v867 = vld [vmem:[#allocation10 + $0x640] sm:$0xff]
    %v868 = vld [vmem:[#allocation10 + $0x648] sm:$0xff]
    %v869 = vld [vmem:[#allocation10 + $0x650] sm:$0xff]
    %v870 = vld [vmem:[#allocation10 + $0x658] sm:$0xff]
    %v871 = vld [vmem:[#allocation10 + $0x660] sm:$0xff]
    %v872 = vld [vmem:[#allocation10 + $0x668] sm:$0xff]
    %v873 = vld [vmem:[#allocation10 + $0x670] sm:$0xff]
    %v874 = vld [vmem:[#allocation10 + $0x678] sm:$0xff]
    %v875 = vld [vmem:[#allocation10 + $0x680] sm:$0xff]
    %v876 = vld [vmem:[#allocation10 + $0x688] sm:$0xff]
    %v877 = vld [vmem:[#allocation10 + $0x690] sm:$0xff]
    %v878 = vld [vmem:[#allocation10 + $0x698] sm:$0xff]
    %v879 = vld [vmem:[#allocation10 + $0x6a0] sm:$0xff]
    %v880 = vld [vmem:[#allocation10 + $0x6a8] sm:$0xff]
    %v881 = vld [vmem:[#allocation10 + $0x6b0] sm:$0xff]
    %v882 = vld [vmem:[#allocation10 + $0x6b8] sm:$0xff]
    %v883 = vld [vmem:[#allocation10 + $0x6c0] sm:$0xff]
    %v884 = vld [vmem:[#allocation10 + $0x6c8] sm:$0xff]
    %v885 = vld [vmem:[#allocation10 + $0x6d0] sm:$0xff]
    %v886 = vld [vmem:[#allocation10 + $0x6d8] sm:$0xff]
    %v887 = vld [vmem:[#allocation10 + $0x6e0] sm:$0xff]
    %v888 = vld [vmem:[#allocation10 + $0x6e8] sm:$0xff]
    %v889 = vld [vmem:[#allocation10 + $0x6f0] sm:$0xff]
    %v890 = vld [vmem:[#allocation10 + $0x6f8] sm:$0xff]
    %v891 = vld [vmem:[#allocation10 + $0x700] sm:$0xff]
    %v892 = vld [vmem:[#allocation10 + $0x708] sm:$0xff]
    %v893 = vld [vmem:[#allocation10 + $0x710] sm:$0xff]
    %v894 = vld [vmem:[#allocation10 + $0x718] sm:$0xff]
    %v895 = vld [vmem:[#allocation10 + $0x720] sm:$0xff]
    %v896 = vld [vmem:[#allocation10 + $0x728] sm:$0xff]
    %v897 = vld [vmem:[#allocation10 + $0x730] sm:$0xff]
    %v898 = vld [vmem:[#allocation10 + $0x738] sm:$0xff]
    %v899 = vld [vmem:[#allocation10 + $0x740] sm:$0xff]
    %v900 = vld [vmem:[#allocation10 + $0x748] sm:$0xff]
    %v901 = vld [vmem:[#allocation10 + $0x750] sm:$0xff]
    %v902 = vld [vmem:[#allocation10 + $0x758] sm:$0xff]
    %v903 = vld [vmem:[#allocation10 + $0x760] sm:$0xff]
    %v904 = vld [vmem:[#allocation10 + $0x768] sm:$0xff]
    %v905 = vld [vmem:[#allocation10 + $0x770] sm:$0xff]
    %v906 = vld [vmem:[#allocation10 + $0x778] sm:$0xff]
    %v907 = vld [vmem:[#allocation10 + $0x780] sm:$0xff]
    %v908 = vld [vmem:[#allocation10 + $0x788] sm:$0xff]
    %v909 = vld [vmem:[#allocation10 + $0x790] sm:$0xff]
    %v910 = vld [vmem:[#allocation10 + $0x798] sm:$0xff]
    %v911 = vld [vmem:[#allocation10 + $0x7a0] sm:$0xff]
    %v912 = vld [vmem:[#allocation10 + $0x7a8] sm:$0xff]
    %v913 = vld [vmem:[#allocation10 + $0x7b0] sm:$0xff]
    %v914 = vld [vmem:[#allocation10 + $0x7b8] sm:$0xff]
    %v915 = vld [vmem:[#allocation10 + $0x7c0] sm:$0xff]
    %v916 = vld [vmem:[#allocation10 + $0x7c8] sm:$0xff]
    %v917 = vld [vmem:[#allocation10 + $0x7d0] sm:$0xff]
    %v918 = vld [vmem:[#allocation10 + $0x7d8] sm:$0xff]
    %v919 = vld [vmem:[#allocation10 + $0x7e0] sm:$0xff]
    %v920 = vld [vmem:[#allocation10 + $0x7e8] sm:$0xff]
    %v921 = vld [vmem:[#allocation10 + $0x7f0] sm:$0xff]
    %v922 = vld [vmem:[#allocation10 + $0x7f8] sm:$0xff]
    %v923 = vld [vmem:[#allocation10 + $0x800] sm:$0xff]
    %v924 = vld [vmem:[#allocation10 + $0x808] sm:$0xff]
    %v925 = vld [vmem:[#allocation10 + $0x810] sm:$0xff]
    %v926 = vld [vmem:[#allocation10 + $0x818] sm:$0xff]
    %v927 = vld [vmem:[#allocation10 + $0x820] sm:$0xff]
    %v928 = vld [vmem:[#allocation10 + $0x828] sm:$0xff]
    %v929 = vld [vmem:[#allocation10 + $0x830] sm:$0xff]
    %v930 = vld [vmem:[#allocation10 + $0x838] sm:$0xff]
    %v931 = vld [vmem:[#allocation10 + $0x840] sm:$0xff]
    %v932 = vld [vmem:[#allocation10 + $0x848] sm:$0xff]
    %v933 = vld [vmem:[#allocation10 + $0x850] sm:$0xff]
    %v934 = vld [vmem:[#allocation10 + $0x858] sm:$0xff]
    %v935 = vld [vmem:[#allocation10 + $0x860] sm:$0xff]
    %v936 = vld [vmem:[#allocation10 + $0x868] sm:$0xff]
    %v937 = vld [vmem:[#allocation10 + $0x870] sm:$0xff]
    %v938 = vld [vmem:[#allocation10 + $0x878] sm:$0xff]
    %v939 = vld [vmem:[#allocation10 + $0x880] sm:$0xff]
    %v940 = vld [vmem:[#allocation10 + $0x888] sm:$0xff]
    %v941 = vld [vmem:[#allocation10 + $0x890] sm:$0xff]
    %v942 = vld [vmem:[#allocation10 + $0x898] sm:$0xff]
    %v943 = vld [vmem:[#allocation10 + $0x8a0] sm:$0xff]
    %v944 = vld [vmem:[#allocation10 + $0x8a8] sm:$0xff]
    %v945 = vld [vmem:[#allocation10 + $0x8b0] sm:$0xff]
    %v946 = vld [vmem:[#allocation10 + $0x8b8] sm:$0xff]
    %v947 = vld [vmem:[#allocation10 + $0x8c0] sm:$0xff]
    %v948 = vld [vmem:[#allocation10 + $0x8c8] sm:$0xff]
    %v949 = vld [vmem:[#allocation10 + $0x8d0] sm:$0xff]
    %v950 = vld [vmem:[#allocation10 + $0x8d8] sm:$0xff]
    %v951 = vld [vmem:[#allocation10 + $0x8e0] sm:$0xff]
    %v952 = vld [vmem:[#allocation10 + $0x8e8] sm:$0xff]
    %v953 = vld [vmem:[#allocation10 + $0x8f0] sm:$0xff]
    %v954 = vld [vmem:[#allocation10 + $0x8f8] sm:$0xff]
    %v955 = vld [vmem:[#allocation10 + $0x900] sm:$0xff]
    %v956 = vld [vmem:[#allocation10 + $0x908] sm:$0xff]
    %v957 = vld [vmem:[#allocation10 + $0x910] sm:$0xff]
    %v958 = vld [vmem:[#allocation10 + $0x918] sm:$0xff]
    %v959 = vld [vmem:[#allocation10 + $0x920] sm:$0xff]
    %v960 = vld [vmem:[#allocation10 + $0x928] sm:$0xff]
    %v961 = vld [vmem:[#allocation10 + $0x930] sm:$0xff]
    %v962 = vld [vmem:[#allocation10 + $0x938] sm:$0xff]
    %v963 = vld [vmem:[#allocation10 + $0x940] sm:$0xff]
    %v964 = vld [vmem:[#allocation10 + $0x948] sm:$0xff]
    %v965 = vld [vmem:[#allocation10 + $0x950] sm:$0xff]
    %v966 = vld [vmem:[#allocation10 + $0x958] sm:$0xff]
    %v967 = vld [vmem:[#allocation10 + $0x960] sm:$0xff]
    %v968 = vld [vmem:[#allocation10 + $0x968] sm:$0xff]
    %v969 = vld [vmem:[#allocation10 + $0x970] sm:$0xff]
    %v970 = vld [vmem:[#allocation10 + $0x978] sm:$0xff]
    %v971 = vld [vmem:[#allocation10 + $0x980] sm:$0xff]
    %v972 = vld [vmem:[#allocation10 + $0x988] sm:$0xff]
    %v973 = vld [vmem:[#allocation10 + $0x990] sm:$0xff]
    %v974 = vld [vmem:[#allocation10 + $0x998] sm:$0xff]
    %v975 = vld [vmem:[#allocation10 + $0x9a0] sm:$0xff]
    %v976 = vld [vmem:[#allocation10 + $0x9a8] sm:$0xff]
    %v977 = vld [vmem:[#allocation10 + $0x9b0] sm:$0xff]
    %v978 = vld [vmem:[#allocation10 + $0x9b8] sm:$0xff]
    %v979 = vld [vmem:[#allocation10 + $0x9c0] sm:$0xff]
    %v980 = vld [vmem:[#allocation10 + $0x9c8] sm:$0xff]
    %v981 = vld [vmem:[#allocation10 + $0x9d0] sm:$0xff]
    %v982 = vld [vmem:[#allocation10 + $0x9d8] sm:$0xff]
    %v983 = vld [vmem:[#allocation10 + $0x9e0] sm:$0xff]
    %v984 = vld [vmem:[#allocation10 + $0x9e8] sm:$0xff]
    %v985 = vld [vmem:[#allocation10 + $0x9f0] sm:$0xff]
    %v986 = vld [vmem:[#allocation10 + $0x9f8] sm:$0xff]
    %v987 = vunpack.c.l.s8.bf16 %v667
    %v988 = vunpack.c.l.s8.bf16 %v668
    %v989 = vunpack.c.l.s8.bf16 %v669
    %v990 = vunpack.c.l.s8.bf16 %v670
    %v991 = vunpack.c.l.s8.bf16 %v671
    %v992 = vunpack.c.l.s8.bf16 %v672
    %v993 = vunpack.c.l.s8.bf16 %v673
    %v994 = vunpack.c.l.s8.bf16 %v674
    %v995 = vunpack.c.h.s8.bf16 %v667
    %v996 = vunpack.c.h.s8.bf16 %v668
    %v997 = vunpack.c.h.s8.bf16 %v669
    %v998 = vunpack.c.h.s8.bf16 %v670
    %v999 = vunpack.c.h.s8.bf16 %v671
    %v1000 = vunpack.c.h.s8.bf16 %v672
    %v1001 = vunpack.c.h.s8.bf16 %v673
    %v1002 = vunpack.c.h.s8.bf16 %v674
    %v1003 = vunpack.c.l.s8.bf16 %v675
    %v1004 = vunpack.c.l.s8.bf16 %v676
    %v1005 = vunpack.c.l.s8.bf16 %v677
    %v1006 = vunpack.c.l.s8.bf16 %v678
    %v1007 = vunpack.c.l.s8.bf16 %v679
    %v1008 = vunpack.c.l.s8.bf16 %v680
    %v1009 = vunpack.c.l.s8.bf16 %v681
    %v1010 = vunpack.c.l.s8.bf16 %v682
    %v1011 = vunpack.c.h.s8.bf16 %v675
    %v1012 = vunpack.c.h.s8.bf16 %v676
    %v1013 = vunpack.c.h.s8.bf16 %v677
    %v1014 = vunpack.c.h.s8.bf16 %v678
    %v1015 = vunpack.c.h.s8.bf16 %v679
    %v1016 = vunpack.c.h.s8.bf16 %v680
    %v1017 = vunpack.c.h.s8.bf16 %v681
    %v1018 = vunpack.c.h.s8.bf16 %v682
    %v1019 = vunpack.c.l.s8.bf16 %v683
    %v1020 = vunpack.c.l.s8.bf16 %v684
    %v1021 = vunpack.c.l.s8.bf16 %v685
    %v1022 = vunpack.c.l.s8.bf16 %v686
    %v1023 = vunpack.c.l.s8.bf16 %v687
    %v1024 = vunpack.c.l.s8.bf16 %v688
    %v1025 = vunpack.c.l.s8.bf16 %v689
    %v1026 = vunpack.c.l.s8.bf16 %v690
    %v1027 = vunpack.c.h.s8.bf16 %v683
    %v1028 = vunpack.c.h.s8.bf16 %v684
    %v1029 = vunpack.c.h.s8.bf16 %v685
    %v1030 = vunpack.c.h.s8.bf16 %v686
    %v1031 = vunpack.c.h.s8.bf16 %v687
    %v1032 = vunpack.c.h.s8.bf16 %v688
    %v1033 = vunpack.c.h.s8.bf16 %v689
    %v1034 = vunpack.c.h.s8.bf16 %v690
    %v1035 = vunpack.c.l.s8.bf16 %v691
    %v1036 = vunpack.c.l.s8.bf16 %v692
    %v1037 = vunpack.c.l.s8.bf16 %v693
    %v1038 = vunpack.c.l.s8.bf16 %v694
    %v1039 = vunpack.c.l.s8.bf16 %v695
    %v1040 = vunpack.c.l.s8.bf16 %v696
    %v1041 = vunpack.c.l.s8.bf16 %v697
    %v1042 = vunpack.c.l.s8.bf16 %v698
    %v1043 = vunpack.c.h.s8.bf16 %v691
    %v1044 = vunpack.c.h.s8.bf16 %v692
    %v1045 = vunpack.c.h.s8.bf16 %v693
    %v1046 = vunpack.c.h.s8.bf16 %v694
    %v1047 = vunpack.c.h.s8.bf16 %v695
    %v1048 = vunpack.c.h.s8.bf16 %v696
    %v1049 = vunpack.c.h.s8.bf16 %v697
    %v1050 = vunpack.c.h.s8.bf16 %v698
    %v1051 = vunpack.c.l.s8.bf16 %v699
    %v1052 = vunpack.c.l.s8.bf16 %v700
    %v1053 = vunpack.c.l.s8.bf16 %v701
    %v1054 = vunpack.c.l.s8.bf16 %v702
    %v1055 = vunpack.c.l.s8.bf16 %v703
    %v1056 = vunpack.c.l.s8.bf16 %v704
    %v1057 = vunpack.c.l.s8.bf16 %v705
    %v1058 = vunpack.c.l.s8.bf16 %v706
    %v1059 = vunpack.c.h.s8.bf16 %v699
    %v1060 = vunpack.c.h.s8.bf16 %v700
    %v1061 = vunpack.c.h.s8.bf16 %v701
    %v1062 = vunpack.c.h.s8.bf16 %v702
    %v1063 = vunpack.c.h.s8.bf16 %v703
    %v1064 = vunpack.c.h.s8.bf16 %v704
    %v1065 = vunpack.c.h.s8.bf16 %v705
    %v1066 = vunpack.c.h.s8.bf16 %v706
    %v1067 = vunpack.c.l.s8.bf16 %v707
    %v1068 = vunpack.c.l.s8.bf16 %v708
    %v1069 = vunpack.c.l.s8.bf16 %v709
    %v1070 = vunpack.c.l.s8.bf16 %v710
    %v1071 = vunpack.c.l.s8.bf16 %v711
    %v1072 = vunpack.c.l.s8.bf16 %v712
    %v1073 = vunpack.c.l.s8.bf16 %v713
    %v1074 = vunpack.c.l.s8.bf16 %v714
    %v1075 = vunpack.c.h.s8.bf16 %v707
    %v1076 = vunpack.c.h.s8.bf16 %v708
    %v1077 = vunpack.c.h.s8.bf16 %v709
    %v1078 = vunpack.c.h.s8.bf16 %v710
    %v1079 = vunpack.c.h.s8.bf16 %v711
    %v1080 = vunpack.c.h.s8.bf16 %v712
    %v1081 = vunpack.c.h.s8.bf16 %v713
    %v1082 = vunpack.c.h.s8.bf16 %v714
    %v1083 = vunpack.c.l.s8.bf16 %v715
    %v1084 = vunpack.c.l.s8.bf16 %v716
    %v1085 = vunpack.c.l.s8.bf16 %v717
    %v1086 = vunpack.c.l.s8.bf16 %v718
    %v1087 = vunpack.c.l.s8.bf16 %v719
    %v1088 = vunpack.c.l.s8.bf16 %v720
    %v1089 = vunpack.c.l.s8.bf16 %v721
    %v1090 = vunpack.c.l.s8.bf16 %v722
    %v1091 = vunpack.c.h.s8.bf16 %v715
    %v1092 = vunpack.c.h.s8.bf16 %v716
    %v1093 = vunpack.c.h.s8.bf16 %v717
    %v1094 = vunpack.c.h.s8.bf16 %v718
    %v1095 = vunpack.c.h.s8.bf16 %v719
    %v1096 = vunpack.c.h.s8.bf16 %v720
    %v1097 = vunpack.c.h.s8.bf16 %v721
    %v1098 = vunpack.c.h.s8.bf16 %v722
    %v1099 = vunpack.c.l.s8.bf16 %v723
    %v1100 = vunpack.c.l.s8.bf16 %v724
    %v1101 = vunpack.c.l.s8.bf16 %v725
    %v1102 = vunpack.c.l.s8.bf16 %v726
    %v1103 = vunpack.c.l.s8.bf16 %v727
    %v1104 = vunpack.c.l.s8.bf16 %v728
    %v1105 = vunpack.c.l.s8.bf16 %v729
    %v1106 = vunpack.c.l.s8.bf16 %v730
    %v1107 = vunpack.c.h.s8.bf16 %v723
    %v1108 = vunpack.c.h.s8.bf16 %v724
    %v1109 = vunpack.c.h.s8.bf16 %v725
    %v1110 = vunpack.c.h.s8.bf16 %v726
    %v1111 = vunpack.c.h.s8.bf16 %v727
    %v1112 = vunpack.c.h.s8.bf16 %v728
    %v1113 = vunpack.c.h.s8.bf16 %v729
    %v1114 = vunpack.c.h.s8.bf16 %v730
    %v1115 = vunpack.c.l.s8.bf16 %v731
    %v1116 = vunpack.c.l.s8.bf16 %v732
    %v1117 = vunpack.c.l.s8.bf16 %v733
    %v1118 = vunpack.c.l.s8.bf16 %v734
    %v1119 = vunpack.c.l.s8.bf16 %v735
    %v1120 = vunpack.c.l.s8.bf16 %v736
    %v1121 = vunpack.c.l.s8.bf16 %v737
    %v1122 = vunpack.c.l.s8.bf16 %v738
    %v1123 = vunpack.c.h.s8.bf16 %v731
    %v1124 = vunpack.c.h.s8.bf16 %v732
    %v1125 = vunpack.c.h.s8.bf16 %v733
    %v1126 = vunpack.c.h.s8.bf16 %v734
    %v1127 = vunpack.c.h.s8.bf16 %v735
    %v1128 = vunpack.c.h.s8.bf16 %v736
    %v1129 = vunpack.c.h.s8.bf16 %v737
    %v1130 = vunpack.c.h.s8.bf16 %v738
    %v1131 = vunpack.c.l.s8.bf16 %v739
    %v1132 = vunpack.c.l.s8.bf16 %v740
    %v1133 = vunpack.c.l.s8.bf16 %v741
    %v1134 = vunpack.c.l.s8.bf16 %v742
    %v1135 = vunpack.c.l.s8.bf16 %v743
    %v1136 = vunpack.c.l.s8.bf16 %v744
    %v1137 = vunpack.c.l.s8.bf16 %v745
    %v1138 = vunpack.c.l.s8.bf16 %v746
    %v1139 = vunpack.c.h.s8.bf16 %v739
    %v1140 = vunpack.c.h.s8.bf16 %v740
    %v1141 = vunpack.c.h.s8.bf16 %v741
    %v1142 = vunpack.c.h.s8.bf16 %v742
    %v1143 = vunpack.c.h.s8.bf16 %v743
    %v1144 = vunpack.c.h.s8.bf16 %v744
    %v1145 = vunpack.c.h.s8.bf16 %v745
    %v1146 = vunpack.c.h.s8.bf16 %v746
    %v1147 = vunpack.c.l.s8.bf16 %v747
    %v1148 = vunpack.c.l.s8.bf16 %v748
    %v1149 = vunpack.c.l.s8.bf16 %v749
    %v1150 = vunpack.c.l.s8.bf16 %v750
    %v1151 = vunpack.c.l.s8.bf16 %v751
    %v1152 = vunpack.c.l.s8.bf16 %v752
    %v1153 = vunpack.c.l.s8.bf16 %v753
    %v1154 = vunpack.c.l.s8.bf16 %v754
    %v1155 = vunpack.c.h.s8.bf16 %v747
    %v1156 = vunpack.c.h.s8.bf16 %v748
    %v1157 = vunpack.c.h.s8.bf16 %v749
    %v1158 = vunpack.c.h.s8.bf16 %v750
    %v1159 = vunpack.c.h.s8.bf16 %v751
    %v1160 = vunpack.c.h.s8.bf16 %v752
    %v1161 = vunpack.c.h.s8.bf16 %v753
    %v1162 = vunpack.c.h.s8.bf16 %v754
    %v1163 = vunpack.c.l.s8.bf16 %v755
    %v1164 = vunpack.c.l.s8.bf16 %v756
    %v1165 = vunpack.c.l.s8.bf16 %v757
    %v1166 = vunpack.c.l.s8.bf16 %v758
    %v1167 = vunpack.c.l.s8.bf16 %v759
    %v1168 = vunpack.c.l.s8.bf16 %v760
    %v1169 = vunpack.c.l.s8.bf16 %v761
    %v1170 = vunpack.c.l.s8.bf16 %v762
    %v1171 = vunpack.c.h.s8.bf16 %v755
    %v1172 = vunpack.c.h.s8.bf16 %v756
    %v1173 = vunpack.c.h.s8.bf16 %v757
    %v1174 = vunpack.c.h.s8.bf16 %v758
    %v1175 = vunpack.c.h.s8.bf16 %v759
    %v1176 = vunpack.c.h.s8.bf16 %v760
    %v1177 = vunpack.c.h.s8.bf16 %v761
    %v1178 = vunpack.c.h.s8.bf16 %v762
    %v1179 = vunpack.c.l.s8.bf16 %v763
    %v1180 = vunpack.c.l.s8.bf16 %v764
    %v1181 = vunpack.c.l.s8.bf16 %v765
    %v1182 = vunpack.c.l.s8.bf16 %v766
    %v1183 = vunpack.c.l.s8.bf16 %v767
    %v1184 = vunpack.c.l.s8.bf16 %v768
    %v1185 = vunpack.c.l.s8.bf16 %v769
    %v1186 = vunpack.c.l.s8.bf16 %v770
    %v1187 = vunpack.c.h.s8.bf16 %v763
    %v1188 = vunpack.c.h.s8.bf16 %v764
    %v1189 = vunpack.c.h.s8.bf16 %v765
    %v1190 = vunpack.c.h.s8.bf16 %v766
    %v1191 = vunpack.c.h.s8.bf16 %v767
    %v1192 = vunpack.c.h.s8.bf16 %v768
    %v1193 = vunpack.c.h.s8.bf16 %v769
    %v1194 = vunpack.c.h.s8.bf16 %v770
    %v1195 = vunpack.c.l.s8.bf16 %v771
    %v1196 = vunpack.c.l.s8.bf16 %v772
    %v1197 = vunpack.c.l.s8.bf16 %v773
    %v1198 = vunpack.c.l.s8.bf16 %v774
    %v1199 = vunpack.c.l.s8.bf16 %v775
    %v1200 = vunpack.c.l.s8.bf16 %v776
    %v1201 = vunpack.c.l.s8.bf16 %v777
    %v1202 = vunpack.c.l.s8.bf16 %v778
    %v1203 = vunpack.c.h.s8.bf16 %v771
    %v1204 = vunpack.c.h.s8.bf16 %v772
    %v1205 = vunpack.c.h.s8.bf16 %v773
    %v1206 = vunpack.c.h.s8.bf16 %v774
    %v1207 = vunpack.c.h.s8.bf16 %v775
    %v1208 = vunpack.c.h.s8.bf16 %v776
    %v1209 = vunpack.c.h.s8.bf16 %v777
    %v1210 = vunpack.c.h.s8.bf16 %v778
    %v1211 = vunpack.c.l.s8.bf16 %v779
    %v1212 = vunpack.c.l.s8.bf16 %v780
    %v1213 = vunpack.c.l.s8.bf16 %v781
    %v1214 = vunpack.c.l.s8.bf16 %v782
    %v1215 = vunpack.c.l.s8.bf16 %v783
    %v1216 = vunpack.c.l.s8.bf16 %v784
    %v1217 = vunpack.c.l.s8.bf16 %v785
    %v1218 = vunpack.c.l.s8.bf16 %v786
    %v1219 = vunpack.c.h.s8.bf16 %v779
    %v1220 = vunpack.c.h.s8.bf16 %v780
    %v1221 = vunpack.c.h.s8.bf16 %v781
    %v1222 = vunpack.c.h.s8.bf16 %v782
    %v1223 = vunpack.c.h.s8.bf16 %v783
    %v1224 = vunpack.c.h.s8.bf16 %v784
    %v1225 = vunpack.c.h.s8.bf16 %v785
    %v1226 = vunpack.c.h.s8.bf16 %v786
    %v1227 = vunpack.c.l.s8.bf16 %v787
    %v1228 = vunpack.c.l.s8.bf16 %v788
    %v1229 = vunpack.c.l.s8.bf16 %v789
    %v1230 = vunpack.c.l.s8.bf16 %v790
    %v1231 = vunpack.c.l.s8.bf16 %v791
    %v1232 = vunpack.c.l.s8.bf16 %v792
    %v1233 = vunpack.c.l.s8.bf16 %v793
    %v1234 = vunpack.c.l.s8.bf16 %v794
    %v1235 = vunpack.c.h.s8.bf16 %v787
    %v1236 = vunpack.c.h.s8.bf16 %v788
    %v1237 = vunpack.c.h.s8.bf16 %v789
    %v1238 = vunpack.c.h.s8.bf16 %v790
    %v1239 = vunpack.c.h.s8.bf16 %v791
    %v1240 = vunpack.c.h.s8.bf16 %v792
    %v1241 = vunpack.c.h.s8.bf16 %v793
    %v1242 = vunpack.c.h.s8.bf16 %v794
    %v1243 = vunpack.c.l.s8.bf16 %v795
    %v1244 = vunpack.c.l.s8.bf16 %v796
    %v1245 = vunpack.c.l.s8.bf16 %v797
    %v1246 = vunpack.c.l.s8.bf16 %v798
    %v1247 = vunpack.c.l.s8.bf16 %v799
    %v1248 = vunpack.c.l.s8.bf16 %v800
    %v1249 = vunpack.c.l.s8.bf16 %v801
    %v1250 = vunpack.c.l.s8.bf16 %v802
    %v1251 = vunpack.c.h.s8.bf16 %v795
    %v1252 = vunpack.c.h.s8.bf16 %v796
    %v1253 = vunpack.c.h.s8.bf16 %v797
    %v1254 = vunpack.c.h.s8.bf16 %v798
    %v1255 = vunpack.c.h.s8.bf16 %v799
    %v1256 = vunpack.c.h.s8.bf16 %v800
    %v1257 = vunpack.c.h.s8.bf16 %v801
    %v1258 = vunpack.c.h.s8.bf16 %v802
    %v1259 = vunpack.c.l.s8.bf16 %v803
    %v1260 = vunpack.c.l.s8.bf16 %v804
    %v1261 = vunpack.c.l.s8.bf16 %v805
    %v1262 = vunpack.c.l.s8.bf16 %v806
    %v1263 = vunpack.c.l.s8.bf16 %v807
    %v1264 = vunpack.c.l.s8.bf16 %v808
    %v1265 = vunpack.c.l.s8.bf16 %v809
    %v1266 = vunpack.c.l.s8.bf16 %v810
    %v1267 = vunpack.c.h.s8.bf16 %v803
    %v1268 = vunpack.c.h.s8.bf16 %v804
    %v1269 = vunpack.c.h.s8.bf16 %v805
    %v1270 = vunpack.c.h.s8.bf16 %v806
    %v1271 = vunpack.c.h.s8.bf16 %v807
    %v1272 = vunpack.c.h.s8.bf16 %v808
    %v1273 = vunpack.c.h.s8.bf16 %v809
    %v1274 = vunpack.c.h.s8.bf16 %v810
    %v1275 = vunpack.c.l.s8.bf16 %v811
    %v1276 = vunpack.c.l.s8.bf16 %v812
    %v1277 = vunpack.c.l.s8.bf16 %v813
    %v1278 = vunpack.c.l.s8.bf16 %v814
    %v1279 = vunpack.c.l.s8.bf16 %v815
    %v1280 = vunpack.c.l.s8.bf16 %v816
    %v1281 = vunpack.c.l.s8.bf16 %v817
    %v1282 = vunpack.c.l.s8.bf16 %v818
    %v1283 = vunpack.c.h.s8.bf16 %v811
    %v1284 = vunpack.c.h.s8.bf16 %v812
    %v1285 = vunpack.c.h.s8.bf16 %v813
    %v1286 = vunpack.c.h.s8.bf16 %v814
    %v1287 = vunpack.c.h.s8.bf16 %v815
    %v1288 = vunpack.c.h.s8.bf16 %v816
    %v1289 = vunpack.c.h.s8.bf16 %v817
    %v1290 = vunpack.c.h.s8.bf16 %v818
    %v1291 = vunpack.c.l.s8.bf16 %v819
    %v1292 = vunpack.c.l.s8.bf16 %v820
    %v1293 = vunpack.c.l.s8.bf16 %v821
    %v1294 = vunpack.c.l.s8.bf16 %v822
    %v1295 = vunpack.c.l.s8.bf16 %v823
    %v1296 = vunpack.c.l.s8.bf16 %v824
    %v1297 = vunpack.c.l.s8.bf16 %v825
    %v1298 = vunpack.c.l.s8.bf16 %v826
    %v1299 = vunpack.c.h.s8.bf16 %v819
    %v1300 = vunpack.c.h.s8.bf16 %v820
    %v1301 = vunpack.c.h.s8.bf16 %v821
    %v1302 = vunpack.c.h.s8.bf16 %v822
    %v1303 = vunpack.c.h.s8.bf16 %v823
    %v1304 = vunpack.c.h.s8.bf16 %v824
    %v1305 = vunpack.c.h.s8.bf16 %v825
    %v1306 = vunpack.c.h.s8.bf16 %v826
    %v1307 = vunpack.c.l.s8.bf16 %v827
    %v1308 = vunpack.c.l.s8.bf16 %v828
    %v1309 = vunpack.c.l.s8.bf16 %v829
    %v1310 = vunpack.c.l.s8.bf16 %v830
    %v1311 = vunpack.c.l.s8.bf16 %v831
    %v1312 = vunpack.c.l.s8.bf16 %v832
    %v1313 = vunpack.c.l.s8.bf16 %v833
    %v1314 = vunpack.c.l.s8.bf16 %v834
    %v1315 = vunpack.c.h.s8.bf16 %v827
    %v1316 = vunpack.c.h.s8.bf16 %v828
    %v1317 = vunpack.c.h.s8.bf16 %v829
    %v1318 = vunpack.c.h.s8.bf16 %v830
    %v1319 = vunpack.c.h.s8.bf16 %v831
    %v1320 = vunpack.c.h.s8.bf16 %v832
    %v1321 = vunpack.c.h.s8.bf16 %v833
    %v1322 = vunpack.c.h.s8.bf16 %v834
    %v1323 = vunpack.c.l.s8.bf16 %v835
    %v1324 = vunpack.c.l.s8.bf16 %v836
    %v1325 = vunpack.c.l.s8.bf16 %v837
    %v1326 = vunpack.c.l.s8.bf16 %v838
    %v1327 = vunpack.c.l.s8.bf16 %v839
    %v1328 = vunpack.c.l.s8.bf16 %v840
    %v1329 = vunpack.c.l.s8.bf16 %v841
    %v1330 = vunpack.c.l.s8.bf16 %v842
    %v1331 = vunpack.c.h.s8.bf16 %v835
    %v1332 = vunpack.c.h.s8.bf16 %v836
    %v1333 = vunpack.c.h.s8.bf16 %v837
    %v1334 = vunpack.c.h.s8.bf16 %v838
    %v1335 = vunpack.c.h.s8.bf16 %v839
    %v1336 = vunpack.c.h.s8.bf16 %v840
    %v1337 = vunpack.c.h.s8.bf16 %v841
    %v1338 = vunpack.c.h.s8.bf16 %v842
    %v1339 = vunpack.c.l.s8.bf16 %v843
    %v1340 = vunpack.c.l.s8.bf16 %v844
    %v1341 = vunpack.c.l.s8.bf16 %v845
    %v1342 = vunpack.c.l.s8.bf16 %v846
    %v1343 = vunpack.c.l.s8.bf16 %v847
    %v1344 = vunpack.c.l.s8.bf16 %v848
    %v1345 = vunpack.c.l.s8.bf16 %v849
    %v1346 = vunpack.c.l.s8.bf16 %v850
    %v1347 = vunpack.c.h.s8.bf16 %v843
    %v1348 = vunpack.c.h.s8.bf16 %v844
    %v1349 = vunpack.c.h.s8.bf16 %v845
    %v1350 = vunpack.c.h.s8.bf16 %v846
    %v1351 = vunpack.c.h.s8.bf16 %v847
    %v1352 = vunpack.c.h.s8.bf16 %v848
    %v1353 = vunpack.c.h.s8.bf16 %v849
    %v1354 = vunpack.c.h.s8.bf16 %v850
    %v1355 = vunpack.c.l.s8.bf16 %v851
    %v1356 = vunpack.c.l.s8.bf16 %v852
    %v1357 = vunpack.c.l.s8.bf16 %v853
    %v1358 = vunpack.c.l.s8.bf16 %v854
    %v1359 = vunpack.c.l.s8.bf16 %v855
    %v1360 = vunpack.c.l.s8.bf16 %v856
    %v1361 = vunpack.c.l.s8.bf16 %v857
    %v1362 = vunpack.c.l.s8.bf16 %v858
    %v1363 = vunpack.c.h.s8.bf16 %v851
    %v1364 = vunpack.c.h.s8.bf16 %v852
    %v1365 = vunpack.c.h.s8.bf16 %v853
    %v1366 = vunpack.c.h.s8.bf16 %v854
    %v1367 = vunpack.c.h.s8.bf16 %v855
    %v1368 = vunpack.c.h.s8.bf16 %v856
    %v1369 = vunpack.c.h.s8.bf16 %v857
    %v1370 = vunpack.c.h.s8.bf16 %v858
    %v1371 = vunpack.c.l.s8.bf16 %v859
    %v1372 = vunpack.c.l.s8.bf16 %v860
    %v1373 = vunpack.c.l.s8.bf16 %v861
    %v1374 = vunpack.c.l.s8.bf16 %v862
    %v1375 = vunpack.c.l.s8.bf16 %v863
    %v1376 = vunpack.c.l.s8.bf16 %v864
    %v1377 = vunpack.c.l.s8.bf16 %v865
    %v1378 = vunpack.c.l.s8.bf16 %v866
    %v1379 = vunpack.c.h.s8.bf16 %v859
    %v1380 = vunpack.c.h.s8.bf16 %v860
    %v1381 = vunpack.c.h.s8.bf16 %v861
    %v1382 = vunpack.c.h.s8.bf16 %v862
    %v1383 = vunpack.c.h.s8.bf16 %v863
    %v1384 = vunpack.c.h.s8.bf16 %v864
    %v1385 = vunpack.c.h.s8.bf16 %v865
    %v1386 = vunpack.c.h.s8.bf16 %v866
    %v1387 = vunpack.c.l.s8.bf16 %v867
    %v1388 = vunpack.c.l.s8.bf16 %v868
    %v1389 = vunpack.c.l.s8.bf16 %v869
    %v1390 = vunpack.c.l.s8.bf16 %v870
    %v1391 = vunpack.c.l.s8.bf16 %v871
    %v1392 = vunpack.c.l.s8.bf16 %v872
    %v1393 = vunpack.c.l.s8.bf16 %v873
    %v1394 = vunpack.c.l.s8.bf16 %v874
    %v1395 = vunpack.c.h.s8.bf16 %v867
    %v1396 = vunpack.c.h.s8.bf16 %v868
    %v1397 = vunpack.c.h.s8.bf16 %v869
    %v1398 = vunpack.c.h.s8.bf16 %v870
    %v1399 = vunpack.c.h.s8.bf16 %v871
    %v1400 = vunpack.c.h.s8.bf16 %v872
    %v1401 = vunpack.c.h.s8.bf16 %v873
    %v1402 = vunpack.c.h.s8.bf16 %v874
    %v1403 = vunpack.c.l.s8.bf16 %v875
    %v1404 = vunpack.c.l.s8.bf16 %v876
    %v1405 = vunpack.c.l.s8.bf16 %v877
    %v1406 = vunpack.c.l.s8.bf16 %v878
    %v1407 = vunpack.c.l.s8.bf16 %v879
    %v1408 = vunpack.c.l.s8.bf16 %v880
    %v1409 = vunpack.c.l.s8.bf16 %v881
    %v1410 = vunpack.c.l.s8.bf16 %v882
    %v1411 = vunpack.c.h.s8.bf16 %v875
    %v1412 = vunpack.c.h.s8.bf16 %v876
    %v1413 = vunpack.c.h.s8.bf16 %v877
    %v1414 = vunpack.c.h.s8.bf16 %v878
    %v1415 = vunpack.c.h.s8.bf16 %v879
    %v1416 = vunpack.c.h.s8.bf16 %v880
    %v1417 = vunpack.c.h.s8.bf16 %v881
    %v1418 = vunpack.c.h.s8.bf16 %v882
    %v1419 = vunpack.c.l.s8.bf16 %v883
    %v1420 = vunpack.c.l.s8.bf16 %v884
    %v1421 = vunpack.c.l.s8.bf16 %v885
    %v1422 = vunpack.c.l.s8.bf16 %v886
    %v1423 = vunpack.c.l.s8.bf16 %v887
    %v1424 = vunpack.c.l.s8.bf16 %v888
    %v1425 = vunpack.c.l.s8.bf16 %v889
    %v1426 = vunpack.c.l.s8.bf16 %v890
    %v1427 = vunpack.c.h.s8.bf16 %v883
    %v1428 = vunpack.c.h.s8.bf16 %v884
    %v1429 = vunpack.c.h.s8.bf16 %v885
    %v1430 = vunpack.c.h.s8.bf16 %v886
    %v1431 = vunpack.c.h.s8.bf16 %v887
    %v1432 = vunpack.c.h.s8.bf16 %v888
    %v1433 = vunpack.c.h.s8.bf16 %v889
    %v1434 = vunpack.c.h.s8.bf16 %v890
    %v1435 = vunpack.c.l.s8.bf16 %v891
    %v1436 = vunpack.c.l.s8.bf16 %v892
    %v1437 = vunpack.c.l.s8.bf16 %v893
    %v1438 = vunpack.c.l.s8.bf16 %v894
    %v1439 = vunpack.c.l.s8.bf16 %v895
    %v1440 = vunpack.c.l.s8.bf16 %v896
    %v1441 = vunpack.c.l.s8.bf16 %v897
    %v1442 = vunpack.c.l.s8.bf16 %v898
    %v1443 = vunpack.c.h.s8.bf16 %v891
    %v1444 = vunpack.c.h.s8.bf16 %v892
    %v1445 = vunpack.c.h.s8.bf16 %v893
    %v1446 = vunpack.c.h.s8.bf16 %v894
    %v1447 = vunpack.c.h.s8.bf16 %v895
    %v1448 = vunpack.c.h.s8.bf16 %v896
    %v1449 = vunpack.c.h.s8.bf16 %v897
    %v1450 = vunpack.c.h.s8.bf16 %v898
    %v1451 = vunpack.c.l.s8.bf16 %v899
    %v1452 = vunpack.c.l.s8.bf16 %v900
    %v1453 = vunpack.c.l.s8.bf16 %v901
    %v1454 = vunpack.c.l.s8.bf16 %v902
    %v1455 = vunpack.c.l.s8.bf16 %v903
    %v1456 = vunpack.c.l.s8.bf16 %v904
    %v1457 = vunpack.c.l.s8.bf16 %v905
    %v1458 = vunpack.c.l.s8.bf16 %v906
    %v1459 = vunpack.c.h.s8.bf16 %v899
    %v1460 = vunpack.c.h.s8.bf16 %v900
    %v1461 = vunpack.c.h.s8.bf16 %v901
    %v1462 = vunpack.c.h.s8.bf16 %v902
    %v1463 = vunpack.c.h.s8.bf16 %v903
    %v1464 = vunpack.c.h.s8.bf16 %v904
    %v1465 = vunpack.c.h.s8.bf16 %v905
    %v1466 = vunpack.c.h.s8.bf16 %v906
    %v1467 = vunpack.c.l.s8.bf16 %v907
    %v1468 = vunpack.c.l.s8.bf16 %v908
    %v1469 = vunpack.c.l.s8.bf16 %v909
    %v1470 = vunpack.c.l.s8.bf16 %v910
    %v1471 = vunpack.c.l.s8.bf16 %v911
    %v1472 = vunpack.c.l.s8.bf16 %v912
    %v1473 = vunpack.c.l.s8.bf16 %v913
    %v1474 = vunpack.c.l.s8.bf16 %v914
    %v1475 = vunpack.c.h.s8.bf16 %v907
    %v1476 = vunpack.c.h.s8.bf16 %v908
    %v1477 = vunpack.c.h.s8.bf16 %v909
    %v1478 = vunpack.c.h.s8.bf16 %v910
    %v1479 = vunpack.c.h.s8.bf16 %v911
    %v1480 = vunpack.c.h.s8.bf16 %v912
    %v1481 = vunpack.c.h.s8.bf16 %v913
    %v1482 = vunpack.c.h.s8.bf16 %v914
    %v1483 = vunpack.c.l.s8.bf16 %v915
    %v1484 = vunpack.c.l.s8.bf16 %v916
    %v1485 = vunpack.c.l.s8.bf16 %v917
    %v1486 = vunpack.c.l.s8.bf16 %v918
    %v1487 = vunpack.c.l.s8.bf16 %v919
    %v1488 = vunpack.c.l.s8.bf16 %v920
    %v1489 = vunpack.c.l.s8.bf16 %v921
    %v1490 = vunpack.c.l.s8.bf16 %v922
    %v1491 = vunpack.c.h.s8.bf16 %v915
    %v1492 = vunpack.c.h.s8.bf16 %v916
    %v1493 = vunpack.c.h.s8.bf16 %v917
    %v1494 = vunpack.c.h.s8.bf16 %v918
    %v1495 = vunpack.c.h.s8.bf16 %v919
    %v1496 = vunpack.c.h.s8.bf16 %v920
    %v1497 = vunpack.c.h.s8.bf16 %v921
    %v1498 = vunpack.c.h.s8.bf16 %v922
    %v1499 = vunpack.c.l.s8.bf16 %v923
    %v1500 = vunpack.c.l.s8.bf16 %v924
    %v1501 = vunpack.c.l.s8.bf16 %v925
    %v1502 = vunpack.c.l.s8.bf16 %v926
    %v1503 = vunpack.c.l.s8.bf16 %v927
    %v1504 = vunpack.c.l.s8.bf16 %v928
    %v1505 = vunpack.c.l.s8.bf16 %v929
    %v1506 = vunpack.c.l.s8.bf16 %v930
    %v1507 = vunpack.c.h.s8.bf16 %v923
    %v1508 = vunpack.c.h.s8.bf16 %v924
    %v1509 = vunpack.c.h.s8.bf16 %v925
    %v1510 = vunpack.c.h.s8.bf16 %v926
    %v1511 = vunpack.c.h.s8.bf16 %v927
    %v1512 = vunpack.c.h.s8.bf16 %v928
    %v1513 = vunpack.c.h.s8.bf16 %v929
    %v1514 = vunpack.c.h.s8.bf16 %v930
    %v1515 = vunpack.c.l.s8.bf16 %v931
    %v1516 = vunpack.c.l.s8.bf16 %v932
    %v1517 = vunpack.c.l.s8.bf16 %v933
    %v1518 = vunpack.c.l.s8.bf16 %v934
    %v1519 = vunpack.c.l.s8.bf16 %v935
    %v1520 = vunpack.c.l.s8.bf16 %v936
    %v1521 = vunpack.c.l.s8.bf16 %v937
    %v1522 = vunpack.c.l.s8.bf16 %v938
    %v1523 = vunpack.c.h.s8.bf16 %v931
    %v1524 = vunpack.c.h.s8.bf16 %v932
    %v1525 = vunpack.c.h.s8.bf16 %v933
    %v1526 = vunpack.c.h.s8.bf16 %v934
    %v1527 = vunpack.c.h.s8.bf16 %v935
    %v1528 = vunpack.c.h.s8.bf16 %v936
    %v1529 = vunpack.c.h.s8.bf16 %v937
    %v1530 = vunpack.c.h.s8.bf16 %v938
    %v1531 = vunpack.c.l.s8.bf16 %v939
    %v1532 = vunpack.c.l.s8.bf16 %v940
    %v1533 = vunpack.c.l.s8.bf16 %v941
    %v1534 = vunpack.c.l.s8.bf16 %v942
    %v1535 = vunpack.c.l.s8.bf16 %v943
    %v1536 = vunpack.c.l.s8.bf16 %v944
    %v1537 = vunpack.c.l.s8.bf16 %v945
    %v1538 = vunpack.c.l.s8.bf16 %v946
    %v1539 = vunpack.c.h.s8.bf16 %v939
    %v1540 = vunpack.c.h.s8.bf16 %v940
    %v1541 = vunpack.c.h.s8.bf16 %v941
    %v1542 = vunpack.c.h.s8.bf16 %v942
    %v1543 = vunpack.c.h.s8.bf16 %v943
    %v1544 = vunpack.c.h.s8.bf16 %v944
    %v1545 = vunpack.c.h.s8.bf16 %v945
    %v1546 = vunpack.c.h.s8.bf16 %v946
    %v1547 = vunpack.c.l.s8.bf16 %v947
    %v1548 = vunpack.c.l.s8.bf16 %v948
    %v1549 = vunpack.c.l.s8.bf16 %v949
    %v1550 = vunpack.c.l.s8.bf16 %v950
    %v1551 = vunpack.c.l.s8.bf16 %v951
    %v1552 = vunpack.c.l.s8.bf16 %v952
    %v1553 = vunpack.c.l.s8.bf16 %v953
    %v1554 = vunpack.c.l.s8.bf16 %v954
    %v1555 = vunpack.c.h.s8.bf16 %v947
    %v1556 = vunpack.c.h.s8.bf16 %v948
    %v1557 = vunpack.c.h.s8.bf16 %v949
    %v1558 = vunpack.c.h.s8.bf16 %v950
    %v1559 = vunpack.c.h.s8.bf16 %v951
    %v1560 = vunpack.c.h.s8.bf16 %v952
    %v1561 = vunpack.c.h.s8.bf16 %v953
    %v1562 = vunpack.c.h.s8.bf16 %v954
    %v1563 = vunpack.c.l.s8.bf16 %v955
    %v1564 = vunpack.c.l.s8.bf16 %v956
    %v1565 = vunpack.c.l.s8.bf16 %v957
    %v1566 = vunpack.c.l.s8.bf16 %v958
    %v1567 = vunpack.c.l.s8.bf16 %v959
    %v1568 = vunpack.c.l.s8.bf16 %v960
    %v1569 = vunpack.c.l.s8.bf16 %v961
    %v1570 = vunpack.c.l.s8.bf16 %v962
    %v1571 = vunpack.c.h.s8.bf16 %v955
    %v1572 = vunpack.c.h.s8.bf16 %v956
    %v1573 = vunpack.c.h.s8.bf16 %v957
    %v1574 = vunpack.c.h.s8.bf16 %v958
    %v1575 = vunpack.c.h.s8.bf16 %v959
    %v1576 = vunpack.c.h.s8.bf16 %v960
    %v1577 = vunpack.c.h.s8.bf16 %v961
    %v1578 = vunpack.c.h.s8.bf16 %v962
    %v1579 = vunpack.c.l.s8.bf16 %v963
    %v1580 = vunpack.c.l.s8.bf16 %v964
    %v1581 = vunpack.c.l.s8.bf16 %v965
    %v1582 = vunpack.c.l.s8.bf16 %v966
    %v1583 = vunpack.c.l.s8.bf16 %v967
    %v1584 = vunpack.c.l.s8.bf16 %v968
    %v1585 = vunpack.c.l.s8.bf16 %v969
    %v1586 = vunpack.c.l.s8.bf16 %v970
    %v1587 = vunpack.c.h.s8.bf16 %v963
    %v1588 = vunpack.c.h.s8.bf16 %v964
    %v1589 = vunpack.c.h.s8.bf16 %v965
    %v1590 = vunpack.c.h.s8.bf16 %v966
    %v1591 = vunpack.c.h.s8.bf16 %v967
    %v1592 = vunpack.c.h.s8.bf16 %v968
    %v1593 = vunpack.c.h.s8.bf16 %v969
    %v1594 = vunpack.c.h.s8.bf16 %v970
    %v1595 = vunpack.c.l.s8.bf16 %v971
    %v1596 = vunpack.c.l.s8.bf16 %v972
    %v1597 = vunpack.c.l.s8.bf16 %v973
    %v1598 = vunpack.c.l.s8.bf16 %v974
    %v1599 = vunpack.c.l.s8.bf16 %v975
    %v1600 = vunpack.c.l.s8.bf16 %v976
    %v1601 = vunpack.c.l.s8.bf16 %v977
    %v1602 = vunpack.c.l.s8.bf16 %v978
    %v1603 = vunpack.c.h.s8.bf16 %v971
    %v1604 = vunpack.c.h.s8.bf16 %v972
    %v1605 = vunpack.c.h.s8.bf16 %v973
    %v1606 = vunpack.c.h.s8.bf16 %v974
    %v1607 = vunpack.c.h.s8.bf16 %v975
    %v1608 = vunpack.c.h.s8.bf16 %v976
    %v1609 = vunpack.c.h.s8.bf16 %v977
    %v1610 = vunpack.c.h.s8.bf16 %v978
    %v1611 = vunpack.c.l.s8.bf16 %v979
    %v1612 = vunpack.c.l.s8.bf16 %v980
    %v1613 = vunpack.c.l.s8.bf16 %v981
    %v1614 = vunpack.c.l.s8.bf16 %v982
    %v1615 = vunpack.c.l.s8.bf16 %v983
    %v1616 = vunpack.c.l.s8.bf16 %v984
    %v1617 = vunpack.c.l.s8.bf16 %v985
    %v1618 = vunpack.c.l.s8.bf16 %v986
    %v1619 = vunpack.c.h.s8.bf16 %v979
    %v1620 = vunpack.c.h.s8.bf16 %v980
    %v1621 = vunpack.c.h.s8.bf16 %v981
    %v1622 = vunpack.c.h.s8.bf16 %v982
    %v1623 = vunpack.c.h.s8.bf16 %v983
    %v1624 = vunpack.c.h.s8.bf16 %v984
    %v1625 = vunpack.c.h.s8.bf16 %v985
    %v1626 = vunpack.c.h.s8.bf16 %v986
    %1627 = vmatprep.subr.bf16.mxu0 %v988
    %1628 = vmatpush1.bf16.msra.mxu0 %v987
    %1629 = vmatprep.subr.bf16.mxu0 %v996
    %1630 = vmatpush1.bf16.msra.mxu0 %v995
    %1631 = vmatprep.subr.bf16.mxu0 %v1004
    %1632 = vmatpush1.bf16.msra.mxu0 %v1003
    %1633 = vmatprep.subr.bf16.mxu0 %v1012
    %1634 = vmatpush1.bf16.msra.mxu0 %v1011
    %1635 = vmatprep.subr.bf16.mxu0 %v1020
    %1636 = vmatpush1.bf16.msra.mxu0 %v1019
    %1637 = vmatprep.subr.bf16.mxu0 %v1028
    %1638 = vmatpush1.bf16.msra.mxu0 %v1027
    %1639 = vmatprep.subr.bf16.mxu0 %v1036
    %1640 = vmatpush1.bf16.msra.mxu0 %v1035
    %1641 = vmatprep.subr.bf16.mxu0 %v1044
    %1642 = vmatpush1.bf16.msra.mxu0 %v1043
    %1643 = vmatprep.subr.bf16.mxu0 %v1052
    %1644 = vmatpush1.bf16.msra.mxu0 %v1051
    %1645 = vmatprep.subr.bf16.mxu0 %v1060
    %1646 = vmatpush1.bf16.msra.mxu0 %v1059
    %1647 = vmatprep.subr.bf16.mxu0 %v1068
    %1648 = vmatpush1.bf16.msra.mxu0 %v1067
    %1649 = vmatprep.subr.bf16.mxu0 %v1076
    %1650 = vmatpush1.bf16.msra.mxu0 %v1075
    %1651 = vmatprep.subr.bf16.mxu0 %v1084
    %1652 = vmatpush1.bf16.msra.mxu0 %v1083
    %1653 = vmatprep.subr.bf16.mxu0 %v1092
    %1654 = vmatpush1.bf16.msra.mxu0 %v1091
    %1655 = vmatprep.subr.bf16.mxu0 %v1100
    %1656 = vmatpush1.bf16.msra.mxu0 %v1099
    %1657 = vmatprep.subr.bf16.mxu0 %v1108
    %1658 = vmatpush1.bf16.msra.mxu0 %v1107
    %1659 = vmatprep.mubr.bf16.mxu0 %v658
    %1660 = vmatmul.mubr.bf16.gmra.mrb[0].mxu0 %v657
    %v1661 = vpop.f32.mrb[0].mxu0
    %v1662 = vadd.f32 0.0, %v1661
    %v1663 = vpop.f32.mrb[0].mxu0
    %v1664 = vadd.f32 0.0, %v1663
    %v1665 = vpop.f32.mrb[0].mxu0
    %v1666 = vpop.f32.mrb[0].mxu0
    %1667 = vdwg.mxu0
    %1668 = vmatprep.subr.bf16.mxu0 %v1116
    %1669 = vmatpush1.bf16.msra.mxu0 %v1115
    %1670 = vmatprep.subr.bf16.mxu0 %v1124
    %1671 = vmatpush1.bf16.msra.mxu0 %v1123
    %1672 = vmatprep.subr.bf16.mxu0 %v1132
    %1673 = vmatpush1.bf16.msra.mxu0 %v1131
    %1674 = vmatprep.subr.bf16.mxu0 %v1140
    %1675 = vmatpush1.bf16.msra.mxu0 %v1139
    %1676 = vmatprep.subr.bf16.mxu0 %v1148
    %1677 = vmatpush1.bf16.msra.mxu0 %v1147
    %1678 = vmatprep.subr.bf16.mxu0 %v1156
    %1679 = vmatpush1.bf16.msra.mxu0 %v1155
    %1680 = vmatprep.subr.bf16.mxu0 %v1164
    %1681 = vmatpush1.bf16.msra.mxu0 %v1163
    %1682 = vmatprep.subr.bf16.mxu0 %v1172
    %1683 = vmatpush1.bf16.msra.mxu0 %v1171
    %1684 = vmatprep.subr.bf16.mxu0 %v1180
    %1685 = vmatpush1.bf16.msra.mxu0 %v1179
    %1686 = vmatprep.subr.bf16.mxu0 %v1188
    %1687 = vmatpush1.bf16.msra.mxu0 %v1187
    %1688 = vmatprep.subr.bf16.mxu0 %v1196
    %1689 = vmatpush1.bf16.msra.mxu0 %v1195
    %1690 = vmatprep.subr.bf16.mxu0 %v1204
    %1691 = vmatpush1.bf16.msra.mxu0 %v1203
    %1692 = vmatprep.subr.bf16.mxu0 %v1212
    %1693 = vmatpush1.bf16.msra.mxu0 %v1211
    %1694 = vmatprep.subr.bf16.mxu0 %v1220
    %1695 = vmatpush1.bf16.msra.mxu0 %v1219
    %1696 = vmatprep.subr.bf16.mxu0 %v1228
    %1697 = vmatpush1.bf16.msra.mxu0 %v1227
    %1698 = vmatprep.subr.bf16.mxu0 %v1236
    %1699 = vmatpush1.bf16.msra.mxu0 %v1235
    %1700 = vmatprep.mubr.bf16.mxu0 %v660
    %1701 = vmatmul.mubr.bf16.gmra.mrb[0].mxu0 %v659
    %v1702 = vpop.f32.mrb[0].mxu0
    %v1703 = vadd.f32 %v1662, %v1702
    %v1704 = vpop.f32.mrb[0].mxu0
    %v1705 = vadd.f32 %v1664, %v1704
    %v1706 = vpop.f32.mrb[0].mxu0
    %v1707 = vpop.f32.mrb[0].mxu0
    %1708 = vdwg.mxu0
    %1709 = vmatprep.subr.bf16.mxu0 %v1244
    %1710 = vmatpush1.bf16.msra.mxu0 %v1243
    %1711 = vmatprep.subr.bf16.mxu0 %v1252
    %1712 = vmatpush1.bf16.msra.mxu0 %v1251
    %1713 = vmatprep.subr.bf16.mxu0 %v1260
    %1714 = vmatpush1.bf16.msra.mxu0 %v1259
    %1715 = vmatprep.subr.bf16.mxu0 %v1268
    %1716 = vmatpush1.bf16.msra.mxu0 %v1267
    %1717 = vmatprep.subr.bf16.mxu0 %v1276
    %1718 = vmatpush1.bf16.msra.mxu0 %v1275
    %1719 = vmatprep.subr.bf16.mxu0 %v1284
    %1720 = vmatpush1.bf16.msra.mxu0 %v1283
    %1721 = vmatprep.subr.bf16.mxu0 %v1292
    %1722 = vmatpush1.bf16.msra.mxu0 %v1291
    %1723 = vmatprep.subr.bf16.mxu0 %v1300
    %1724 = vmatpush1.bf16.msra.mxu0 %v1299
    %1725 = vmatprep.subr.bf16.mxu0 %v1308
    %1726 = vmatpush1.bf16.msra.mxu0 %v1307
    %1727 = vmatprep.subr.bf16.mxu0 %v1316
    %1728 = vmatpush1.bf16.msra.mxu0 %v1315
    %1729 = vmatprep.subr.bf16.mxu0 %v1324
    %1730 = vmatpush1.bf16.msra.mxu0 %v1323
    %1731 = vmatprep.subr.bf16.mxu0 %v1332
    %1732 = vmatpush1.bf16.msra.mxu0 %v1331
    %1733 = vmatprep.subr.bf16.mxu0 %v1340
    %1734 = vmatpush1.bf16.msra.mxu0 %v1339
    %1735 = vmatprep.subr.bf16.mxu0 %v1348
    %1736 = vmatpush1.bf16.msra.mxu0 %v1347
    %1737 = vmatprep.subr.bf16.mxu0 %v1356
    %1738 = vmatpush1.bf16.msra.mxu0 %v1355
    %1739 = vmatprep.subr.bf16.mxu0 %v1364
    %1740 = vmatpush1.bf16.msra.mxu0 %v1363
    %1741 = vmatprep.mubr.bf16.mxu0 %v662
    %1742 = vmatmul.mubr.bf16.gmra.mrb[0].mxu0 %v661
    %v1743 = vpop.f32.mrb[0].mxu0
    %v1744 = vadd.f32 %v1703, %v1743
    %v1745 = vpop.f32.mrb[0].mxu0
    %v1746 = vadd.f32 %v1705, %v1745
    %v1747 = vpop.f32.mrb[0].mxu0
    %v1748 = vpop.f32.mrb[0].mxu0
    %1749 = vdwg.mxu0
    %1750 = vmatprep.subr.bf16.mxu0 %v1372
    %1751 = vmatpush1.bf16.msra.mxu0 %v1371
    %1752 = vmatprep.subr.bf16.mxu0 %v1380
    %1753 = vmatpush1.bf16.msra.mxu0 %v1379
    %1754 = vmatprep.subr.bf16.mxu0 %v1388
    %1755 = vmatpush1.bf16.msra.mxu0 %v1387
    %1756 = vmatprep.subr.bf16.mxu0 %v1396
    %1757 = vmatpush1.bf16.msra.mxu0 %v1395
    %1758 = vmatprep.subr.bf16.mxu0 %v1404
    %1759 = vmatpush1.bf16.msra.mxu0 %v1403
    %1760 = vmatprep.subr.bf16.mxu0 %v1412
    %1761 = vmatpush1.bf16.msra.mxu0 %v1411
    %1762 = vmatprep.subr.bf16.mxu0 %v1420
    %1763 = vmatpush1.bf16.msra.mxu0 %v1419
    %1764 = vmatprep.subr.bf16.mxu0 %v1428
    %1765 = vmatpush1.bf16.msra.mxu0 %v1427
    %1766 = vmatprep.subr.bf16.mxu0 %v1436
    %1767 = vmatpush1.bf16.msra.mxu0 %v1435
    %1768 = vmatprep.subr.bf16.mxu0 %v1444
    %1769 = vmatpush1.bf16.msra.mxu0 %v1443
    %1770 = vmatprep.subr.bf16.mxu0 %v1452
    %1771 = vmatpush1.bf16.msra.mxu0 %v1451
    %1772 = vmatprep.subr.bf16.mxu0 %v1460
    %1773 = vmatpush1.bf16.msra.mxu0 %v1459
    %1774 = vmatprep.subr.bf16.mxu0 %v1468
    %1775 = vmatpush1.bf16.msra.mxu0 %v1467
    %1776 = vmatprep.subr.bf16.mxu0 %v1476
    %1777 = vmatpush1.bf16.msra.mxu0 %v1475
    %1778 = vmatprep.subr.bf16.mxu0 %v1484
    %1779 = vmatpush1.bf16.msra.mxu0 %v1483
    %1780 = vmatprep.subr.bf16.mxu0 %v1492
    %1781 = vmatpush1.bf16.msra.mxu0 %v1491
    %1782 = vmatprep.mubr.bf16.mxu0 %v664
    %1783 = vmatmul.mubr.bf16.gmra.mrb[0].mxu0 %v663
    %v1784 = vpop.f32.mrb[0].mxu0
    %v1785 = vadd.f32 %v1744, %v1784
    %v1786 = vpop.f32.mrb[0].mxu0
    %v1787 = vadd.f32 %v1746, %v1786
    %v1788 = vpop.f32.mrb[0].mxu0
    %v1789 = vpop.f32.mrb[0].mxu0
    %1790 = vdwg.mxu0
    %1791 = vmatprep.subr.bf16.mxu0 %v1500
    %1792 = vmatpush1.bf16.msra.mxu0 %v1499
    %1793 = vmatprep.subr.bf16.mxu0 %v1508
    %1794 = vmatpush1.bf16.msra.mxu0 %v1507
    %1795 = vmatprep.subr.bf16.mxu0 %v1516
    %1796 = vmatpush1.bf16.msra.mxu0 %v1515
    %1797 = vmatprep.subr.bf16.mxu0 %v1524
    %1798 = vmatpush1.bf16.msra.mxu0 %v1523
    %1799 = vmatprep.subr.bf16.mxu0 %v1532
    %1800 = vmatpush1.bf16.msra.mxu0 %v1531
    %1801 = vmatprep.subr.bf16.mxu0 %v1540
    %1802 = vmatpush1.bf16.msra.mxu0 %v1539
    %1803 = vmatprep.subr.bf16.mxu0 %v1548
    %1804 = vmatpush1.bf16.msra.mxu0 %v1547
    %1805 = vmatprep.subr.bf16.mxu0 %v1556
    %1806 = vmatpush1.bf16.msra.mxu0 %v1555
    %1807 = vmatprep.subr.bf16.mxu0 %v1564
    %1808 = vmatpush1.bf16.msra.mxu0 %v1563
    %1809 = vmatprep.subr.bf16.mxu0 %v1572
    %1810 = vmatpush1.bf16.msra.mxu0 %v1571
    %1811 = vmatprep.subr.bf16.mxu0 %v1580
    %1812 = vmatpush1.bf16.msra.mxu0 %v1579
    %1813 = vmatprep.subr.bf16.mxu0 %v1588
    %1814 = vmatpush1.bf16.msra.mxu0 %v1587
    %1815 = vmatprep.subr.bf16.mxu0 %v1596
    %1816 = vmatpush1.bf16.msra.mxu0 %v1595
    %1817 = vmatprep.subr.bf16.mxu0 %v1604
    %1818 = vmatpush1.bf16.msra.mxu0 %v1603
    %1819 = vmatprep.subr.bf16.mxu0 %v1612
    %1820 = vmatpush1.bf16.msra.mxu0 %v1611
    %1821 = vmatprep.subr.bf16.mxu0 %v1620
    %1822 = vmatpush1.bf16.msra.mxu0 %v1619
    %1823 = vmatprep.mubr.bf16.mxu0 %v666
    %1824 = vmatmul.mubr.bf16.gmra.mrb[0].mxu0 %v665
    %v1825 = vpop.f32.mrb[0].mxu0
    %v1826 = vadd.f32 %v1785, %v1825
    %v1827 = vpop.f32.mrb[0].mxu0
    %v1828 = vadd.f32 %v1787, %v1827
    %v1829 = vpop.f32.mrb[0].mxu0
    %v1830 = vpop.f32.mrb[0].mxu0
    %1831 = vdwg.mxu0
    %1832 = vmatprep.subr.bf16.mxu0 %v990
    %1833 = vmatpush1.bf16.msra.mxu0 %v989
    %1834 = vmatprep.subr.bf16.mxu0 %v998
    %1835 = vmatpush1.bf16.msra.mxu0 %v997
    %1836 = vmatprep.subr.bf16.mxu0 %v1006
    %1837 = vmatpush1.bf16.msra.mxu0 %v1005
    %1838 = vmatprep.subr.bf16.mxu0 %v1014
    %1839 = vmatpush1.bf16.msra.mxu0 %v1013
    %1840 = vmatprep.subr.bf16.mxu0 %v1022
    %1841 = vmatpush1.bf16.msra.mxu0 %v1021
    %1842 = vmatprep.subr.bf16.mxu0 %v1030
    %1843 = vmatpush1.bf16.msra.mxu0 %v1029
    %1844 = vmatprep.subr.bf16.mxu0 %v1038
    %1845 = vmatpush1.bf16.msra.mxu0 %v1037
    %1846 = vmatprep.subr.bf16.mxu0 %v1046
    %1847 = vmatpush1.bf16.msra.mxu0 %v1045
    %1848 = vmatprep.subr.bf16.mxu0 %v1054
    %1849 = vmatpush1.bf16.msra.mxu0 %v1053
    %1850 = vmatprep.subr.bf16.mxu0 %v1062
    %1851 = vmatpush1.bf16.msra.mxu0 %v1061
    %1852 = vmatprep.subr.bf16.mxu0 %v1070
    %1853 = vmatpush1.bf16.msra.mxu0 %v1069
    %1854 = vmatprep.subr.bf16.mxu0 %v1078
    %1855 = vmatpush1.bf16.msra.mxu0 %v1077
    %1856 = vmatprep.subr.bf16.mxu0 %v1086
    %1857 = vmatpush1.bf16.msra.mxu0 %v1085
    %1858 = vmatprep.subr.bf16.mxu0 %v1094
    %1859 = vmatpush1.bf16.msra.mxu0 %v1093
    %1860 = vmatprep.subr.bf16.mxu0 %v1102
    %1861 = vmatpush1.bf16.msra.mxu0 %v1101
    %1862 = vmatprep.subr.bf16.mxu0 %v1110
    %1863 = vmatpush1.bf16.msra.mxu0 %v1109
    %1864 = vmatprep.mubr.bf16.mxu0 %v658
    %1865 = vmatmul.mubr.bf16.gmra.mrb[0].mxu0 %v657
    %v1866 = vpop.f32.mrb[0].mxu0
    %v1867 = vadd.f32 0.0, %v1866
    %v1868 = vpop.f32.mrb[0].mxu0
    %v1869 = vadd.f32 0.0, %v1868
    %v1870 = vpop.f32.mrb[0].mxu0
    %v1871 = vpop.f32.mrb[0].mxu0
    %1872 = vdwg.mxu0
    %1873 = vmatprep.subr.bf16.mxu0 %v1118
    %1874 = vmatpush1.bf16.msra.mxu0 %v1117
    %1875 = vmatprep.subr.bf16.mxu0 %v1126
    %1876 = vmatpush1.bf16.msra.mxu0 %v1125
    %1877 = vmatprep.subr.bf16.mxu0 %v1134
    %1878 = vmatpush1.bf16.msra.mxu0 %v1133
    %1879 = vmatprep.subr.bf16.mxu0 %v1142
    %1880 = vmatpush1.bf16.msra.mxu0 %v1141
    %1881 = vmatprep.subr.bf16.mxu0 %v1150
    %1882 = vmatpush1.bf16.msra.mxu0 %v1149
    %1883 = vmatprep.subr.bf16.mxu0 %v1158
    %1884 = vmatpush1.bf16.msra.mxu0 %v1157
    %1885 = vmatprep.subr.bf16.mxu0 %v1166
    %1886 = vmatpush1.bf16.msra.mxu0 %v1165
    %1887 = vmatprep.subr.bf16.mxu0 %v1174
    %1888 = vmatpush1.bf16.msra.mxu0 %v1173
    %1889 = vmatprep.subr.bf16.mxu0 %v1182
    %1890 = vmatpush1.bf16.msra.mxu0 %v1181
    %1891 = vmatprep.subr.bf16.mxu0 %v1190
    %1892 = vmatpush1.bf16.msra.mxu0 %v1189
    %1893 = vmatprep.subr.bf16.mxu0 %v1198
    %1894 = vmatpush1.bf16.msra.mxu0 %v1197
    %1895 = vmatprep.subr.bf16.mxu0 %v1206
    %1896 = vmatpush1.bf16.msra.mxu0 %v1205
    %1897 = vmatprep.subr.bf16.mxu0 %v1214
    %1898 = vmatpush1.bf16.msra.mxu0 %v1213
    %1899 = vmatprep.subr.bf16.mxu0 %v1222
    %1900 = vmatpush1.bf16.msra.mxu0 %v1221
    %1901 = vmatprep.subr.bf16.mxu0 %v1230
    %1902 = vmatpush1.bf16.msra.mxu0 %v1229
    %1903 = vmatprep.subr.bf16.mxu0 %v1238
    %1904 = vmatpush1.bf16.msra.mxu0 %v1237
    %1905 = vmatprep.mubr.bf16.mxu0 %v660
    %1906 = vmatmul.mubr.bf16.gmra.mrb[0].mxu0 %v659
    %v1907 = vpop.f32.mrb[0].mxu0
    %v1908 = vadd.f32 %v1867, %v1907
    %v1909 = vpop.f32.mrb[0].mxu0
    %v1910 = vadd.f32 %v1869, %v1909
    %v1911 = vpop.f32.mrb[0].mxu0
    %v1912 = vpop.f32.mrb[0].mxu0
    %1913 = vdwg.mxu0
    %1914 = vmatprep.subr.bf16.mxu0 %v1246
    %1915 = vmatpush1.bf16.msra.mxu0 %v1245
    %1916 = vmatprep.subr.bf16.mxu0 %v1254
    %1917 = vmatpush1.bf16.msra.mxu0 %v1253
    %1918 = vmatprep.subr.bf16.mxu0 %v1262
    %1919 = vmatpush1.bf16.msra.mxu0 %v1261
    %1920 = vmatprep.subr.bf16.mxu0 %v1270
    %1921 = vmatpush1.bf16.msra.mxu0 %v1269
    %1922 = vmatprep.subr.bf16.mxu0 %v1278
    %1923 = vmatpush1.bf16.msra.mxu0 %v1277
    %1924 = vmatprep.subr.bf16.mxu0 %v1286
    %1925 = vmatpush1.bf16.msra.mxu0 %v1285
    %1926 = vmatprep.subr.bf16.mxu0 %v1294
    %1927 = vmatpush1.bf16.msra.mxu0 %v1293
    %1928 = vmatprep.subr.bf16.mxu0 %v1302
    %1929 = vmatpush1.bf16.msra.mxu0 %v1301
    %1930 = vmatprep.subr.bf16.mxu0 %v1310
    %1931 = vmatpush1.bf16.msra.mxu0 %v1309
    %1932 = vmatprep.subr.bf16.mxu0 %v1318
    %1933 = vmatpush1.bf16.msra.mxu0 %v1317
    %1934 = vmatprep.subr.bf16.mxu0 %v1326
    %1935 = vmatpush1.bf16.msra.mxu0 %v1325
    %1936 = vmatprep.subr.bf16.mxu0 %v1334
    %1937 = vmatpush1.bf16.msra.mxu0 %v1333
    %1938 = vmatprep.subr.bf16.mxu0 %v1342
    %1939 = vmatpush1.bf16.msra.mxu0 %v1341
    %1940 = vmatprep.subr.bf16.mxu0 %v1350
    %1941 = vmatpush1.bf16.msra.mxu0 %v1349
    %1942 = vmatprep.subr.bf16.mxu0 %v1358
    %1943 = vmatpush1.bf16.msra.mxu0 %v1357
    %1944 = vmatprep.subr.bf16.mxu0 %v1366
    %1945 = vmatpush1.bf16.msra.mxu0 %v1365
    %1946 = vmatprep.mubr.bf16.mxu0 %v662
    %1947 = vmatmul.mubr.bf16.gmra.mrb[0].mxu0 %v661
    %v1948 = vpop.f32.mrb[0].mxu0
    %v1949 = vadd.f32 %v1908, %v1948
    %v1950 = vpop.f32.mrb[0].mxu0
    %v1951 = vadd.f32 %v1910, %v1950
    %v1952 = vpop.f32.mrb[0].mxu0
    %v1953 = vpop.f32.mrb[0].mxu0
    %1954 = vdwg.mxu0
    %1955 = vmatprep.subr.bf16.mxu0 %v1374
    %1956 = vmatpush1.bf16.msra.mxu0 %v1373
    %1957 = vmatprep.subr.bf16.mxu0 %v1382
    %1958 = vmatpush1.bf16.msra.mxu0 %v1381
    %1959 = vmatprep.subr.bf16.mxu0 %v1390
    %1960 = vmatpush1.bf16.msra.mxu0 %v1389
    %1961 = vmatprep.subr.bf16.mxu0 %v1398
    %1962 = vmatpush1.bf16.msra.mxu0 %v1397
    %1963 = vmatprep.subr.bf16.mxu0 %v1406
    %1964 = vmatpush1.bf16.msra.mxu0 %v1405
    %1965 = vmatprep.subr.bf16.mxu0 %v1414
    %1966 = vmatpush1.bf16.msra.mxu0 %v1413
    %1967 = vmatprep.subr.bf16.mxu0 %v1422
    %1968 = vmatpush1.bf16.msra.mxu0 %v1421
    %1969 = vmatprep.subr.bf16.mxu0 %v1430
    %1970 = vmatpush1.bf16.msra.mxu0 %v1429
    %1971 = vmatprep.subr.bf16.mxu0 %v1438
    %1972 = vmatpush1.bf16.msra.mxu0 %v1437
    %1973 = vmatprep.subr.bf16.mxu0 %v1446
    %1974 = vmatpush1.bf16.msra.mxu0 %v1445
    %1975 = vmatprep.subr.bf16.mxu0 %v1454
    %1976 = vmatpush1.bf16.msra.mxu0 %v1453
    %1977 = vmatprep.subr.bf16.mxu0 %v1462
    %1978 = vmatpush1.bf16.msra.mxu0 %v1461
    %1979 = vmatprep.subr.bf16.mxu0 %v1470
    %1980 = vmatpush1.bf16.msra.mxu0 %v1469
    %1981 = vmatprep.subr.bf16.mxu0 %v1478
    %1982 = vmatpush1.bf16.msra.mxu0 %v1477
    %1983 = vmatprep.subr.bf16.mxu0 %v1486
    %1984 = vmatpush1.bf16.msra.mxu0 %v1485
    %1985 = vmatprep.subr.bf16.mxu0 %v1494
    %1986 = vmatpush1.bf16.msra.mxu0 %v1493
    %1987 = vmatprep.mubr.bf16.mxu0 %v664
    %1988 = vmatmul.mubr.bf16.gmra.mrb[0].mxu0 %v663
    %v1989 = vpop.f32.mrb[0].mxu0
    %v1990 = vadd.f32 %v1949, %v1989
    %v1991 = vpop.f32.mrb[0].mxu0
    %v1992 = vadd.f32 %v1951, %v1991
    %v1993 = vpop.f32.mrb[0].mxu0
    %v1994 = vpop.f32.mrb[0].mxu0
    %1995 = vdwg.mxu0
    %1996 = vmatprep.subr.bf16.mxu0 %v1502
    %1997 = vmatpush1.bf16.msra.mxu0 %v1501
    %1998 = vmatprep.subr.bf16.mxu0 %v1510
    %1999 = vmatpush1.bf16.msra.mxu0 %v1509
    %2000 = vmatprep.subr.bf16.mxu0 %v1518
    %2001 = vmatpush1.bf16.msra.mxu0 %v1517
    %2002 = vmatprep.subr.bf16.mxu0 %v1526
    %2003 = vmatpush1.bf16.msra.mxu0 %v1525
    %2004 = vmatprep.subr.bf16.mxu0 %v1534
    %2005 = vmatpush1.bf16.msra.mxu0 %v1533
    %2006 = vmatprep.subr.bf16.mxu0 %v1542
    %2007 = vmatpush1.bf16.msra.mxu0 %v1541
    %2008 = vmatprep.subr.bf16.mxu0 %v1550
    %2009 = vmatpush1.bf16.msra.mxu0 %v1549
    %2010 = vmatprep.subr.bf16.mxu0 %v1558
    %2011 = vmatpush1.bf16.msra.mxu0 %v1557
    %2012 = vmatprep.subr.bf16.mxu0 %v1566
    %2013 = vmatpush1.bf16.msra.mxu0 %v1565
    %2014 = vmatprep.subr.bf16.mxu0 %v1574
    %2015 = vmatpush1.bf16.msra.mxu0 %v1573
    %2016 = vmatprep.subr.bf16.mxu0 %v1582
    %2017 = vmatpush1.bf16.msra.mxu0 %v1581
    %2018 = vmatprep.subr.bf16.mxu0 %v1590
    %2019 = vmatpush1.bf16.msra.mxu0 %v1589
    %2020 = vmatprep.subr.bf16.mxu0 %v1598
    %2021 = vmatpush1.bf16.msra.mxu0 %v1597
    %2022 = vmatprep.subr.bf16.mxu0 %v1606
    %2023 = vmatpush1.bf16.msra.mxu0 %v1605
    %2024 = vmatprep.subr.bf16.mxu0 %v1614
    %2025 = vmatpush1.bf16.msra.mxu0 %v1613
    %2026 = vmatprep.subr.bf16.mxu0 %v1622
    %2027 = vmatpush1.bf16.msra.mxu0 %v1621
    %2028 = vmatprep.mubr.bf16.mxu0 %v666
    %2029 = vmatmul.mubr.bf16.gmra.mrb[0].mxu0 %v665
    %v2030 = vpop.f32.mrb[0].mxu0
    %v2031 = vadd.f32 %v1990, %v2030
    %v2032 = vpop.f32.mrb[0].mxu0
    %v2033 = vadd.f32 %v1992, %v2032
    %v2034 = vpop.f32.mrb[0].mxu0
    %v2035 = vpop.f32.mrb[0].mxu0
    %2036 = vdwg.mxu0
    %2037 = vmatprep.subr.bf16.mxu0 %v992
    %2038 = vmatpush1.bf16.msra.mxu0 %v991
    %2039 = vmatprep.subr.bf16.mxu0 %v1000
    %2040 = vmatpush1.bf16.msra.mxu0 %v999
    %2041 = vmatprep.subr.bf16.mxu0 %v1008
    %2042 = vmatpush1.bf16.msra.mxu0 %v1007
    %2043 = vmatprep.subr.bf16.mxu0 %v1016
    %2044 = vmatpush1.bf16.msra.mxu0 %v1015
    %2045 = vmatprep.subr.bf16.mxu0 %v1024
    %2046 = vmatpush1.bf16.msra.mxu0 %v1023
    %2047 = vmatprep.subr.bf16.mxu0 %v1032
    %2048 = vmatpush1.bf16.msra.mxu0 %v1031
    %2049 = vmatprep.subr.bf16.mxu0 %v1040
    %2050 = vmatpush1.bf16.msra.mxu0 %v1039
    %2051 = vmatprep.subr.bf16.mxu0 %v1048
    %2052 = vmatpush1.bf16.msra.mxu0 %v1047
    %2053 = vmatprep.subr.bf16.mxu0 %v1056
    %2054 = vmatpush1.bf16.msra.mxu0 %v1055
    %2055 = vmatprep.subr.bf16.mxu0 %v1064
    %2056 = vmatpush1.bf16.msra.mxu0 %v1063
    %2057 = vmatprep.subr.bf16.mxu0 %v1072
    %2058 = vmatpush1.bf16.msra.mxu0 %v1071
    %2059 = vmatprep.subr.bf16.mxu0 %v1080
    %2060 = vmatpush1.bf16.msra.mxu0 %v1079
    %2061 = vmatprep.subr.bf16.mxu0 %v1088
    %2062 = vmatpush1.bf16.msra.mxu0 %v1087
    %2063 = vmatprep.subr.bf16.mxu0 %v1096
    %2064 = vmatpush1.bf16.msra.mxu0 %v1095
    %2065 = vmatprep.subr.bf16.mxu0 %v1104
    %2066 = vmatpush1.bf16.msra.mxu0 %v1103
    %2067 = vmatprep.subr.bf16.mxu0 %v1112
    %2068 = vmatpush1.bf16.msra.mxu0 %v1111
    %2069 = vmatprep.mubr.bf16.mxu0 %v658
    %2070 = vmatmul.mubr.bf16.gmra.mrb[0].mxu0 %v657
    %v2071 = vpop.f32.mrb[0].mxu0
    %v2072 = vadd.f32 0.0, %v2071
    %v2073 = vpop.f32.mrb[0].mxu0
    %v2074 = vadd.f32 0.0, %v2073
    %v2075 = vpop.f32.mrb[0].mxu0
    %v2076 = vpop.f32.mrb[0].mxu0
    %2077 = vdwg.mxu0
    %2078 = vmatprep.subr.bf16.mxu0 %v1120
    %2079 = vmatpush1.bf16.msra.mxu0 %v1119
    %2080 = vmatprep.subr.bf16.mxu0 %v1128
    %2081 = vmatpush1.bf16.msra.mxu0 %v1127
    %2082 = vmatprep.subr.bf16.mxu0 %v1136
    %2083 = vmatpush1.bf16.msra.mxu0 %v1135
    %2084 = vmatprep.subr.bf16.mxu0 %v1144
    %2085 = vmatpush1.bf16.msra.mxu0 %v1143
    %2086 = vmatprep.subr.bf16.mxu0 %v1152
    %2087 = vmatpush1.bf16.msra.mxu0 %v1151
    %2088 = vmatprep.subr.bf16.mxu0 %v1160
    %2089 = vmatpush1.bf16.msra.mxu0 %v1159
    %2090 = vmatprep.subr.bf16.mxu0 %v1168
    %2091 = vmatpush1.bf16.msra.mxu0 %v1167
    %2092 = vmatprep.subr.bf16.mxu0 %v1176
    %2093 = vmatpush1.bf16.msra.mxu0 %v1175
    %2094 = vmatprep.subr.bf16.mxu0 %v1184
    %2095 = vmatpush1.bf16.msra.mxu0 %v1183
    %2096 = vmatprep.subr.bf16.mxu0 %v1192
    %2097 = vmatpush1.bf16.msra.mxu0 %v1191
    %2098 = vmatprep.subr.bf16.mxu0 %v1200
    %2099 = vmatpush1.bf16.msra.mxu0 %v1199
    %2100 = vmatprep.subr.bf16.mxu0 %v1208
    %2101 = vmatpush1.bf16.msra.mxu0 %v1207
    %2102 = vmatprep.subr.bf16.mxu0 %v1216
    %2103 = vmatpush1.bf16.msra.mxu0 %v1215
    %2104 = vmatprep.subr.bf16.mxu0 %v1224
    %2105 = vmatpush1.bf16.msra.mxu0 %v1223
    %2106 = vmatprep.subr.bf16.mxu0 %v1232
    %2107 = vmatpush1.bf16.msra.mxu0 %v1231
    %2108 = vmatprep.subr.bf16.mxu0 %v1240
    %2109 = vmatpush1.bf16.msra.mxu0 %v1239
    %2110 = vmatprep.mubr.bf16.mxu0 %v660
    %2111 = vmatmul.mubr.bf16.gmra.mrb[0].mxu0 %v659
    %v2112 = vpop.f32.mrb[0].mxu0
    %v2113 = vadd.f32 %v2072, %v2112
    %v2114 = vpop.f32.mrb[0].mxu0
    %v2115 = vadd.f32 %v2074, %v2114
    %v2116 = vpop.f32.mrb[0].mxu0
    %v2117 = vpop.f32.mrb[0].mxu0
    %2118 = vdwg.mxu0
    %2119 = vmatprep.subr.bf16.mxu0 %v1248
    %2120 = vmatpush1.bf16.msra.mxu0 %v1247
    %2121 = vmatprep.subr.bf16.mxu0 %v1256
    %2122 = vmatpush1.bf16.msra.mxu0 %v1255
    %2123 = vmatprep.subr.bf16.mxu0 %v1264
    %2124 = vmatpush1.bf16.msra.mxu0 %v1263
    %2125 = vmatprep.subr.bf16.mxu0 %v1272
    %2126 = vmatpush1.bf16.msra.mxu0 %v1271
    %2127 = vmatprep.subr.bf16.mxu0 %v1280
    %2128 = vmatpush1.bf16.msra.mxu0 %v1279
    %2129 = vmatprep.subr.bf16.mxu0 %v1288
    %2130 = vmatpush1.bf16.msra.mxu0 %v1287
    %2131 = vmatprep.subr.bf16.mxu0 %v1296
    %2132 = vmatpush1.bf16.msra.mxu0 %v1295
    %2133 = vmatprep.subr.bf16.mxu0 %v1304
    %2134 = vmatpush1.bf16.msra.mxu0 %v1303
    %2135 = vmatprep.subr.bf16.mxu0 %v1312
    %2136 = vmatpush1.bf16.msra.mxu0 %v1311
    %2137 = vmatprep.subr.bf16.mxu0 %v1320
    %2138 = vmatpush1.bf16.msra.mxu0 %v1319
    %2139 = vmatprep.subr.bf16.mxu0 %v1328
    %2140 = vmatpush1.bf16.msra.mxu0 %v1327
    %2141 = vmatprep.subr.bf16.mxu0 %v1336
    %2142 = vmatpush1.bf16.msra.mxu0 %v1335
    %2143 = vmatprep.subr.bf16.mxu0 %v1344
    %2144 = vmatpush1.bf16.msra.mxu0 %v1343
    %2145 = vmatprep.subr.bf16.mxu0 %v1352
    %2146 = vmatpush1.bf16.msra.mxu0 %v1351
    %2147 = vmatprep.subr.bf16.mxu0 %v1360
    %2148 = vmatpush1.bf16.msra.mxu0 %v1359
    %2149 = vmatprep.subr.bf16.mxu0 %v1368
    %2150 = vmatpush1.bf16.msra.mxu0 %v1367
    %2151 = vmatprep.mubr.bf16.mxu0 %v662
    %2152 = vmatmul.mubr.bf16.gmra.mrb[0].mxu0 %v661
    %v2153 = vpop.f32.mrb[0].mxu0
    %v2154 = vadd.f32 %v2113, %v2153
    %v2155 = vpop.f32.mrb[0].mxu0
    %v2156 = vadd.f32 %v2115, %v2155
    %v2157 = vpop.f32.mrb[0].mxu0
    %v2158 = vpop.f32.mrb[0].mxu0
    %2159 = vdwg.mxu0
    %2160 = vmatprep.subr.bf16.mxu0 %v1376
    %2161 = vmatpush1.bf16.msra.mxu0 %v1375
    %2162 = vmatprep.subr.bf16.mxu0 %v1384
    %2163 = vmatpush1.bf16.msra.mxu0 %v1383
    %2164 = vmatprep.subr.bf16.mxu0 %v1392
    %2165 = vmatpush1.bf16.msra.mxu0 %v1391
    %2166 = vmatprep.subr.bf16.mxu0 %v1400
    %2167 = vmatpush1.bf16.msra.mxu0 %v1399
    %2168 = vmatprep.subr.bf16.mxu0 %v1408
    %2169 = vmatpush1.bf16.msra.mxu0 %v1407
    %2170 = vmatprep.subr.bf16.mxu0 %v1416
    %2171 = vmatpush1.bf16.msra.mxu0 %v1415
    %2172 = vmatprep.subr.bf16.mxu0 %v1424
    %2173 = vmatpush1.bf16.msra.mxu0 %v1423
    %2174 = vmatprep.subr.bf16.mxu0 %v1432
    %2175 = vmatpush1.bf16.msra.mxu0 %v1431
    %2176 = vmatprep.subr.bf16.mxu0 %v1440
    %2177 = vmatpush1.bf16.msra.mxu0 %v1439
    %2178 = vmatprep.subr.bf16.mxu0 %v1448
    %2179 = vmatpush1.bf16.msra.mxu0 %v1447
    %2180 = vmatprep.subr.bf16.mxu0 %v1456
    %2181 = vmatpush1.bf16.msra.mxu0 %v1455
    %2182 = vmatprep.subr.bf16.mxu0 %v1464
    %2183 = vmatpush1.bf16.msra.mxu0 %v1463
    %2184 = vmatprep.subr.bf16.mxu0 %v1472
    %2185 = vmatpush1.bf16.msra.mxu0 %v1471
    %2186 = vmatprep.subr.bf16.mxu0 %v1480
    %2187 = vmatpush1.bf16.msra.mxu0 %v1479
    %2188 = vmatprep.subr.bf16.mxu0 %v1488
    %2189 = vmatpush1.bf16.msra.mxu0 %v1487
    %2190 = vmatprep.subr.bf16.mxu0 %v1496
    %2191 = vmatpush1.bf16.msra.mxu0 %v1495
    %2192 = vmatprep.mubr.bf16.mxu0 %v664
    %2193 = vmatmul.mubr.bf16.gmra.mrb[0].mxu0 %v663
    %v2194 = vpop.f32.mrb[0].mxu0
    %v2195 = vadd.f32 %v2154, %v2194
    %v2196 = vpop.f32.mrb[0].mxu0
    %v2197 = vadd.f32 %v2156, %v2196
    %v2198 = vpop.f32.mrb[0].mxu0
    %v2199 = vpop.f32.mrb[0].mxu0
    %2200 = vdwg.mxu0
    %2201 = vmatprep.subr.bf16.mxu0 %v1504
    %2202 = vmatpush1.bf16.msra.mxu0 %v1503
    %2203 = vmatprep.subr.bf16.mxu0 %v1512
    %2204 = vmatpush1.bf16.msra.mxu0 %v1511
    %2205 = vmatprep.subr.bf16.mxu0 %v1520
    %2206 = vmatpush1.bf16.msra.mxu0 %v1519
    %2207 = vmatprep.subr.bf16.mxu0 %v1528
    %2208 = vmatpush1.bf16.msra.mxu0 %v1527
    %2209 = vmatprep.subr.bf16.mxu0 %v1536
    %2210 = vmatpush1.bf16.msra.mxu0 %v1535
    %2211 = vmatprep.subr.bf16.mxu0 %v1544
    %2212 = vmatpush1.bf16.msra.mxu0 %v1543
    %2213 = vmatprep.subr.bf16.mxu0 %v1552
    %2214 = vmatpush1.bf16.msra.mxu0 %v1551
    %2215 = vmatprep.subr.bf16.mxu0 %v1560
    %2216 = vmatpush1.bf16.msra.mxu0 %v1559
    %2217 = vmatprep.subr.bf16.mxu0 %v1568
    %2218 = vmatpush1.bf16.msra.mxu0 %v1567
    %2219 = vmatprep.subr.bf16.mxu0 %v1576
    %2220 = vmatpush1.bf16.msra.mxu0 %v1575
    %2221 = vmatprep.subr.bf16.mxu0 %v1584
    %2222 = vmatpush1.bf16.msra.mxu0 %v1583
    %2223 = vmatprep.subr.bf16.mxu0 %v1592
    %2224 = vmatpush1.bf16.msra.mxu0 %v1591
    %2225 = vmatprep.subr.bf16.mxu0 %v1600
    %2226 = vmatpush1.bf16.msra.mxu0 %v1599
    %2227 = vmatprep.subr.bf16.mxu0 %v1608
    %2228 = vmatpush1.bf16.msra.mxu0 %v1607
    %2229 = vmatprep.subr.bf16.mxu0 %v1616
    %2230 = vmatpush1.bf16.msra.mxu0 %v1615
    %2231 = vmatprep.subr.bf16.mxu0 %v1624
    %2232 = vmatpush1.bf16.msra.mxu0 %v1623
    %2233 = vmatprep.mubr.bf16.mxu0 %v666
    %2234 = vmatmul.mubr.bf16.gmra.mrb[0].mxu0 %v665
    %v2235 = vpop.f32.mrb[0].mxu0
    %v2236 = vadd.f32 %v2195, %v2235
    %v2237 = vpop.f32.mrb[0].mxu0
    %v2238 = vadd.f32 %v2197, %v2237
    %v2239 = vpop.f32.mrb[0].mxu0
    %v2240 = vpop.f32.mrb[0].mxu0
    %2241 = vdwg.mxu0
    %2242 = vmatprep.subr.bf16.mxu0 %v994
    %2243 = vmatpush1.bf16.msra.mxu0 %v993
    %2244 = vmatprep.subr.bf16.mxu0 %v1002
    %2245 = vmatpush1.bf16.msra.mxu0 %v1001
    %2246 = vmatprep.subr.bf16.mxu0 %v1010
    %2247 = vmatpush1.bf16.msra.mxu0 %v1009
    %2248 = vmatprep.subr.bf16.mxu0 %v1018
    %2249 = vmatpush1.bf16.msra.mxu0 %v1017
    %2250 = vmatprep.subr.bf16.mxu0 %v1026
    %2251 = vmatpush1.bf16.msra.mxu0 %v1025
    %2252 = vmatprep.subr.bf16.mxu0 %v1034
    %2253 = vmatpush1.bf16.msra.mxu0 %v1033
    %2254 = vmatprep.subr.bf16.mxu0 %v1042
    %2255 = vmatpush1.bf16.msra.mxu0 %v1041
    %2256 = vmatprep.subr.bf16.mxu0 %v1050
    %2257 = vmatpush1.bf16.msra.mxu0 %v1049
    %2258 = vmatprep.subr.bf16.mxu0 %v1058
    %2259 = vmatpush1.bf16.msra.mxu0 %v1057
    %2260 = vmatprep.subr.bf16.mxu0 %v1066
    %2261 = vmatpush1.bf16.msra.mxu0 %v1065
    %2262 = vmatprep.subr.bf16.mxu0 %v1074
    %2263 = vmatpush1.bf16.msra.mxu0 %v1073
    %2264 = vmatprep.subr.bf16.mxu0 %v1082
    %2265 = vmatpush1.bf16.msra.mxu0 %v1081
    %2266 = vmatprep.subr.bf16.mxu0 %v1090
    %2267 = vmatpush1.bf16.msra.mxu0 %v1089
    %2268 = vmatprep.subr.bf16.mxu0 %v1098
    %2269 = vmatpush1.bf16.msra.mxu0 %v1097
    %2270 = vmatprep.subr.bf16.mxu0 %v1106
    %2271 = vmatpush1.bf16.msra.mxu0 %v1105
    %2272 = vmatprep.subr.bf16.mxu0 %v1114
    %2273 = vmatpush1.bf16.msra.mxu0 %v1113
    %2274 = vmatprep.mubr.bf16.mxu0 %v658
    %2275 = vmatmul.mubr.bf16.gmra.mrb[0].mxu0 %v657
    %v2276 = vpop.f32.mrb[0].mxu0
    %v2277 = vadd.f32 0.0, %v2276
    %v2278 = vpop.f32.mrb[0].mxu0
    %v2279 = vadd.f32 0.0, %v2278
    %v2280 = vpop.f32.mrb[0].mxu0
    %v2281 = vpop.f32.mrb[0].mxu0
    %2282 = vdwg.mxu0
    %2283 = vmatprep.subr.bf16.mxu0 %v1122
    %2284 = vmatpush1.bf16.msra.mxu0 %v1121
    %2285 = vmatprep.subr.bf16.mxu0 %v1130
    %2286 = vmatpush1.bf16.msra.mxu0 %v1129
    %2287 = vmatprep.subr.bf16.mxu0 %v1138
    %2288 = vmatpush1.bf16.msra.mxu0 %v1137
    %2289 = vmatprep.subr.bf16.mxu0 %v1146
    %2290 = vmatpush1.bf16.msra.mxu0 %v1145
    %2291 = vmatprep.subr.bf16.mxu0 %v1154
    %2292 = vmatpush1.bf16.msra.mxu0 %v1153
    %2293 = vmatprep.subr.bf16.mxu0 %v1162
    %2294 = vmatpush1.bf16.msra.mxu0 %v1161
    %2295 = vmatprep.subr.bf16.mxu0 %v1170
    %2296 = vmatpush1.bf16.msra.mxu0 %v1169
    %2297 = vmatprep.subr.bf16.mxu0 %v1178
    %2298 = vmatpush1.bf16.msra.mxu0 %v1177
    %2299 = vmatprep.subr.bf16.mxu0 %v1186
    %2300 = vmatpush1.bf16.msra.mxu0 %v1185
    %2301 = vmatprep.subr.bf16.mxu0 %v1194
    %2302 = vmatpush1.bf16.msra.mxu0 %v1193
    %2303 = vmatprep.subr.bf16.mxu0 %v1202
    %2304 = vmatpush1.bf16.msra.mxu0 %v1201
    %2305 = vmatprep.subr.bf16.mxu0 %v1210
    %2306 = vmatpush1.bf16.msra.mxu0 %v1209
    %2307 = vmatprep.subr.bf16.mxu0 %v1218
    %2308 = vmatpush1.bf16.msra.mxu0 %v1217
    %2309 = vmatprep.subr.bf16.mxu0 %v1226
    %2310 = vmatpush1.bf16.msra.mxu0 %v1225
    %2311 = vmatprep.subr.bf16.mxu0 %v1234
    %2312 = vmatpush1.bf16.msra.mxu0 %v1233
    %2313 = vmatprep.subr.bf16.mxu0 %v1242
    %2314 = vmatpush1.bf16.msra.mxu0 %v1241
    %2315 = vmatprep.mubr.bf16.mxu0 %v660
    %2316 = vmatmul.mubr.bf16.gmra.mrb[0].mxu0 %v659
    %v2317 = vpop.f32.mrb[0].mxu0
    %v2318 = vadd.f32 %v2277, %v2317
    %v2319 = vpop.f32.mrb[0].mxu0
    %v2320 = vadd.f32 %v2279, %v2319
    %v2321 = vpop.f32.mrb[0].mxu0
    %v2322 = vpop.f32.mrb[0].mxu0
    %2323 = vdwg.mxu0
    %2324 = vmatprep.subr.bf16.mxu0 %v1250
    %2325 = vmatpush1.bf16.msra.mxu0 %v1249
    %2326 = vmatprep.subr.bf16.mxu0 %v1258
    %2327 = vmatpush1.bf16.msra.mxu0 %v1257
    %2328 = vmatprep.subr.bf16.mxu0 %v1266
    %2329 = vmatpush1.bf16.msra.mxu0 %v1265
    %2330 = vmatprep.subr.bf16.mxu0 %v1274
    %2331 = vmatpush1.bf16.msra.mxu0 %v1273
    %2332 = vmatprep.subr.bf16.mxu0 %v1282
    %2333 = vmatpush1.bf16.msra.mxu0 %v1281
    %2334 = vmatprep.subr.bf16.mxu0 %v1290
    %2335 = vmatpush1.bf16.msra.mxu0 %v1289
    %2336 = vmatprep.subr.bf16.mxu0 %v1298
    %2337 = vmatpush1.bf16.msra.mxu0 %v1297
    %2338 = vmatprep.subr.bf16.mxu0 %v1306
    %2339 = vmatpush1.bf16.msra.mxu0 %v1305
    %2340 = vmatprep.subr.bf16.mxu0 %v1314
    %2341 = vmatpush1.bf16.msra.mxu0 %v1313
    %2342 = vmatprep.subr.bf16.mxu0 %v1322
    %2343 = vmatpush1.bf16.msra.mxu0 %v1321
    %2344 = vmatprep.subr.bf16.mxu0 %v1330
    %2345 = vmatpush1.bf16.msra.mxu0 %v1329
    %2346 = vmatprep.subr.bf16.mxu0 %v1338
    %2347 = vmatpush1.bf16.msra.mxu0 %v1337
    %2348 = vmatprep.subr.bf16.mxu0 %v1346
    %2349 = vmatpush1.bf16.msra.mxu0 %v1345
    %2350 = vmatprep.subr.bf16.mxu0 %v1354
    %2351 = vmatpush1.bf16.msra.mxu0 %v1353
    %2352 = vmatprep.subr.bf16.mxu0 %v1362
    %2353 = vmatpush1.bf16.msra.mxu0 %v1361
    %2354 = vmatprep.subr.bf16.mxu0 %v1370
    %2355 = vmatpush1.bf16.msra.mxu0 %v1369
    %2356 = vmatprep.mubr.bf16.mxu0 %v662
    %2357 = vmatmul.mubr.bf16.gmra.mrb[0].mxu0 %v661
    %v2358 = vpop.f32.mrb[0].mxu0
    %v2359 = vadd.f32 %v2318, %v2358
    %v2360 = vpop.f32.mrb[0].mxu0
    %v2361 = vadd.f32 %v2320, %v2360
    %v2362 = vpop.f32.mrb[0].mxu0
    %v2363 = vpop.f32.mrb[0].mxu0
    %2364 = vdwg.mxu0
    %2365 = vmatprep.subr.bf16.mxu0 %v1378
    %2366 = vmatpush1.bf16.msra.mxu0 %v1377
    %2367 = vmatprep.subr.bf16.mxu0 %v1386
    %2368 = vmatpush1.bf16.msra.mxu0 %v1385
    %2369 = vmatprep.subr.bf16.mxu0 %v1394
    %2370 = vmatpush1.bf16.msra.mxu0 %v1393
    %2371 = vmatprep.subr.bf16.mxu0 %v1402
    %2372 = vmatpush1.bf16.msra.mxu0 %v1401
    %2373 = vmatprep.subr.bf16.mxu0 %v1410
    %2374 = vmatpush1.bf16.msra.mxu0 %v1409
    %2375 = vmatprep.subr.bf16.mxu0 %v1418
    %2376 = vmatpush1.bf16.msra.mxu0 %v1417
    %2377 = vmatprep.subr.bf16.mxu0 %v1426
    %2378 = vmatpush1.bf16.msra.mxu0 %v1425
    %2379 = vmatprep.subr.bf16.mxu0 %v1434
    %2380 = vmatpush1.bf16.msra.mxu0 %v1433
    %2381 = vmatprep.subr.bf16.mxu0 %v1442
    %2382 = vmatpush1.bf16.msra.mxu0 %v1441
    %2383 = vmatprep.subr.bf16.mxu0 %v1450
    %2384 = vmatpush1.bf16.msra.mxu0 %v1449
    %2385 = vmatprep.subr.bf16.mxu0 %v1458
    %2386 = vmatpush1.bf16.msra.mxu0 %v1457
    %2387 = vmatprep.subr.bf16.mxu0 %v1466
    %2388 = vmatpush1.bf16.msra.mxu0 %v1465
    %2389 = vmatprep.subr.bf16.mxu0 %v1474
    %2390 = vmatpush1.bf16.msra.mxu0 %v1473
    %2391 = vmatprep.subr.bf16.mxu0 %v1482
    %2392 = vmatpush1.bf16.msra.mxu0 %v1481
    %2393 = vmatprep.subr.bf16.mxu0 %v1490
    %2394 = vmatpush1.bf16.msra.mxu0 %v1489
    %2395 = vmatprep.subr.bf16.mxu0 %v1498
    %2396 = vmatpush1.bf16.msra.mxu0 %v1497
    %2397 = vmatprep.mubr.bf16.mxu0 %v664
    %2398 = vmatmul.mubr.bf16.gmra.mrb[0].mxu0 %v663
    %v2399 = vpop.f32.mrb[0].mxu0
    %v2400 = vadd.f32 %v2359, %v2399
    %v2401 = vpop.f32.mrb[0].mxu0
    %v2402 = vadd.f32 %v2361, %v2401
    %v2403 = vpop.f32.mrb[0].mxu0
    %v2404 = vpop.f32.mrb[0].mxu0
    %2405 = vdwg.mxu0
    %2406 = vmatprep.subr.bf16.mxu0 %v1506
    %2407 = vmatpush1.bf16.msra.mxu0 %v1505
    %2408 = vmatprep.subr.bf16.mxu0 %v1514
    %2409 = vmatpush1.bf16.msra.mxu0 %v1513
    %2410 = vmatprep.subr.bf16.mxu0 %v1522
    %2411 = vmatpush1.bf16.msra.mxu0 %v1521
    %2412 = vmatprep.subr.bf16.mxu0 %v1530
    %2413 = vmatpush1.bf16.msra.mxu0 %v1529
    %2414 = vmatprep.subr.bf16.mxu0 %v1538
    %2415 = vmatpush1.bf16.msra.mxu0 %v1537
    %2416 = vmatprep.subr.bf16.mxu0 %v1546
    %2417 = vmatpush1.bf16.msra.mxu0 %v1545
    %2418 = vmatprep.subr.bf16.mxu0 %v1554
    %2419 = vmatpush1.bf16.msra.mxu0 %v1553
    %2420 = vmatprep.subr.bf16.mxu0 %v1562
    %2421 = vmatpush1.bf16.msra.mxu0 %v1561
    %2422 = vmatprep.subr.bf16.mxu0 %v1570
    %2423 = vmatpush1.bf16.msra.mxu0 %v1569
    %2424 = vmatprep.subr.bf16.mxu0 %v1578
    %2425 = vmatpush1.bf16.msra.mxu0 %v1577
    %2426 = vmatprep.subr.bf16.mxu0 %v1586
    %2427 = vmatpush1.bf16.msra.mxu0 %v1585
    %2428 = vmatprep.subr.bf16.mxu0 %v1594
    %2429 = vmatpush1.bf16.msra.mxu0 %v1593
    %2430 = vmatprep.subr.bf16.mxu0 %v1602
    %2431 = vmatpush1.bf16.msra.mxu0 %v1601
    %2432 = vmatprep.subr.bf16.mxu0 %v1610
    %2433 = vmatpush1.bf16.msra.mxu0 %v1609
    %2434 = vmatprep.subr.bf16.mxu0 %v1618
    %2435 = vmatpush1.bf16.msra.mxu0 %v1617
    %2436 = vmatprep.subr.bf16.mxu0 %v1626
    %2437 = vmatpush1.bf16.msra.mxu0 %v1625
    %2438 = vmatprep.mubr.bf16.mxu0 %v666
    %2439 = vmatmul.mubr.bf16.gmra.mrb[0].mxu0 %v665
    %v2440 = vpop.f32.mrb[0].mxu0
    %v2441 = vadd.f32 %v2400, %v2440
    %v2442 = vpop.f32.mrb[0].mxu0
    %v2443 = vadd.f32 %v2402, %v2442
    %v2444 = vpop.f32.mrb[0].mxu0
    %v2445 = vpop.f32.mrb[0].mxu0
    %2446 = vdwg.mxu0
    %v2447 = vld [vmem:[#allocation11] sm:$0xff]
    %v2449 = vlaneseq
    %v2450 = vshrl.u32 %v2449, 7
    %v2451 = vsub.s32 0, %v2450
    %v2452 = vrot.slane %v2447, %v2451
    %v2453 = vlaneseq
    %v2454 = vshrl.u32 %v2453, 7
    %v2455 = vsub.s32 1, %v2454
    %v2456 = vrot.slane %v2447, %v2455
    %v2457 = vlaneseq
    %v2458 = vshrl.u32 %v2457, 7
    %v2459 = vsub.s32 2, %v2458
    %v2460 = vrot.slane %v2447, %v2459
    %v2461 = vlaneseq
    %v2462 = vshrl.u32 %v2461, 7
    %v2463 = vsub.s32 3, %v2462
    %v2464 = vrot.slane %v2447, %v2463
    %v2465 = vlaneseq
    %v2466 = vshrl.u32 %v2465, 7
    %v2467 = vsub.s32 4, %v2466
    %v2468 = vrot.slane %v2447, %v2467
    %v2469 = vlaneseq
    %v2470 = vshrl.u32 %v2469, 7
    %v2471 = vsub.s32 5, %v2470
    %v2472 = vrot.slane %v2447, %v2471
    %v2473 = vlaneseq
    %v2474 = vshrl.u32 %v2473, 7
    %v2475 = vsub.s32 6, %v2474
    %v2476 = vrot.slane %v2447, %v2475
    %v2477 = vlaneseq
    %v2478 = vshrl.u32 %v2477, 7
    %v2479 = vsub.s32 7, %v2478
    %v2480 = vrot.slane %v2447, %v2479
    %v2489 = vmul.f32 %v1826, %v2452
    %v2490 = vmul.f32 %v1828, %v2456
    %v2491 = vmul.f32 %v2031, %v2460
    %v2492 = vmul.f32 %v2033, %v2464
    %v2493 = vmul.f32 %v2236, %v2468
    %v2494 = vmul.f32 %v2238, %v2472
    %v2495 = vmul.f32 %v2441, %v2476
    %v2496 = vmul.f32 %v2443, %v2480
    %v2497 = vld [vmem:[#allocation13] sm:$0xff]
    %v2499 = vlaneseq
    %v2500 = vshrl.u32 %v2499, 7
    %v2501 = vsub.s32 0, %v2500
    %v2502 = vrot.slane %v2497, %v2501
    %v2503 = vlaneseq
    %v2504 = vshrl.u32 %v2503, 7
    %v2505 = vsub.s32 1, %v2504
    %v2506 = vrot.slane %v2497, %v2505
    %v2507 = vlaneseq
    %v2508 = vshrl.u32 %v2507, 7
    %v2509 = vsub.s32 2, %v2508
    %v2510 = vrot.slane %v2497, %v2509
    %v2511 = vlaneseq
    %v2512 = vshrl.u32 %v2511, 7
    %v2513 = vsub.s32 3, %v2512
    %v2514 = vrot.slane %v2497, %v2513
    %v2515 = vlaneseq
    %v2516 = vshrl.u32 %v2515, 7
    %v2517 = vsub.s32 4, %v2516
    %v2518 = vrot.slane %v2497, %v2517
    %v2519 = vlaneseq
    %v2520 = vshrl.u32 %v2519, 7
    %v2521 = vsub.s32 5, %v2520
    %v2522 = vrot.slane %v2497, %v2521
    %v2523 = vlaneseq
    %v2524 = vshrl.u32 %v2523, 7
    %v2525 = vsub.s32 6, %v2524
    %v2526 = vrot.slane %v2497, %v2525
    %v2527 = vlaneseq
    %v2528 = vshrl.u32 %v2527, 7
    %v2529 = vsub.s32 7, %v2528
    %v2530 = vrot.slane %v2497, %v2529
    %v2539 = vadd.f32 %v2489, %v2502
    %v2540 = vadd.f32 %v2490, %v2506
    %v2541 = vadd.f32 %v2491, %v2510
    %v2542 = vadd.f32 %v2492, %v2514
    %v2543 = vadd.f32 %v2493, %v2518
    %v2544 = vadd.f32 %v2494, %v2522
    %v2545 = vadd.f32 %v2495, %v2526
    %v2546 = vadd.f32 %v2496, %v2530
    %v2547 = vmax.f32 %v2539, 0.0
    %v2548 = vmax.f32 %v2540, 0.0
    %v2549 = vmax.f32 %v2541, 0.0
    %v2550 = vmax.f32 %v2542, 0.0
    %v2551 = vmax.f32 %v2543, 0.0
    %v2552 = vmax.f32 %v2544, 0.0
    %v2553 = vmax.f32 %v2545, 0.0
    %v2554 = vmax.f32 %v2546, 0.0
    %v2555 = vpack.c.bf16 %v2547, %v2547
    %v2556 = vpack.c.bf16 %v2548, %v2548
    %v2557 = vpack.c.bf16 %v2549, %v2549
    %v2558 = vpack.c.bf16 %v2550, %v2550
    %v2559 = vpack.c.bf16 %v2551, %v2551
    %v2560 = vpack.c.bf16 %v2552, %v2552
    %v2561 = vpack.c.bf16 %v2553, %v2553
    %v2562 = vpack.c.bf16 %v2554, %v2554
    %v2563 = vld [vmem:[#allocation14] sm:$0xff]
    %v2564 = vld [vmem:[#allocation14 + $0x8] sm:$0xff]
    %v2565 = vld [vmem:[#allocation14 + $0x10] sm:$0xff]
    %v2566 = vld [vmem:[#allocation14 + $0x18] sm:$0xff]
    %v2567 = vld [vmem:[#allocation14 + $0x20] sm:$0xff]
    %v2568 = vld [vmem:[#allocation14 + $0x28] sm:$0xff]
    %v2569 = vld [vmem:[#allocation14 + $0x30] sm:$0xff]
    %v2570 = vld [vmem:[#allocation14 + $0x38] sm:$0xff]
    %v2571 = vld [vmem:[#allocation14 + $0x40] sm:$0xff]
    %v2572 = vld [vmem:[#allocation14 + $0x48] sm:$0xff]
    %v2573 = vld [vmem:[#allocation14 + $0x50] sm:$0xff]
    %v2574 = vld [vmem:[#allocation14 + $0x58] sm:$0xff]
    %v2575 = vld [vmem:[#allocation14 + $0x60] sm:$0xff]
    %v2576 = vld [vmem:[#allocation14 + $0x68] sm:$0xff]
    %v2577 = vld [vmem:[#allocation14 + $0x70] sm:$0xff]
    %v2578 = vld [vmem:[#allocation14 + $0x78] sm:$0xff]
    %v2579 = vld [vmem:[#allocation14 + $0x80] sm:$0xff]
    %v2580 = vld [vmem:[#allocation14 + $0x88] sm:$0xff]
    %v2581 = vld [vmem:[#allocation14 + $0x90] sm:$0xff]
    %v2582 = vld [vmem:[#allocation14 + $0x98] sm:$0xff]
    %v2583 = vld [vmem:[#allocation14 + $0xa0] sm:$0xff]
    %v2584 = vld [vmem:[#allocation14 + $0xa8] sm:$0xff]
    %v2585 = vld [vmem:[#allocation14 + $0xb0] sm:$0xff]
    %v2586 = vld [vmem:[#allocation14 + $0xb8] sm:$0xff]
    %v2587 = vld [vmem:[#allocation14 + $0xc0] sm:$0xff]
    %v2588 = vld [vmem:[#allocation14 + $0xc8] sm:$0xff]
    %v2589 = vld [vmem:[#allocation14 + $0xd0] sm:$0xff]
    %v2590 = vld [vmem:[#allocation14 + $0xd8] sm:$0xff]
    %v2591 = vld [vmem:[#allocation14 + $0xe0] sm:$0xff]
    %v2592 = vld [vmem:[#allocation14 + $0xe8] sm:$0xff]
    %v2593 = vld [vmem:[#allocation14 + $0xf0] sm:$0xff]
    %v2594 = vld [vmem:[#allocation14 + $0xf8] sm:$0xff]
    %v2595 = vld [vmem:[#allocation14 + $0x100] sm:$0xff]
    %v2596 = vld [vmem:[#allocation14 + $0x108] sm:$0xff]
    %v2597 = vld [vmem:[#allocation14 + $0x110] sm:$0xff]
    %v2598 = vld [vmem:[#allocation14 + $0x118] sm:$0xff]
    %v2599 = vld [vmem:[#allocation14 + $0x120] sm:$0xff]
    %v2600 = vld [vmem:[#allocation14 + $0x128] sm:$0xff]
    %v2601 = vld [vmem:[#allocation14 + $0x130] sm:$0xff]
    %v2602 = vld [vmem:[#allocation14 + $0x138] sm:$0xff]
    %v2603 = vld [vmem:[#allocation14 + $0x140] sm:$0xff]
    %v2604 = vld [vmem:[#allocation14 + $0x148] sm:$0xff]
    %v2605 = vld [vmem:[#allocation14 + $0x150] sm:$0xff]
    %v2606 = vld [vmem:[#allocation14 + $0x158] sm:$0xff]
    %v2607 = vld [vmem:[#allocation14 + $0x160] sm:$0xff]
    %v2608 = vld [vmem:[#allocation14 + $0x168] sm:$0xff]
    %v2609 = vld [vmem:[#allocation14 + $0x170] sm:$0xff]
    %v2610 = vld [vmem:[#allocation14 + $0x178] sm:$0xff]
    %v2611 = vld [vmem:[#allocation14 + $0x180] sm:$0xff]
    %v2612 = vld [vmem:[#allocation14 + $0x188] sm:$0xff]
    %v2613 = vld [vmem:[#allocation14 + $0x190] sm:$0xff]
    %v2614 = vld [vmem:[#allocation14 + $0x198] sm:$0xff]
    %v2615 = vld [vmem:[#allocation14 + $0x1a0] sm:$0xff]
    %v2616 = vld [vmem:[#allocation14 + $0x1a8] sm:$0xff]
    %v2617 = vld [vmem:[#allocation14 + $0x1b0] sm:$0xff]
    %v2618 = vld [vmem:[#allocation14 + $0x1b8] sm:$0xff]
    %v2619 = vld [vmem:[#allocation14 + $0x1c0] sm:$0xff]
    %v2620 = vld [vmem:[#allocation14 + $0x1c8] sm:$0xff]
    %v2621 = vld [vmem:[#allocation14 + $0x1d0] sm:$0xff]
    %v2622 = vld [vmem:[#allocation14 + $0x1d8] sm:$0xff]
    %v2623 = vld [vmem:[#allocation14 + $0x1e0] sm:$0xff]
    %v2624 = vld [vmem:[#allocation14 + $0x1e8] sm:$0xff]
    %v2625 = vld [vmem:[#allocation14 + $0x1f0] sm:$0xff]
    %v2626 = vld [vmem:[#allocation14 + $0x1f8] sm:$0xff]
    %v2627 = vld [vmem:[#allocation14 + $0x200] sm:$0xff]
    %v2628 = vld [vmem:[#allocation14 + $0x208] sm:$0xff]
    %v2629 = vld [vmem:[#allocation14 + $0x210] sm:$0xff]
    %v2630 = vld [vmem:[#allocation14 + $0x218] sm:$0xff]
    %v2631 = vld [vmem:[#allocation14 + $0x220] sm:$0xff]
    %v2632 = vld [vmem:[#allocation14 + $0x228] sm:$0xff]
    %v2633 = vld [vmem:[#allocation14 + $0x230] sm:$0xff]
    %v2634 = vld [vmem:[#allocation14 + $0x238] sm:$0xff]
    %v2635 = vld [vmem:[#allocation14 + $0x240] sm:$0xff]
    %v2636 = vld [vmem:[#allocation14 + $0x248] sm:$0xff]
    %v2637 = vld [vmem:[#allocation14 + $0x250] sm:$0xff]
    %v2638 = vld [vmem:[#allocation14 + $0x258] sm:$0xff]
    %v2639 = vld [vmem:[#allocation14 + $0x260] sm:$0xff]
    %v2640 = vld [vmem:[#allocation14 + $0x268] sm:$0xff]
    %v2641 = vld [vmem:[#allocation14 + $0x270] sm:$0xff]
    %v2642 = vld [vmem:[#allocation14 + $0x278] sm:$0xff]
    %v2643 = vld [vmem:[#allocation14 + $0x280] sm:$0xff]
    %v2644 = vld [vmem:[#allocation14 + $0x288] sm:$0xff]
    %v2645 = vld [vmem:[#allocation14 + $0x290] sm:$0xff]
    %v2646 = vld [vmem:[#allocation14 + $0x298] sm:$0xff]
    %v2647 = vld [vmem:[#allocation14 + $0x2a0] sm:$0xff]
    %v2648 = vld [vmem:[#allocation14 + $0x2a8] sm:$0xff]
    %v2649 = vld [vmem:[#allocation14 + $0x2b0] sm:$0xff]
    %v2650 = vld [vmem:[#allocation14 + $0x2b8] sm:$0xff]
    %v2651 = vld [vmem:[#allocation14 + $0x2c0] sm:$0xff]
    %v2652 = vld [vmem:[#allocation14 + $0x2c8] sm:$0xff]
    %v2653 = vld [vmem:[#allocation14 + $0x2d0] sm:$0xff]
    %v2654 = vld [vmem:[#allocation14 + $0x2d8] sm:$0xff]
    %v2655 = vld [vmem:[#allocation14 + $0x2e0] sm:$0xff]
    %v2656 = vld [vmem:[#allocation14 + $0x2e8] sm:$0xff]
    %v2657 = vld [vmem:[#allocation14 + $0x2f0] sm:$0xff]
    %v2658 = vld [vmem:[#allocation14 + $0x2f8] sm:$0xff]
    %v2659 = vld [vmem:[#allocation14 + $0x300] sm:$0xff]
    %v2660 = vld [vmem:[#allocation14 + $0x308] sm:$0xff]
    %v2661 = vld [vmem:[#allocation14 + $0x310] sm:$0xff]
    %v2662 = vld [vmem:[#allocation14 + $0x318] sm:$0xff]
    %v2663 = vld [vmem:[#allocation14 + $0x320] sm:$0xff]
    %v2664 = vld [vmem:[#allocation14 + $0x328] sm:$0xff]
    %v2665 = vld [vmem:[#allocation14 + $0x330] sm:$0xff]
    %v2666 = vld [vmem:[#allocation14 + $0x338] sm:$0xff]
    %v2667 = vld [vmem:[#allocation14 + $0x340] sm:$0xff]
    %v2668 = vld [vmem:[#allocation14 + $0x348] sm:$0xff]
    %v2669 = vld [vmem:[#allocation14 + $0x350] sm:$0xff]
    %v2670 = vld [vmem:[#allocation14 + $0x358] sm:$0xff]
    %v2671 = vld [vmem:[#allocation14 + $0x360] sm:$0xff]
    %v2672 = vld [vmem:[#allocation14 + $0x368] sm:$0xff]
    %v2673 = vld [vmem:[#allocation14 + $0x370] sm:$0xff]
    %v2674 = vld [vmem:[#allocation14 + $0x378] sm:$0xff]
    %v2675 = vld [vmem:[#allocation14 + $0x380] sm:$0xff]
    %v2676 = vld [vmem:[#allocation14 + $0x388] sm:$0xff]
    %v2677 = vld [vmem:[#allocation14 + $0x390] sm:$0xff]
    %v2678 = vld [vmem:[#allocation14 + $0x398] sm:$0xff]
    %v2679 = vld [vmem:[#allocation14 + $0x3a0] sm:$0xff]
    %v2680 = vld [vmem:[#allocation14 + $0x3a8] sm:$0xff]
    %v2681 = vld [vmem:[#allocation14 + $0x3b0] sm:$0xff]
    %v2682 = vld [vmem:[#allocation14 + $0x3b8] sm:$0xff]
    %v2683 = vld [vmem:[#allocation14 + $0x3c0] sm:$0xff]
    %v2684 = vld [vmem:[#allocation14 + $0x3c8] sm:$0xff]
    %v2685 = vld [vmem:[#allocation14 + $0x3d0] sm:$0xff]
    %v2686 = vld [vmem:[#allocation14 + $0x3d8] sm:$0xff]
    %v2687 = vld [vmem:[#allocation14 + $0x3e0] sm:$0xff]
    %v2688 = vld [vmem:[#allocation14 + $0x3e8] sm:$0xff]
    %v2689 = vld [vmem:[#allocation14 + $0x3f0] sm:$0xff]
    %v2690 = vld [vmem:[#allocation14 + $0x3f8] sm:$0xff]
    %v2691 = vld [vmem:[#allocation14 + $0x400] sm:$0xff]
    %v2692 = vld [vmem:[#allocation14 + $0x408] sm:$0xff]
    %v2693 = vld [vmem:[#allocation14 + $0x410] sm:$0xff]
    %v2694 = vld [vmem:[#allocation14 + $0x418] sm:$0xff]
    %v2695 = vld [vmem:[#allocation14 + $0x420] sm:$0xff]
    %v2696 = vld [vmem:[#allocation14 + $0x428] sm:$0xff]
    %v2697 = vld [vmem:[#allocation14 + $0x430] sm:$0xff]
    %v2698 = vld [vmem:[#allocation14 + $0x438] sm:$0xff]
    %v2699 = vld [vmem:[#allocation14 + $0x440] sm:$0xff]
    %v2700 = vld [vmem:[#allocation14 + $0x448] sm:$0xff]
    %v2701 = vld [vmem:[#allocation14 + $0x450] sm:$0xff]
    %v2702 = vld [vmem:[#allocation14 + $0x458] sm:$0xff]
    %v2703 = vld [vmem:[#allocation14 + $0x460] sm:$0xff]
    %v2704 = vld [vmem:[#allocation14 + $0x468] sm:$0xff]
    %v2705 = vld [vmem:[#allocation14 + $0x470] sm:$0xff]
    %v2706 = vld [vmem:[#allocation14 + $0x478] sm:$0xff]
    %v2707 = vld [vmem:[#allocation14 + $0x480] sm:$0xff]
    %v2708 = vld [vmem:[#allocation14 + $0x488] sm:$0xff]
    %v2709 = vld [vmem:[#allocation14 + $0x490] sm:$0xff]
    %v2710 = vld [vmem:[#allocation14 + $0x498] sm:$0xff]
    %v2711 = vld [vmem:[#allocation14 + $0x4a0] sm:$0xff]
    %v2712 = vld [vmem:[#allocation14 + $0x4a8] sm:$0xff]
    %v2713 = vld [vmem:[#allocation14 + $0x4b0] sm:$0xff]
    %v2714 = vld [vmem:[#allocation14 + $0x4b8] sm:$0xff]
    %v2715 = vld [vmem:[#allocation14 + $0x4c0] sm:$0xff]
    %v2716 = vld [vmem:[#allocation14 + $0x4c8] sm:$0xff]
    %v2717 = vld [vmem:[#allocation14 + $0x4d0] sm:$0xff]
    %v2718 = vld [vmem:[#allocation14 + $0x4d8] sm:$0xff]
    %v2719 = vld [vmem:[#allocation14 + $0x4e0] sm:$0xff]
    %v2720 = vld [vmem:[#allocation14 + $0x4e8] sm:$0xff]
    %v2721 = vld [vmem:[#allocation14 + $0x4f0] sm:$0xff]
    %v2722 = vld [vmem:[#allocation14 + $0x4f8] sm:$0xff]
    %v2723 = vunpack.c.l.s8.bf16 %v2563
    %v2724 = vunpack.c.l.s8.bf16 %v2564
    %v2725 = vunpack.c.l.s8.bf16 %v2565
    %v2726 = vunpack.c.l.s8.bf16 %v2566
    %v2727 = vunpack.c.l.s8.bf16 %v2567
    %v2728 = vunpack.c.h.s8.bf16 %v2563
    %v2729 = vunpack.c.h.s8.bf16 %v2564
    %v2730 = vunpack.c.h.s8.bf16 %v2565
    %v2731 = vunpack.c.h.s8.bf16 %v2566
    %v2732 = vunpack.c.h.s8.bf16 %v2567
    %v2733 = vunpack.c.l.s8.bf16 %v2568
    %v2734 = vunpack.c.l.s8.bf16 %v2569
    %v2735 = vunpack.c.l.s8.bf16 %v2570
    %v2736 = vunpack.c.l.s8.bf16 %v2571
    %v2737 = vunpack.c.l.s8.bf16 %v2572
    %v2738 = vunpack.c.h.s8.bf16 %v2568
    %v2739 = vunpack.c.h.s8.bf16 %v2569
    %v2740 = vunpack.c.h.s8.bf16 %v2570
    %v2741 = vunpack.c.h.s8.bf16 %v2571
    %v2742 = vunpack.c.h.s8.bf16 %v2572
    %v2743 = vunpack.c.l.s8.bf16 %v2573
    %v2744 = vunpack.c.l.s8.bf16 %v2574
    %v2745 = vunpack.c.l.s8.bf16 %v2575
    %v2746 = vunpack.c.l.s8.bf16 %v2576
    %v2747 = vunpack.c.l.s8.bf16 %v2577
    %v2748 = vunpack.c.h.s8.bf16 %v2573
    %v2749 = vunpack.c.h.s8.bf16 %v2574
    %v2750 = vunpack.c.h.s8.bf16 %v2575
    %v2751 = vunpack.c.h.s8.bf16 %v2576
    %v2752 = vunpack.c.h.s8.bf16 %v2577
    %v2753 = vunpack.c.l.s8.bf16 %v2578
    %v2754 = vunpack.c.l.s8.bf16 %v2579
    %v2755 = vunpack.c.l.s8.bf16 %v2580
    %v2756 = vunpack.c.l.s8.bf16 %v2581
    %v2757 = vunpack.c.l.s8.bf16 %v2582
    %v2758 = vunpack.c.h.s8.bf16 %v2578
    %v2759 = vunpack.c.h.s8.bf16 %v2579
    %v2760 = vunpack.c.h.s8.bf16 %v2580
    %v2761 = vunpack.c.h.s8.bf16 %v2581
    %v2762 = vunpack.c.h.s8.bf16 %v2582
    %v2763 = vunpack.c.l.s8.bf16 %v2583
    %v2764 = vunpack.c.l.s8.bf16 %v2584
    %v2765 = vunpack.c.l.s8.bf16 %v2585
    %v2766 = vunpack.c.l.s8.bf16 %v2586
    %v2767 = vunpack.c.l.s8.bf16 %v2587
    %v2768 = vunpack.c.h.s8.bf16 %v2583
    %v2769 = vunpack.c.h.s8.bf16 %v2584
    %v2770 = vunpack.c.h.s8.bf16 %v2585
    %v2771 = vunpack.c.h.s8.bf16 %v2586
    %v2772 = vunpack.c.h.s8.bf16 %v2587
    %v2773 = vunpack.c.l.s8.bf16 %v2588
    %v2774 = vunpack.c.l.s8.bf16 %v2589
    %v2775 = vunpack.c.l.s8.bf16 %v2590
    %v2776 = vunpack.c.l.s8.bf16 %v2591
    %v2777 = vunpack.c.l.s8.bf16 %v2592
    %v2778 = vunpack.c.h.s8.bf16 %v2588
    %v2779 = vunpack.c.h.s8.bf16 %v2589
    %v2780 = vunpack.c.h.s8.bf16 %v2590
    %v2781 = vunpack.c.h.s8.bf16 %v2591
    %v2782 = vunpack.c.h.s8.bf16 %v2592
    %v2783 = vunpack.c.l.s8.bf16 %v2593
    %v2784 = vunpack.c.l.s8.bf16 %v2594
    %v2785 = vunpack.c.l.s8.bf16 %v2595
    %v2786 = vunpack.c.l.s8.bf16 %v2596
    %v2787 = vunpack.c.l.s8.bf16 %v2597
    %v2788 = vunpack.c.h.s8.bf16 %v2593
    %v2789 = vunpack.c.h.s8.bf16 %v2594
    %v2790 = vunpack.c.h.s8.bf16 %v2595
    %v2791 = vunpack.c.h.s8.bf16 %v2596
    %v2792 = vunpack.c.h.s8.bf16 %v2597
    %v2793 = vunpack.c.l.s8.bf16 %v2598
    %v2794 = vunpack.c.l.s8.bf16 %v2599
    %v2795 = vunpack.c.l.s8.bf16 %v2600
    %v2796 = vunpack.c.l.s8.bf16 %v2601
    %v2797 = vunpack.c.l.s8.bf16 %v2602
    %v2798 = vunpack.c.h.s8.bf16 %v2598
    %v2799 = vunpack.c.h.s8.bf16 %v2599
    %v2800 = vunpack.c.h.s8.bf16 %v2600
    %v2801 = vunpack.c.h.s8.bf16 %v2601
    %v2802 = vunpack.c.h.s8.bf16 %v2602
    %v2803 = vunpack.c.l.s8.bf16 %v2603
    %v2804 = vunpack.c.l.s8.bf16 %v2604
    %v2805 = vunpack.c.l.s8.bf16 %v2605
    %v2806 = vunpack.c.l.s8.bf16 %v2606
    %v2807 = vunpack.c.l.s8.bf16 %v2607
    %v2808 = vunpack.c.h.s8.bf16 %v2603
    %v2809 = vunpack.c.h.s8.bf16 %v2604
    %v2810 = vunpack.c.h.s8.bf16 %v2605
    %v2811 = vunpack.c.h.s8.bf16 %v2606
    %v2812 = vunpack.c.h.s8.bf16 %v2607
    %v2813 = vunpack.c.l.s8.bf16 %v2608
    %v2814 = vunpack.c.l.s8.bf16 %v2609
    %v2815 = vunpack.c.l.s8.bf16 %v2610
    %v2816 = vunpack.c.l.s8.bf16 %v2611
    %v2817 = vunpack.c.l.s8.bf16 %v2612
    %v2818 = vunpack.c.h.s8.bf16 %v2608
    %v2819 = vunpack.c.h.s8.bf16 %v2609
    %v2820 = vunpack.c.h.s8.bf16 %v2610
    %v2821 = vunpack.c.h.s8.bf16 %v2611
    %v2822 = vunpack.c.h.s8.bf16 %v2612
    %v2823 = vunpack.c.l.s8.bf16 %v2613
    %v2824 = vunpack.c.l.s8.bf16 %v2614
    %v2825 = vunpack.c.l.s8.bf16 %v2615
    %v2826 = vunpack.c.l.s8.bf16 %v2616
    %v2827 = vunpack.c.l.s8.bf16 %v2617
    %v2828 = vunpack.c.h.s8.bf16 %v2613
    %v2829 = vunpack.c.h.s8.bf16 %v2614
    %v2830 = vunpack.c.h.s8.bf16 %v2615
    %v2831 = vunpack.c.h.s8.bf16 %v2616
    %v2832 = vunpack.c.h.s8.bf16 %v2617
    %v2833 = vunpack.c.l.s8.bf16 %v2618
    %v2834 = vunpack.c.l.s8.bf16 %v2619
    %v2835 = vunpack.c.l.s8.bf16 %v2620
    %v2836 = vunpack.c.l.s8.bf16 %v2621
    %v2837 = vunpack.c.l.s8.bf16 %v2622
    %v2838 = vunpack.c.h.s8.bf16 %v2618
    %v2839 = vunpack.c.h.s8.bf16 %v2619
    %v2840 = vunpack.c.h.s8.bf16 %v2620
    %v2841 = vunpack.c.h.s8.bf16 %v2621
    %v2842 = vunpack.c.h.s8.bf16 %v2622
    %v2843 = vunpack.c.l.s8.bf16 %v2623
    %v2844 = vunpack.c.l.s8.bf16 %v2624
    %v2845 = vunpack.c.l.s8.bf16 %v2625
    %v2846 = vunpack.c.l.s8.bf16 %v2626
    %v2847 = vunpack.c.l.s8.bf16 %v2627
    %v2848 = vunpack.c.h.s8.bf16 %v2623
    %v2849 = vunpack.c.h.s8.bf16 %v2624
    %v2850 = vunpack.c.h.s8.bf16 %v2625
    %v2851 = vunpack.c.h.s8.bf16 %v2626
    %v2852 = vunpack.c.h.s8.bf16 %v2627
    %v2853 = vunpack.c.l.s8.bf16 %v2628
    %v2854 = vunpack.c.l.s8.bf16 %v2629
    %v2855 = vunpack.c.l.s8.bf16 %v2630
    %v2856 = vunpack.c.l.s8.bf16 %v2631
    %v2857 = vunpack.c.l.s8.bf16 %v2632
    %v2858 = vunpack.c.h.s8.bf16 %v2628
    %v2859 = vunpack.c.h.s8.bf16 %v2629
    %v2860 = vunpack.c.h.s8.bf16 %v2630
    %v2861 = vunpack.c.h.s8.bf16 %v2631
    %v2862 = vunpack.c.h.s8.bf16 %v2632
    %v2863 = vunpack.c.l.s8.bf16 %v2633
    %v2864 = vunpack.c.l.s8.bf16 %v2634
    %v2865 = vunpack.c.l.s8.bf16 %v2635
    %v2866 = vunpack.c.l.s8.bf16 %v2636
    %v2867 = vunpack.c.l.s8.bf16 %v2637
    %v2868 = vunpack.c.h.s8.bf16 %v2633
    %v2869 = vunpack.c.h.s8.bf16 %v2634
    %v2870 = vunpack.c.h.s8.bf16 %v2635
    %v2871 = vunpack.c.h.s8.bf16 %v2636
    %v2872 = vunpack.c.h.s8.bf16 %v2637
    %v2873 = vunpack.c.l.s8.bf16 %v2638
    %v2874 = vunpack.c.l.s8.bf16 %v2639
    %v2875 = vunpack.c.l.s8.bf16 %v2640
    %v2876 = vunpack.c.l.s8.bf16 %v2641
    %v2877 = vunpack.c.l.s8.bf16 %v2642
    %v2878 = vunpack.c.h.s8.bf16 %v2638
    %v2879 = vunpack.c.h.s8.bf16 %v2639
    %v2880 = vunpack.c.h.s8.bf16 %v2640
    %v2881 = vunpack.c.h.s8.bf16 %v2641
    %v2882 = vunpack.c.h.s8.bf16 %v2642
    %v2883 = vunpack.c.l.s8.bf16 %v2643
    %v2884 = vunpack.c.l.s8.bf16 %v2644
    %v2885 = vunpack.c.l.s8.bf16 %v2645
    %v2886 = vunpack.c.l.s8.bf16 %v2646
    %v2887 = vunpack.c.l.s8.bf16 %v2647
    %v2888 = vunpack.c.h.s8.bf16 %v2643
    %v2889 = vunpack.c.h.s8.bf16 %v2644
    %v2890 = vunpack.c.h.s8.bf16 %v2645
    %v2891 = vunpack.c.h.s8.bf16 %v2646
    %v2892 = vunpack.c.h.s8.bf16 %v2647
    %v2893 = vunpack.c.l.s8.bf16 %v2648
    %v2894 = vunpack.c.l.s8.bf16 %v2649
    %v2895 = vunpack.c.l.s8.bf16 %v2650
    %v2896 = vunpack.c.l.s8.bf16 %v2651
    %v2897 = vunpack.c.l.s8.bf16 %v2652
    %v2898 = vunpack.c.h.s8.bf16 %v2648
    %v2899 = vunpack.c.h.s8.bf16 %v2649
    %v2900 = vunpack.c.h.s8.bf16 %v2650
    %v2901 = vunpack.c.h.s8.bf16 %v2651
    %v2902 = vunpack.c.h.s8.bf16 %v2652
    %v2903 = vunpack.c.l.s8.bf16 %v2653
    %v2904 = vunpack.c.l.s8.bf16 %v2654
    %v2905 = vunpack.c.l.s8.bf16 %v2655
    %v2906 = vunpack.c.l.s8.bf16 %v2656
    %v2907 = vunpack.c.l.s8.bf16 %v2657
    %v2908 = vunpack.c.h.s8.bf16 %v2653
    %v2909 = vunpack.c.h.s8.bf16 %v2654
    %v2910 = vunpack.c.h.s8.bf16 %v2655
    %v2911 = vunpack.c.h.s8.bf16 %v2656
    %v2912 = vunpack.c.h.s8.bf16 %v2657
    %v2913 = vunpack.c.l.s8.bf16 %v2658
    %v2914 = vunpack.c.l.s8.bf16 %v2659
    %v2915 = vunpack.c.l.s8.bf16 %v2660
    %v2916 = vunpack.c.l.s8.bf16 %v2661
    %v2917 = vunpack.c.l.s8.bf16 %v2662
    %v2918 = vunpack.c.h.s8.bf16 %v2658
    %v2919 = vunpack.c.h.s8.bf16 %v2659
    %v2920 = vunpack.c.h.s8.bf16 %v2660
    %v2921 = vunpack.c.h.s8.bf16 %v2661
    %v2922 = vunpack.c.h.s8.bf16 %v2662
    %v2923 = vunpack.c.l.s8.bf16 %v2663
    %v2924 = vunpack.c.l.s8.bf16 %v2664
    %v2925 = vunpack.c.l.s8.bf16 %v2665
    %v2926 = vunpack.c.l.s8.bf16 %v2666
    %v2927 = vunpack.c.l.s8.bf16 %v2667
    %v2928 = vunpack.c.h.s8.bf16 %v2663
    %v2929 = vunpack.c.h.s8.bf16 %v2664
    %v2930 = vunpack.c.h.s8.bf16 %v2665
    %v2931 = vunpack.c.h.s8.bf16 %v2666
    %v2932 = vunpack.c.h.s8.bf16 %v2667
    %v2933 = vunpack.c.l.s8.bf16 %v2668
    %v2934 = vunpack.c.l.s8.bf16 %v2669
    %v2935 = vunpack.c.l.s8.bf16 %v2670
    %v2936 = vunpack.c.l.s8.bf16 %v2671
    %v2937 = vunpack.c.l.s8.bf16 %v2672
    %v2938 = vunpack.c.h.s8.bf16 %v2668
    %v2939 = vunpack.c.h.s8.bf16 %v2669
    %v2940 = vunpack.c.h.s8.bf16 %v2670
    %v2941 = vunpack.c.h.s8.bf16 %v2671
    %v2942 = vunpack.c.h.s8.bf16 %v2672
    %v2943 = vunpack.c.l.s8.bf16 %v2673
    %v2944 = vunpack.c.l.s8.bf16 %v2674
    %v2945 = vunpack.c.l.s8.bf16 %v2675
    %v2946 = vunpack.c.l.s8.bf16 %v2676
    %v2947 = vunpack.c.l.s8.bf16 %v2677
    %v2948 = vunpack.c.h.s8.bf16 %v2673
    %v2949 = vunpack.c.h.s8.bf16 %v2674
    %v2950 = vunpack.c.h.s8.bf16 %v2675
    %v2951 = vunpack.c.h.s8.bf16 %v2676
    %v2952 = vunpack.c.h.s8.bf16 %v2677
    %v2953 = vunpack.c.l.s8.bf16 %v2678
    %v2954 = vunpack.c.l.s8.bf16 %v2679
    %v2955 = vunpack.c.l.s8.bf16 %v2680
    %v2956 = vunpack.c.l.s8.bf16 %v2681
    %v2957 = vunpack.c.l.s8.bf16 %v2682
    %v2958 = vunpack.c.h.s8.bf16 %v2678
    %v2959 = vunpack.c.h.s8.bf16 %v2679
    %v2960 = vunpack.c.h.s8.bf16 %v2680
    %v2961 = vunpack.c.h.s8.bf16 %v2681
    %v2962 = vunpack.c.h.s8.bf16 %v2682
    %v2963 = vunpack.c.l.s8.bf16 %v2683
    %v2964 = vunpack.c.l.s8.bf16 %v2684
    %v2965 = vunpack.c.l.s8.bf16 %v2685
    %v2966 = vunpack.c.l.s8.bf16 %v2686
    %v2967 = vunpack.c.l.s8.bf16 %v2687
    %v2968 = vunpack.c.h.s8.bf16 %v2683
    %v2969 = vunpack.c.h.s8.bf16 %v2684
    %v2970 = vunpack.c.h.s8.bf16 %v2685
    %v2971 = vunpack.c.h.s8.bf16 %v2686
    %v2972 = vunpack.c.h.s8.bf16 %v2687
    %v2973 = vunpack.c.l.s8.bf16 %v2688
    %v2974 = vunpack.c.l.s8.bf16 %v2689
    %v2975 = vunpack.c.l.s8.bf16 %v2690
    %v2976 = vunpack.c.l.s8.bf16 %v2691
    %v2977 = vunpack.c.l.s8.bf16 %v2692
    %v2978 = vunpack.c.h.s8.bf16 %v2688
    %v2979 = vunpack.c.h.s8.bf16 %v2689
    %v2980 = vunpack.c.h.s8.bf16 %v2690
    %v2981 = vunpack.c.h.s8.bf16 %v2691
    %v2982 = vunpack.c.h.s8.bf16 %v2692
    %v2983 = vunpack.c.l.s8.bf16 %v2693
    %v2984 = vunpack.c.l.s8.bf16 %v2694
    %v2985 = vunpack.c.l.s8.bf16 %v2695
    %v2986 = vunpack.c.l.s8.bf16 %v2696
    %v2987 = vunpack.c.l.s8.bf16 %v2697
    %v2988 = vunpack.c.h.s8.bf16 %v2693
    %v2989 = vunpack.c.h.s8.bf16 %v2694
    %v2990 = vunpack.c.h.s8.bf16 %v2695
    %v2991 = vunpack.c.h.s8.bf16 %v2696
    %v2992 = vunpack.c.h.s8.bf16 %v2697
    %v2993 = vunpack.c.l.s8.bf16 %v2698
    %v2994 = vunpack.c.l.s8.bf16 %v2699
    %v2995 = vunpack.c.l.s8.bf16 %v2700
    %v2996 = vunpack.c.l.s8.bf16 %v2701
    %v2997 = vunpack.c.l.s8.bf16 %v2702
    %v2998 = vunpack.c.h.s8.bf16 %v2698
    %v2999 = vunpack.c.h.s8.bf16 %v2699
    %v3000 = vunpack.c.h.s8.bf16 %v2700
    %v3001 = vunpack.c.h.s8.bf16 %v2701
    %v3002 = vunpack.c.h.s8.bf16 %v2702
    %v3003 = vunpack.c.l.s8.bf16 %v2703
    %v3004 = vunpack.c.l.s8.bf16 %v2704
    %v3005 = vunpack.c.l.s8.bf16 %v2705
    %v3006 = vunpack.c.l.s8.bf16 %v2706
    %v3007 = vunpack.c.l.s8.bf16 %v2707
    %v3008 = vunpack.c.h.s8.bf16 %v2703
    %v3009 = vunpack.c.h.s8.bf16 %v2704
    %v3010 = vunpack.c.h.s8.bf16 %v2705
    %v3011 = vunpack.c.h.s8.bf16 %v2706
    %v3012 = vunpack.c.h.s8.bf16 %v2707
    %v3013 = vunpack.c.l.s8.bf16 %v2708
    %v3014 = vunpack.c.l.s8.bf16 %v2709
    %v3015 = vunpack.c.l.s8.bf16 %v2710
    %v3016 = vunpack.c.l.s8.bf16 %v2711
    %v3017 = vunpack.c.l.s8.bf16 %v2712
    %v3018 = vunpack.c.h.s8.bf16 %v2708
    %v3019 = vunpack.c.h.s8.bf16 %v2709
    %v3020 = vunpack.c.h.s8.bf16 %v2710
    %v3021 = vunpack.c.h.s8.bf16 %v2711
    %v3022 = vunpack.c.h.s8.bf16 %v2712
    %v3023 = vunpack.c.l.s8.bf16 %v2713
    %v3024 = vunpack.c.l.s8.bf16 %v2714
    %v3025 = vunpack.c.l.s8.bf16 %v2715
    %v3026 = vunpack.c.l.s8.bf16 %v2716
    %v3027 = vunpack.c.l.s8.bf16 %v2717
    %v3028 = vunpack.c.h.s8.bf16 %v2713
    %v3029 = vunpack.c.h.s8.bf16 %v2714
    %v3030 = vunpack.c.h.s8.bf16 %v2715
    %v3031 = vunpack.c.h.s8.bf16 %v2716
    %v3032 = vunpack.c.h.s8.bf16 %v2717
    %v3033 = vunpack.c.l.s8.bf16 %v2718
    %v3034 = vunpack.c.l.s8.bf16 %v2719
    %v3035 = vunpack.c.l.s8.bf16 %v2720
    %v3036 = vunpack.c.l.s8.bf16 %v2721
    %v3037 = vunpack.c.l.s8.bf16 %v2722
    %v3038 = vunpack.c.h.s8.bf16 %v2718
    %v3039 = vunpack.c.h.s8.bf16 %v2719
    %v3040 = vunpack.c.h.s8.bf16 %v2720
    %v3041 = vunpack.c.h.s8.bf16 %v2721
    %v3042 = vunpack.c.h.s8.bf16 %v2722
    %3043 = vmatprep.subr.bf16.mxu0 %v2724
    %3044 = vmatpush1.bf16.msra.mxu0 %v2723
    %3045 = vmatprep.subr.bf16.mxu0 %v2729
    %3046 = vmatpush1.bf16.msra.mxu0 %v2728
    %3047 = vmatprep.subr.bf16.mxu0 %v2734
    %3048 = vmatpush1.bf16.msra.mxu0 %v2733
    %3049 = vmatprep.subr.bf16.mxu0 %v2739
    %3050 = vmatpush1.bf16.msra.mxu0 %v2738
    %3051 = vmatprep.subr.bf16.mxu0 %v2744
    %3052 = vmatpush1.bf16.msra.mxu0 %v2743
    %3053 = vmatprep.subr.bf16.mxu0 %v2749
    %3054 = vmatpush1.bf16.msra.mxu0 %v2748
    %3055 = vmatprep.subr.bf16.mxu0 %v2754
    %3056 = vmatpush1.bf16.msra.mxu0 %v2753
    %3057 = vmatprep.subr.bf16.mxu0 %v2759
    %3058 = vmatpush1.bf16.msra.mxu0 %v2758
    %3059 = vmatprep.subr.bf16.mxu0 %v2764
    %3060 = vmatpush1.bf16.msra.mxu0 %v2763
    %3061 = vmatprep.subr.bf16.mxu0 %v2769
    %3062 = vmatpush1.bf16.msra.mxu0 %v2768
    %3063 = vmatprep.subr.bf16.mxu0 %v2774
    %3064 = vmatpush1.bf16.msra.mxu0 %v2773
    %3065 = vmatprep.subr.bf16.mxu0 %v2779
    %3066 = vmatpush1.bf16.msra.mxu0 %v2778
    %3067 = vmatprep.subr.bf16.mxu0 %v2784
    %3068 = vmatpush1.bf16.msra.mxu0 %v2783
    %3069 = vmatprep.subr.bf16.mxu0 %v2789
    %3070 = vmatpush1.bf16.msra.mxu0 %v2788
    %3071 = vmatprep.subr.bf16.mxu0 %v2794
    %3072 = vmatpush1.bf16.msra.mxu0 %v2793
    %3073 = vmatprep.subr.bf16.mxu0 %v2799
    %3074 = vmatpush1.bf16.msra.mxu0 %v2798
    %3075 = vmatprep.mubr.bf16.mxu0 %v2556
    %3076 = vmatmul.mubr.bf16.gmra.mrb[0].mxu0 %v2555
    %v3077 = vpop.f32.mrb[0].mxu0
    %v3078 = vadd.f32 0.0, %v3077
    %v3079 = vpop.f32.mrb[0].mxu0
    %v3080 = vadd.f32 0.0, %v3079
    %v3081 = vpop.f32.mrb[0].mxu0
    %v3082 = vpop.f32.mrb[0].mxu0
    %3083 = vdwg.mxu0
    %3084 = vmatprep.subr.bf16.mxu0 %v2804
    %3085 = vmatpush1.bf16.msra.mxu0 %v2803
    %3086 = vmatprep.subr.bf16.mxu0 %v2809
    %3087 = vmatpush1.bf16.msra.mxu0 %v2808
    %3088 = vmatprep.subr.bf16.mxu0 %v2814
    %3089 = vmatpush1.bf16.msra.mxu0 %v2813
    %3090 = vmatprep.subr.bf16.mxu0 %v2819
    %3091 = vmatpush1.bf16.msra.mxu0 %v2818
    %3092 = vmatprep.subr.bf16.mxu0 %v2824
    %3093 = vmatpush1.bf16.msra.mxu0 %v2823
    %3094 = vmatprep.subr.bf16.mxu0 %v2829
    %3095 = vmatpush1.bf16.msra.mxu0 %v2828
    %3096 = vmatprep.subr.bf16.mxu0 %v2834
    %3097 = vmatpush1.bf16.msra.mxu0 %v2833
    %3098 = vmatprep.subr.bf16.mxu0 %v2839
    %3099 = vmatpush1.bf16.msra.mxu0 %v2838
    %3100 = vmatprep.subr.bf16.mxu0 %v2844
    %3101 = vmatpush1.bf16.msra.mxu0 %v2843
    %3102 = vmatprep.subr.bf16.mxu0 %v2849
    %3103 = vmatpush1.bf16.msra.mxu0 %v2848
    %3104 = vmatprep.subr.bf16.mxu0 %v2854
    %3105 = vmatpush1.bf16.msra.mxu0 %v2853
    %3106 = vmatprep.subr.bf16.mxu0 %v2859
    %3107 = vmatpush1.bf16.msra.mxu0 %v2858
    %3108 = vmatprep.subr.bf16.mxu0 %v2864
    %3109 = vmatpush1.bf16.msra.mxu0 %v2863
    %3110 = vmatprep.subr.bf16.mxu0 %v2869
    %3111 = vmatpush1.bf16.msra.mxu0 %v2868
    %3112 = vmatprep.subr.bf16.mxu0 %v2874
    %3113 = vmatpush1.bf16.msra.mxu0 %v2873
    %3114 = vmatprep.subr.bf16.mxu0 %v2879
    %3115 = vmatpush1.bf16.msra.mxu0 %v2878
    %3116 = vmatprep.mubr.bf16.mxu0 %v2558
    %3117 = vmatmul.mubr.bf16.gmra.mrb[0].mxu0 %v2557
    %v3118 = vpop.f32.mrb[0].mxu0
    %v3119 = vadd.f32 %v3078, %v3118
    %v3120 = vpop.f32.mrb[0].mxu0
    %v3121 = vadd.f32 %v3080, %v3120
    %v3122 = vpop.f32.mrb[0].mxu0
    %v3123 = vpop.f32.mrb[0].mxu0
    %3124 = vdwg.mxu0
    %3125 = vmatprep.subr.bf16.mxu0 %v2884
    %3126 = vmatpush1.bf16.msra.mxu0 %v2883
    %3127 = vmatprep.subr.bf16.mxu0 %v2889
    %3128 = vmatpush1.bf16.msra.mxu0 %v2888
    %3129 = vmatprep.subr.bf16.mxu0 %v2894
    %3130 = vmatpush1.bf16.msra.mxu0 %v2893
    %3131 = vmatprep.subr.bf16.mxu0 %v2899
    %3132 = vmatpush1.bf16.msra.mxu0 %v2898
    %3133 = vmatprep.subr.bf16.mxu0 %v2904
    %3134 = vmatpush1.bf16.msra.mxu0 %v2903
    %3135 = vmatprep.subr.bf16.mxu0 %v2909
    %3136 = vmatpush1.bf16.msra.mxu0 %v2908
    %3137 = vmatprep.subr.bf16.mxu0 %v2914
    %3138 = vmatpush1.bf16.msra.mxu0 %v2913
    %3139 = vmatprep.subr.bf16.mxu0 %v2919
    %3140 = vmatpush1.bf16.msra.mxu0 %v2918
    %3141 = vmatprep.subr.bf16.mxu0 %v2924
    %3142 = vmatpush1.bf16.msra.mxu0 %v2923
    %3143 = vmatprep.subr.bf16.mxu0 %v2929
    %3144 = vmatpush1.bf16.msra.mxu0 %v2928
    %3145 = vmatprep.subr.bf16.mxu0 %v2934
    %3146 = vmatpush1.bf16.msra.mxu0 %v2933
    %3147 = vmatprep.subr.bf16.mxu0 %v2939
    %3148 = vmatpush1.bf16.msra.mxu0 %v2938
    %3149 = vmatprep.subr.bf16.mxu0 %v2944
    %3150 = vmatpush1.bf16.msra.mxu0 %v2943
    %3151 = vmatprep.subr.bf16.mxu0 %v2949
    %3152 = vmatpush1.bf16.msra.mxu0 %v2948
    %3153 = vmatprep.subr.bf16.mxu0 %v2954
    %3154 = vmatpush1.bf16.msra.mxu0 %v2953
    %3155 = vmatprep.subr.bf16.mxu0 %v2959
    %3156 = vmatpush1.bf16.msra.mxu0 %v2958
    %3157 = vmatprep.mubr.bf16.mxu0 %v2560
    %3158 = vmatmul.mubr.bf16.gmra.mrb[0].mxu0 %v2559
    %v3159 = vpop.f32.mrb[0].mxu0
    %v3160 = vadd.f32 %v3119, %v3159
    %v3161 = vpop.f32.mrb[0].mxu0
    %v3162 = vadd.f32 %v3121, %v3161
    %v3163 = vpop.f32.mrb[0].mxu0
    %v3164 = vpop.f32.mrb[0].mxu0
    %3165 = vdwg.mxu0
    %3166 = vmatprep.subr.bf16.mxu0 %v2964
    %3167 = vmatpush1.bf16.msra.mxu0 %v2963
    %3168 = vmatprep.subr.bf16.mxu0 %v2969
    %3169 = vmatpush1.bf16.msra.mxu0 %v2968
    %3170 = vmatprep.subr.bf16.mxu0 %v2974
    %3171 = vmatpush1.bf16.msra.mxu0 %v2973
    %3172 = vmatprep.subr.bf16.mxu0 %v2979
    %3173 = vmatpush1.bf16.msra.mxu0 %v2978
    %3174 = vmatprep.subr.bf16.mxu0 %v2984
    %3175 = vmatpush1.bf16.msra.mxu0 %v2983
    %3176 = vmatprep.subr.bf16.mxu0 %v2989
    %3177 = vmatpush1.bf16.msra.mxu0 %v2988
    %3178 = vmatprep.subr.bf16.mxu0 %v2994
    %3179 = vmatpush1.bf16.msra.mxu0 %v2993
    %3180 = vmatprep.subr.bf16.mxu0 %v2999
    %3181 = vmatpush1.bf16.msra.mxu0 %v2998
    %3182 = vmatprep.subr.bf16.mxu0 %v3004
    %3183 = vmatpush1.bf16.msra.mxu0 %v3003
    %3184 = vmatprep.subr.bf16.mxu0 %v3009
    %3185 = vmatpush1.bf16.msra.mxu0 %v3008
    %3186 = vmatprep.subr.bf16.mxu0 %v3014
    %3187 = vmatpush1.bf16.msra.mxu0 %v3013
    %3188 = vmatprep.subr.bf16.mxu0 %v3019
    %3189 = vmatpush1.bf16.msra.mxu0 %v3018
    %3190 = vmatprep.subr.bf16.mxu0 %v3024
    %3191 = vmatpush1.bf16.msra.mxu0 %v3023
    %3192 = vmatprep.subr.bf16.mxu0 %v3029
    %3193 = vmatpush1.bf16.msra.mxu0 %v3028
    %3194 = vmatprep.subr.bf16.mxu0 %v3034
    %3195 = vmatpush1.bf16.msra.mxu0 %v3033
    %3196 = vmatprep.subr.bf16.mxu0 %v3039
    %3197 = vmatpush1.bf16.msra.mxu0 %v3038
    %3198 = vmatprep.mubr.bf16.mxu0 %v2562
    %3199 = vmatmul.mubr.bf16.gmra.mrb[0].mxu0 %v2561
    %v3200 = vpop.f32.mrb[0].mxu0
    %v3201 = vadd.f32 %v3160, %v3200
    %v3202 = vpop.f32.mrb[0].mxu0
    %v3203 = vadd.f32 %v3162, %v3202
    %v3204 = vpop.f32.mrb[0].mxu0
    %v3205 = vpop.f32.mrb[0].mxu0
    %3206 = vdwg.mxu0
    %3207 = vmatprep.subr.bf16.mxu0 %v2726
    %3208 = vmatpush1.bf16.msra.mxu0 %v2725
    %3209 = vmatprep.subr.bf16.mxu0 %v2731
    %3210 = vmatpush1.bf16.msra.mxu0 %v2730
    %3211 = vmatprep.subr.bf16.mxu0 %v2736
    %3212 = vmatpush1.bf16.msra.mxu0 %v2735
    %3213 = vmatprep.subr.bf16.mxu0 %v2741
    %3214 = vmatpush1.bf16.msra.mxu0 %v2740
    %3215 = vmatprep.subr.bf16.mxu0 %v2746
    %3216 = vmatpush1.bf16.msra.mxu0 %v2745
    %3217 = vmatprep.subr.bf16.mxu0 %v2751
    %3218 = vmatpush1.bf16.msra.mxu0 %v2750
    %3219 = vmatprep.subr.bf16.mxu0 %v2756
    %3220 = vmatpush1.bf16.msra.mxu0 %v2755
    %3221 = vmatprep.subr.bf16.mxu0 %v2761
    %3222 = vmatpush1.bf16.msra.mxu0 %v2760
    %3223 = vmatprep.subr.bf16.mxu0 %v2766
    %3224 = vmatpush1.bf16.msra.mxu0 %v2765
    %3225 = vmatprep.subr.bf16.mxu0 %v2771
    %3226 = vmatpush1.bf16.msra.mxu0 %v2770
    %3227 = vmatprep.subr.bf16.mxu0 %v2776
    %3228 = vmatpush1.bf16.msra.mxu0 %v2775
    %3229 = vmatprep.subr.bf16.mxu0 %v2781
    %3230 = vmatpush1.bf16.msra.mxu0 %v2780
    %3231 = vmatprep.subr.bf16.mxu0 %v2786
    %3232 = vmatpush1.bf16.msra.mxu0 %v2785
    %3233 = vmatprep.subr.bf16.mxu0 %v2791
    %3234 = vmatpush1.bf16.msra.mxu0 %v2790
    %3235 = vmatprep.subr.bf16.mxu0 %v2796
    %3236 = vmatpush1.bf16.msra.mxu0 %v2795
    %3237 = vmatprep.subr.bf16.mxu0 %v2801
    %3238 = vmatpush1.bf16.msra.mxu0 %v2800
    %3239 = vmatprep.mubr.bf16.mxu0 %v2556
    %3240 = vmatmul.mubr.bf16.gmra.mrb[0].mxu0 %v2555
    %v3241 = vpop.f32.mrb[0].mxu0
    %v3242 = vadd.f32 0.0, %v3241
    %v3243 = vpop.f32.mrb[0].mxu0
    %v3244 = vadd.f32 0.0, %v3243
    %v3245 = vpop.f32.mrb[0].mxu0
    %v3246 = vpop.f32.mrb[0].mxu0
    %3247 = vdwg.mxu0
    %3248 = vmatprep.subr.bf16.mxu0 %v2806
    %3249 = vmatpush1.bf16.msra.mxu0 %v2805
    %3250 = vmatprep.subr.bf16.mxu0 %v2811
    %3251 = vmatpush1.bf16.msra.mxu0 %v2810
    %3252 = vmatprep.subr.bf16.mxu0 %v2816
    %3253 = vmatpush1.bf16.msra.mxu0 %v2815
    %3254 = vmatprep.subr.bf16.mxu0 %v2821
    %3255 = vmatpush1.bf16.msra.mxu0 %v2820
    %3256 = vmatprep.subr.bf16.mxu0 %v2826
    %3257 = vmatpush1.bf16.msra.mxu0 %v2825
    %3258 = vmatprep.subr.bf16.mxu0 %v2831
    %3259 = vmatpush1.bf16.msra.mxu0 %v2830
    %3260 = vmatprep.subr.bf16.mxu0 %v2836
    %3261 = vmatpush1.bf16.msra.mxu0 %v2835
    %3262 = vmatprep.subr.bf16.mxu0 %v2841
    %3263 = vmatpush1.bf16.msra.mxu0 %v2840
    %3264 = vmatprep.subr.bf16.mxu0 %v2846
    %3265 = vmatpush1.bf16.msra.mxu0 %v2845
    %3266 = vmatprep.subr.bf16.mxu0 %v2851
    %3267 = vmatpush1.bf16.msra.mxu0 %v2850
    %3268 = vmatprep.subr.bf16.mxu0 %v2856
    %3269 = vmatpush1.bf16.msra.mxu0 %v2855
    %3270 = vmatprep.subr.bf16.mxu0 %v2861
    %3271 = vmatpush1.bf16.msra.mxu0 %v2860
    %3272 = vmatprep.subr.bf16.mxu0 %v2866
    %3273 = vmatpush1.bf16.msra.mxu0 %v2865
    %3274 = vmatprep.subr.bf16.mxu0 %v2871
    %3275 = vmatpush1.bf16.msra.mxu0 %v2870
    %3276 = vmatprep.subr.bf16.mxu0 %v2876
    %3277 = vmatpush1.bf16.msra.mxu0 %v2875
    %3278 = vmatprep.subr.bf16.mxu0 %v2881
    %3279 = vmatpush1.bf16.msra.mxu0 %v2880
    %3280 = vmatprep.mubr.bf16.mxu0 %v2558
    %3281 = vmatmul.mubr.bf16.gmra.mrb[0].mxu0 %v2557
    %v3282 = vpop.f32.mrb[0].mxu0
    %v3283 = vadd.f32 %v3242, %v3282
    %v3284 = vpop.f32.mrb[0].mxu0
    %v3285 = vadd.f32 %v3244, %v3284
    %v3286 = vpop.f32.mrb[0].mxu0
    %v3287 = vpop.f32.mrb[0].mxu0
    %3288 = vdwg.mxu0
    %3289 = vmatprep.subr.bf16.mxu0 %v2886
    %3290 = vmatpush1.bf16.msra.mxu0 %v2885
    %3291 = vmatprep.subr.bf16.mxu0 %v2891
    %3292 = vmatpush1.bf16.msra.mxu0 %v2890
    %3293 = vmatprep.subr.bf16.mxu0 %v2896
    %3294 = vmatpush1.bf16.msra.mxu0 %v2895
    %3295 = vmatprep.subr.bf16.mxu0 %v2901
    %3296 = vmatpush1.bf16.msra.mxu0 %v2900
    %3297 = vmatprep.subr.bf16.mxu0 %v2906
    %3298 = vmatpush1.bf16.msra.mxu0 %v2905
    %3299 = vmatprep.subr.bf16.mxu0 %v2911
    %3300 = vmatpush1.bf16.msra.mxu0 %v2910
    %3301 = vmatprep.subr.bf16.mxu0 %v2916
    %3302 = vmatpush1.bf16.msra.mxu0 %v2915
    %3303 = vmatprep.subr.bf16.mxu0 %v2921
    %3304 = vmatpush1.bf16.msra.mxu0 %v2920
    %3305 = vmatprep.subr.bf16.mxu0 %v2926
    %3306 = vmatpush1.bf16.msra.mxu0 %v2925
    %3307 = vmatprep.subr.bf16.mxu0 %v2931
    %3308 = vmatpush1.bf16.msra.mxu0 %v2930
    %3309 = vmatprep.subr.bf16.mxu0 %v2936
    %3310 = vmatpush1.bf16.msra.mxu0 %v2935
    %3311 = vmatprep.subr.bf16.mxu0 %v2941
    %3312 = vmatpush1.bf16.msra.mxu0 %v2940
    %3313 = vmatprep.subr.bf16.mxu0 %v2946
    %3314 = vmatpush1.bf16.msra.mxu0 %v2945
    %3315 = vmatprep.subr.bf16.mxu0 %v2951
    %3316 = vmatpush1.bf16.msra.mxu0 %v2950
    %3317 = vmatprep.subr.bf16.mxu0 %v2956
    %3318 = vmatpush1.bf16.msra.mxu0 %v2955
    %3319 = vmatprep.subr.bf16.mxu0 %v2961
    %3320 = vmatpush1.bf16.msra.mxu0 %v2960
    %3321 = vmatprep.mubr.bf16.mxu0 %v2560
    %3322 = vmatmul.mubr.bf16.gmra.mrb[0].mxu0 %v2559
    %v3323 = vpop.f32.mrb[0].mxu0
    %v3324 = vadd.f32 %v3283, %v3323
    %v3325 = vpop.f32.mrb[0].mxu0
    %v3326 = vadd.f32 %v3285, %v3325
    %v3327 = vpop.f32.mrb[0].mxu0
    %v3328 = vpop.f32.mrb[0].mxu0
    %3329 = vdwg.mxu0
    %3330 = vmatprep.subr.bf16.mxu0 %v2966
    %3331 = vmatpush1.bf16.msra.mxu0 %v2965
    %3332 = vmatprep.subr.bf16.mxu0 %v2971
    %3333 = vmatpush1.bf16.msra.mxu0 %v2970
    %3334 = vmatprep.subr.bf16.mxu0 %v2976
    %3335 = vmatpush1.bf16.msra.mxu0 %v2975
    %3336 = vmatprep.subr.bf16.mxu0 %v2981
    %3337 = vmatpush1.bf16.msra.mxu0 %v2980
    %3338 = vmatprep.subr.bf16.mxu0 %v2986
    %3339 = vmatpush1.bf16.msra.mxu0 %v2985
    %3340 = vmatprep.subr.bf16.mxu0 %v2991
    %3341 = vmatpush1.bf16.msra.mxu0 %v2990
    %3342 = vmatprep.subr.bf16.mxu0 %v2996
    %3343 = vmatpush1.bf16.msra.mxu0 %v2995
    %3344 = vmatprep.subr.bf16.mxu0 %v3001
    %3345 = vmatpush1.bf16.msra.mxu0 %v3000
    %3346 = vmatprep.subr.bf16.mxu0 %v3006
    %3347 = vmatpush1.bf16.msra.mxu0 %v3005
    %3348 = vmatprep.subr.bf16.mxu0 %v3011
    %3349 = vmatpush1.bf16.msra.mxu0 %v3010
    %3350 = vmatprep.subr.bf16.mxu0 %v3016
    %3351 = vmatpush1.bf16.msra.mxu0 %v3015
    %3352 = vmatprep.subr.bf16.mxu0 %v3021
    %3353 = vmatpush1.bf16.msra.mxu0 %v3020
    %3354 = vmatprep.subr.bf16.mxu0 %v3026
    %3355 = vmatpush1.bf16.msra.mxu0 %v3025
    %3356 = vmatprep.subr.bf16.mxu0 %v3031
    %3357 = vmatpush1.bf16.msra.mxu0 %v3030
    %3358 = vmatprep.subr.bf16.mxu0 %v3036
    %3359 = vmatpush1.bf16.msra.mxu0 %v3035
    %3360 = vmatprep.subr.bf16.mxu0 %v3041
    %3361 = vmatpush1.bf16.msra.mxu0 %v3040
    %3362 = vmatprep.mubr.bf16.mxu0 %v2562
    %3363 = vmatmul.mubr.bf16.gmra.mrb[0].mxu0 %v2561
    %v3364 = vpop.f32.mrb[0].mxu0
    %v3365 = vadd.f32 %v3324, %v3364
    %v3366 = vpop.f32.mrb[0].mxu0
    %v3367 = vadd.f32 %v3326, %v3366
    %v3368 = vpop.f32.mrb[0].mxu0
    %v3369 = vpop.f32.mrb[0].mxu0
    %3370 = vdwg.mxu0
    %3371 = vmatprep.subr.bf16.mxu0 0
    %3372 = vmatpush1.bf16.msra.mxu0 %v2727
    %3373 = vmatprep.subr.bf16.mxu0 0
    %3374 = vmatpush1.bf16.msra.mxu0 %v2732
    %3375 = vmatprep.subr.bf16.mxu0 0
    %3376 = vmatpush1.bf16.msra.mxu0 %v2737
    %3377 = vmatprep.subr.bf16.mxu0 0
    %3378 = vmatpush1.bf16.msra.mxu0 %v2742
    %3379 = vmatprep.subr.bf16.mxu0 0
    %3380 = vmatpush1.bf16.msra.mxu0 %v2747
    %3381 = vmatprep.subr.bf16.mxu0 0
    %3382 = vmatpush1.bf16.msra.mxu0 %v2752
    %3383 = vmatprep.subr.bf16.mxu0 0
    %3384 = vmatpush1.bf16.msra.mxu0 %v2757
    %3385 = vmatprep.subr.bf16.mxu0 0
    %3386 = vmatpush1.bf16.msra.mxu0 %v2762
    %3387 = vmatprep.subr.bf16.mxu0 0
    %3388 = vmatpush1.bf16.msra.mxu0 %v2767
    %3389 = vmatprep.subr.bf16.mxu0 0
    %3390 = vmatpush1.bf16.msra.mxu0 %v2772
    %3391 = vmatprep.subr.bf16.mxu0 0
    %3392 = vmatpush1.bf16.msra.mxu0 %v2777
    %3393 = vmatprep.subr.bf16.mxu0 0
    %3394 = vmatpush1.bf16.msra.mxu0 %v2782
    %3395 = vmatprep.subr.bf16.mxu0 0
    %3396 = vmatpush1.bf16.msra.mxu0 %v2787
    %3397 = vmatprep.subr.bf16.mxu0 0
    %3398 = vmatpush1.bf16.msra.mxu0 %v2792
    %3399 = vmatprep.subr.bf16.mxu0 0
    %3400 = vmatpush1.bf16.msra.mxu0 %v2797
    %3401 = vmatprep.subr.bf16.mxu0 0
    %3402 = vmatpush1.bf16.msra.mxu0 %v2802
    %3403 = vmatprep.mubr.bf16.mxu0 %v2556
    %3404 = vmatmul.mubr.bf16.gmra.mrb[0].mxu0 %v2555
    %v3405 = vpop.f32.mrb[0].mxu0
    %v3406 = vadd.f32 0.0, %v3405
    %v3407 = vpop.f32.mrb[0].mxu0
    %v3408 = vpop.f32.mrb[0].mxu0
    %v3409 = vpop.f32.mrb[0].mxu0
    %3410 = vdwg.mxu0
    %3411 = vmatprep.subr.bf16.mxu0 0
    %3412 = vmatpush1.bf16.msra.mxu0 %v2807
    %3413 = vmatprep.subr.bf16.mxu0 0
    %3414 = vmatpush1.bf16.msra.mxu0 %v2812
    %3415 = vmatprep.subr.bf16.mxu0 0
    %3416 = vmatpush1.bf16.msra.mxu0 %v2817
    %3417 = vmatprep.subr.bf16.mxu0 0
    %3418 = vmatpush1.bf16.msra.mxu0 %v2822
    %3419 = vmatprep.subr.bf16.mxu0 0
    %3420 = vmatpush1.bf16.msra.mxu0 %v2827
    %3421 = vmatprep.subr.bf16.mxu0 0
    %3422 = vmatpush1.bf16.msra.mxu0 %v2832
    %3423 = vmatprep.subr.bf16.mxu0 0
    %3424 = vmatpush1.bf16.msra.mxu0 %v2837
    %3425 = vmatprep.subr.bf16.mxu0 0
    %3426 = vmatpush1.bf16.msra.mxu0 %v2842
    %3427 = vmatprep.subr.bf16.mxu0 0
    %3428 = vmatpush1.bf16.msra.mxu0 %v2847
    %3429 = vmatprep.subr.bf16.mxu0 0
    %3430 = vmatpush1.bf16.msra.mxu0 %v2852
    %3431 = vmatprep.subr.bf16.mxu0 0
    %3432 = vmatpush1.bf16.msra.mxu0 %v2857
    %3433 = vmatprep.subr.bf16.mxu0 0
    %3434 = vmatpush1.bf16.msra.mxu0 %v2862
    %3435 = vmatprep.subr.bf16.mxu0 0
    %3436 = vmatpush1.bf16.msra.mxu0 %v2867
    %3437 = vmatprep.subr.bf16.mxu0 0
    %3438 = vmatpush1.bf16.msra.mxu0 %v2872
    %3439 = vmatprep.subr.bf16.mxu0 0
    %3440 = vmatpush1.bf16.msra.mxu0 %v2877
    %3441 = vmatprep.subr.bf16.mxu0 0
    %3442 = vmatpush1.bf16.msra.mxu0 %v2882
    %3443 = vmatprep.mubr.bf16.mxu0 %v2558
    %3444 = vmatmul.mubr.bf16.gmra.mrb[0].mxu0 %v2557
    %v3445 = vpop.f32.mrb[0].mxu0
    %v3446 = vadd.f32 %v3406, %v3445
    %v3447 = vpop.f32.mrb[0].mxu0
    %v3448 = vpop.f32.mrb[0].mxu0
    %v3449 = vpop.f32.mrb[0].mxu0
    %3450 = vdwg.mxu0
    %3451 = vmatprep.subr.bf16.mxu0 0
    %3452 = vmatpush1.bf16.msra.mxu0 %v2887
    %3453 = vmatprep.subr.bf16.mxu0 0
    %3454 = vmatpush1.bf16.msra.mxu0 %v2892
    %3455 = vmatprep.subr.bf16.mxu0 0
    %3456 = vmatpush1.bf16.msra.mxu0 %v2897
    %3457 = vmatprep.subr.bf16.mxu0 0
    %3458 = vmatpush1.bf16.msra.mxu0 %v2902
    %3459 = vmatprep.subr.bf16.mxu0 0
    %3460 = vmatpush1.bf16.msra.mxu0 %v2907
    %3461 = vmatprep.subr.bf16.mxu0 0
    %3462 = vmatpush1.bf16.msra.mxu0 %v2912
    %3463 = vmatprep.subr.bf16.mxu0 0
    %3464 = vmatpush1.bf16.msra.mxu0 %v2917
    %3465 = vmatprep.subr.bf16.mxu0 0
    %3466 = vmatpush1.bf16.msra.mxu0 %v2922
    %3467 = vmatprep.subr.bf16.mxu0 0
    %3468 = vmatpush1.bf16.msra.mxu0 %v2927
    %3469 = vmatprep.subr.bf16.mxu0 0
    %3470 = vmatpush1.bf16.msra.mxu0 %v2932
    %3471 = vmatprep.subr.bf16.mxu0 0
    %3472 = vmatpush1.bf16.msra.mxu0 %v2937
    %3473 = vmatprep.subr.bf16.mxu0 0
    %3474 = vmatpush1.bf16.msra.mxu0 %v2942
    %3475 = vmatprep.subr.bf16.mxu0 0
    %3476 = vmatpush1.bf16.msra.mxu0 %v2947
    %3477 = vmatprep.subr.bf16.mxu0 0
    %3478 = vmatpush1.bf16.msra.mxu0 %v2952
    %3479 = vmatprep.subr.bf16.mxu0 0
    %3480 = vmatpush1.bf16.msra.mxu0 %v2957
    %3481 = vmatprep.subr.bf16.mxu0 0
    %3482 = vmatpush1.bf16.msra.mxu0 %v2962
    %3483 = vmatprep.mubr.bf16.mxu0 %v2560
    %3484 = vmatmul.mubr.bf16.gmra.mrb[0].mxu0 %v2559
    %v3485 = vpop.f32.mrb[0].mxu0
    %v3486 = vadd.f32 %v3446, %v3485
    %v3487 = vpop.f32.mrb[0].mxu0
    %v3488 = vpop.f32.mrb[0].mxu0
    %v3489 = vpop.f32.mrb[0].mxu0
    %3490 = vdwg.mxu0
    %3491 = vmatprep.subr.bf16.mxu0 0
    %3492 = vmatpush1.bf16.msra.mxu0 %v2967
    %3493 = vmatprep.subr.bf16.mxu0 0
    %3494 = vmatpush1.bf16.msra.mxu0 %v2972
    %3495 = vmatprep.subr.bf16.mxu0 0
    %3496 = vmatpush1.bf16.msra.mxu0 %v2977
    %3497 = vmatprep.subr.bf16.mxu0 0
    %3498 = vmatpush1.bf16.msra.mxu0 %v2982
    %3499 = vmatprep.subr.bf16.mxu0 0
    %3500 = vmatpush1.bf16.msra.mxu0 %v2987
    %3501 = vmatprep.subr.bf16.mxu0 0
    %3502 = vmatpush1.bf16.msra.mxu0 %v2992
    %3503 = vmatprep.subr.bf16.mxu0 0
    %3504 = vmatpush1.bf16.msra.mxu0 %v2997
    %3505 = vmatprep.subr.bf16.mxu0 0
    %3506 = vmatpush1.bf16.msra.mxu0 %v3002
    %3507 = vmatprep.subr.bf16.mxu0 0
    %3508 = vmatpush1.bf16.msra.mxu0 %v3007
    %3509 = vmatprep.subr.bf16.mxu0 0
    %3510 = vmatpush1.bf16.msra.mxu0 %v3012
    %3511 = vmatprep.subr.bf16.mxu0 0
    %3512 = vmatpush1.bf16.msra.mxu0 %v3017
    %3513 = vmatprep.subr.bf16.mxu0 0
    %3514 = vmatpush1.bf16.msra.mxu0 %v3022
    %3515 = vmatprep.subr.bf16.mxu0 0
    %3516 = vmatpush1.bf16.msra.mxu0 %v3027
    %3517 = vmatprep.subr.bf16.mxu0 0
    %3518 = vmatpush1.bf16.msra.mxu0 %v3032
    %3519 = vmatprep.subr.bf16.mxu0 0
    %3520 = vmatpush1.bf16.msra.mxu0 %v3037
    %3521 = vmatprep.subr.bf16.mxu0 0
    %3522 = vmatpush1.bf16.msra.mxu0 %v3042
    %3523 = vmatprep.mubr.bf16.mxu0 %v2562
    %3524 = vmatmul.mubr.bf16.gmra.mrb[0].mxu0 %v2561
    %v3525 = vpop.f32.mrb[0].mxu0
    %v3526 = vadd.f32 %v3486, %v3525
    %v3527 = vpop.f32.mrb[0].mxu0
    %v3528 = vpop.f32.mrb[0].mxu0
    %v3529 = vpop.f32.mrb[0].mxu0
    %3530 = vdwg.mxu0
    %v3531 = vld [vmem:[#allocation16] sm:$0x1f]
    %v3533 = vlaneseq
    %v3534 = vshrl.u32 %v3533, 7
    %v3535 = vsub.s32 0, %v3534
    %v3536 = vrot.slane %v3531, %v3535
    %v3537 = vlaneseq
    %v3538 = vshrl.u32 %v3537, 7
    %v3539 = vsub.s32 1, %v3538
    %v3540 = vrot.slane %v3531, %v3539
    %v3541 = vlaneseq
    %v3542 = vshrl.u32 %v3541, 7
    %v3543 = vsub.s32 2, %v3542
    %v3544 = vrot.slane %v3531, %v3543
    %v3545 = vlaneseq
    %v3546 = vshrl.u32 %v3545, 7
    %v3547 = vsub.s32 3, %v3546
    %v3548 = vrot.slane %v3531, %v3547
    %v3549 = vlaneseq
    %v3550 = vshrl.u32 %v3549, 7
    %v3551 = vsub.s32 4, %v3550
    %v3552 = vrot.slane %v3531, %v3551
    %v3558 = vmul.f32 %v3201, %v3536
    %v3559 = vmul.f32 %v3203, %v3540
    %v3560 = vmul.f32 %v3365, %v3544
    %v3561 = vmul.f32 %v3367, %v3548
    %v3562 = vmul.f32 %v3526, %v3552
    %v3563 = vld [vmem:[#allocation17] sm:$0x1f]
    %v3565 = vlaneseq
    %v3566 = vshrl.u32 %v3565, 7
    %v3567 = vsub.s32 0, %v3566
    %v3568 = vrot.slane %v3563, %v3567
    %v3569 = vlaneseq
    %v3570 = vshrl.u32 %v3569, 7
    %v3571 = vsub.s32 1, %v3570
    %v3572 = vrot.slane %v3563, %v3571
    %v3573 = vlaneseq
    %v3574 = vshrl.u32 %v3573, 7
    %v3575 = vsub.s32 2, %v3574
    %v3576 = vrot.slane %v3563, %v3575
    %v3577 = vlaneseq
    %v3578 = vshrl.u32 %v3577, 7
    %v3579 = vsub.s32 3, %v3578
    %v3580 = vrot.slane %v3563, %v3579
    %v3581 = vlaneseq
    %v3582 = vshrl.u32 %v3581, 7
    %v3583 = vsub.s32 4, %v3582
    %v3584 = vrot.slane %v3563, %v3583
    %v3590 = vadd.f32 %v3558, %v3568
    %v3591 = vadd.f32 %v3559, %v3572
    %v3592 = vadd.f32 %v3560, %v3576
    %v3593 = vadd.f32 %v3561, %v3580
    %v3594 = vadd.f32 %v3562, %v3584
    %v3595 = vmax.f32 %v3590, 0.0
    %v3596 = vmax.f32 %v3591, 0.0
    %v3597 = vmax.f32 %v3592, 0.0
    %v3598 = vmax.f32 %v3593, 0.0
    %v3599 = vmax.f32 %v3594, 0.0
    %v3600 = vpack.c.bf16 %v3595, %v3595
    %v3601 = vpack.c.bf16 %v3596, %v3596
    %v3602 = vpack.c.bf16 %v3597, %v3597
    %v3603 = vpack.c.bf16 %v3598, %v3598
    %v3604 = vpack.c.bf16 %v3599, %v3599
    %v3605 = vld [vmem:[#allocation19] sm:$0xff]
    %v3606 = vld [vmem:[#allocation19 + $0x8] sm:$0xff]
    %v3607 = vld [vmem:[#allocation19 + $0x10] sm:$0xff]
    %v3608 = vld [vmem:[#allocation19 + $0x18] sm:$0xff]
    %v3609 = vld [vmem:[#allocation19 + $0x20] sm:$0xff]
    %v3610 = vld [vmem:[#allocation19 + $0x28] sm:$0xff]
    %v3611 = vld [vmem:[#allocation19 + $0x30] sm:$0xff]
    %v3612 = vld [vmem:[#allocation19 + $0x38] sm:$0xff]
    %v3613 = vld [vmem:[#allocation19 + $0x40] sm:$0xff]
    %v3614 = vld [vmem:[#allocation19 + $0x48] sm:$0xff]
    %v3615 = vld [vmem:[#allocation19 + $0x50] sm:$0xff]
    %v3616 = vld [vmem:[#allocation19 + $0x58] sm:$0xff]
    %v3617 = vld [vmem:[#allocation19 + $0x60] sm:$0xff]
    %v3618 = vld [vmem:[#allocation19 + $0x68] sm:$0xff]
    %v3619 = vld [vmem:[#allocation19 + $0x70] sm:$0xff]
    %v3620 = vld [vmem:[#allocation19 + $0x78] sm:$0xff]
    %v3621 = vld [vmem:[#allocation19 + $0x80] sm:$0xff]
    %v3622 = vld [vmem:[#allocation19 + $0x88] sm:$0xff]
    %v3623 = vld [vmem:[#allocation19 + $0x90] sm:$0xff]
    %v3624 = vld [vmem:[#allocation19 + $0x98] sm:$0xff]
    %v3625 = vld [vmem:[#allocation19 + $0xa0] sm:$0xff]
    %v3626 = vld [vmem:[#allocation19 + $0xa8] sm:$0xff]
    %v3627 = vld [vmem:[#allocation19 + $0xb0] sm:$0xff]
    %v3628 = vld [vmem:[#allocation19 + $0xb8] sm:$0xff]
    %v3629 = vld [vmem:[#allocation19 + $0xc0] sm:$0xff]
    %v3630 = vld [vmem:[#allocation19 + $0xc8] sm:$0xff]
    %v3631 = vld [vmem:[#allocation19 + $0xd0] sm:$0xff]
    %v3632 = vld [vmem:[#allocation19 + $0xd8] sm:$0xff]
    %v3633 = vld [vmem:[#allocation19 + $0xe0] sm:$0xff]
    %v3634 = vld [vmem:[#allocation19 + $0xe8] sm:$0xff]
    %v3635 = vld [vmem:[#allocation19 + $0xf0] sm:$0xff]
    %v3636 = vld [vmem:[#allocation19 + $0xf8] sm:$0xff]
    %v3637 = vld [vmem:[#allocation19 + $0x100] sm:$0xff]
    %v3638 = vld [vmem:[#allocation19 + $0x108] sm:$0xff]
    %v3639 = vld [vmem:[#allocation19 + $0x110] sm:$0xff]
    %v3640 = vld [vmem:[#allocation19 + $0x118] sm:$0xff]
    %v3641 = vld [vmem:[#allocation19 + $0x120] sm:$0xff]
    %v3642 = vld [vmem:[#allocation19 + $0x128] sm:$0xff]
    %v3643 = vld [vmem:[#allocation19 + $0x130] sm:$0xff]
    %v3644 = vld [vmem:[#allocation19 + $0x138] sm:$0xff]
    %v3645 = vld [vmem:[#allocation19 + $0x140] sm:$0xff]
    %v3646 = vld [vmem:[#allocation19 + $0x148] sm:$0xff]
    %v3647 = vld [vmem:[#allocation19 + $0x150] sm:$0xff]
    %v3648 = vld [vmem:[#allocation19 + $0x158] sm:$0xff]
    %v3649 = vld [vmem:[#allocation19 + $0x160] sm:$0xff]
    %v3650 = vld [vmem:[#allocation19 + $0x168] sm:$0xff]
    %v3651 = vld [vmem:[#allocation19 + $0x170] sm:$0xff]
    %v3652 = vld [vmem:[#allocation19 + $0x178] sm:$0xff]
    %v3653 = vld [vmem:[#allocation19 + $0x180] sm:$0xff]
    %v3654 = vld [vmem:[#allocation19 + $0x188] sm:$0xff]
    %v3655 = vld [vmem:[#allocation19 + $0x190] sm:$0xff]
    %v3656 = vld [vmem:[#allocation19 + $0x198] sm:$0xff]
    %v3657 = vld [vmem:[#allocation19 + $0x1a0] sm:$0xff]
    %v3658 = vld [vmem:[#allocation19 + $0x1a8] sm:$0xff]
    %v3659 = vld [vmem:[#allocation19 + $0x1b0] sm:$0xff]
    %v3660 = vld [vmem:[#allocation19 + $0x1b8] sm:$0xff]
    %v3661 = vld [vmem:[#allocation19 + $0x1c0] sm:$0xff]
    %v3662 = vld [vmem:[#allocation19 + $0x1c8] sm:$0xff]
    %v3663 = vld [vmem:[#allocation19 + $0x1d0] sm:$0xff]
    %v3664 = vld [vmem:[#allocation19 + $0x1d8] sm:$0xff]
    %v3665 = vunpack.c.l.s8.bf16 %v3605
    %v3666 = vunpack.c.l.s8.bf16 %v3606
    %v3667 = vunpack.c.l.s8.bf16 %v3607
    %v3668 = vunpack.c.h.s8.bf16 %v3605
    %v3669 = vunpack.c.h.s8.bf16 %v3606
    %v3670 = vunpack.c.h.s8.bf16 %v3607
    %v3671 = vunpack.c.l.s8.bf16 %v3608
    %v3672 = vunpack.c.l.s8.bf16 %v3609
    %v3673 = vunpack.c.l.s8.bf16 %v3610
    %v3674 = vunpack.c.h.s8.bf16 %v3608
    %v3675 = vunpack.c.h.s8.bf16 %v3609
    %v3676 = vunpack.c.h.s8.bf16 %v3610
    %v3677 = vunpack.c.l.s8.bf16 %v3611
    %v3678 = vunpack.c.l.s8.bf16 %v3612
    %v3679 = vunpack.c.l.s8.bf16 %v3613
    %v3680 = vunpack.c.h.s8.bf16 %v3611
    %v3681 = vunpack.c.h.s8.bf16 %v3612
    %v3682 = vunpack.c.h.s8.bf16 %v3613
    %v3683 = vunpack.c.l.s8.bf16 %v3614
    %v3684 = vunpack.c.l.s8.bf16 %v3615
    %v3685 = vunpack.c.l.s8.bf16 %v3616
    %v3686 = vunpack.c.h.s8.bf16 %v3614
    %v3687 = vunpack.c.h.s8.bf16 %v3615
    %v3688 = vunpack.c.h.s8.bf16 %v3616
    %v3689 = vunpack.c.l.s8.bf16 %v3617
    %v3690 = vunpack.c.l.s8.bf16 %v3618
    %v3691 = vunpack.c.l.s8.bf16 %v3619
    %v3692 = vunpack.c.h.s8.bf16 %v3617
    %v3693 = vunpack.c.h.s8.bf16 %v3618
    %v3694 = vunpack.c.h.s8.bf16 %v3619
    %v3695 = vunpack.c.l.s8.bf16 %v3620
    %v3696 = vunpack.c.l.s8.bf16 %v3621
    %v3697 = vunpack.c.l.s8.bf16 %v3622
    %v3698 = vunpack.c.h.s8.bf16 %v3620
    %v3699 = vunpack.c.h.s8.bf16 %v3621
    %v3700 = vunpack.c.h.s8.bf16 %v3622
    %v3701 = vunpack.c.l.s8.bf16 %v3623
    %v3702 = vunpack.c.l.s8.bf16 %v3624
    %v3703 = vunpack.c.l.s8.bf16 %v3625
    %v3704 = vunpack.c.h.s8.bf16 %v3623
    %v3705 = vunpack.c.h.s8.bf16 %v3624
    %v3706 = vunpack.c.h.s8.bf16 %v3625
    %v3707 = vunpack.c.l.s8.bf16 %v3626
    %v3708 = vunpack.c.l.s8.bf16 %v3627
    %v3709 = vunpack.c.l.s8.bf16 %v3628
    %v3710 = vunpack.c.h.s8.bf16 %v3626
    %v3711 = vunpack.c.h.s8.bf16 %v3627
    %v3712 = vunpack.c.h.s8.bf16 %v3628
    %v3713 = vunpack.c.l.s8.bf16 %v3629
    %v3714 = vunpack.c.l.s8.bf16 %v3630
    %v3715 = vunpack.c.l.s8.bf16 %v3631
    %v3716 = vunpack.c.h.s8.bf16 %v3629
    %v3717 = vunpack.c.h.s8.bf16 %v3630
    %v3718 = vunpack.c.h.s8.bf16 %v3631
    %v3719 = vunpack.c.l.s8.bf16 %v3632
    %v3720 = vunpack.c.l.s8.bf16 %v3633
    %v3721 = vunpack.c.l.s8.bf16 %v3634
    %v3722 = vunpack.c.h.s8.bf16 %v3632
    %v3723 = vunpack.c.h.s8.bf16 %v3633
    %v3724 = vunpack.c.h.s8.bf16 %v3634
    %v3725 = vunpack.c.l.s8.bf16 %v3635
    %v3726 = vunpack.c.l.s8.bf16 %v3636
    %v3727 = vunpack.c.l.s8.bf16 %v3637
    %v3728 = vunpack.c.h.s8.bf16 %v3635
    %v3729 = vunpack.c.h.s8.bf16 %v3636
    %v3730 = vunpack.c.h.s8.bf16 %v3637
    %v3731 = vunpack.c.l.s8.bf16 %v3638
    %v3732 = vunpack.c.l.s8.bf16 %v3639
    %v3733 = vunpack.c.l.s8.bf16 %v3640
    %v3734 = vunpack.c.h.s8.bf16 %v3638
    %v3735 = vunpack.c.h.s8.bf16 %v3639
    %v3736 = vunpack.c.h.s8.bf16 %v3640
    %v3737 = vunpack.c.l.s8.bf16 %v3641
    %v3738 = vunpack.c.l.s8.bf16 %v3642
    %v3739 = vunpack.c.l.s8.bf16 %v3643
    %v3740 = vunpack.c.h.s8.bf16 %v3641
    %v3741 = vunpack.c.h.s8.bf16 %v3642
    %v3742 = vunpack.c.h.s8.bf16 %v3643
    %v3743 = vunpack.c.l.s8.bf16 %v3644
    %v3744 = vunpack.c.l.s8.bf16 %v3645
    %v3745 = vunpack.c.l.s8.bf16 %v3646
    %v3746 = vunpack.c.h.s8.bf16 %v3644
    %v3747 = vunpack.c.h.s8.bf16 %v3645
    %v3748 = vunpack.c.h.s8.bf16 %v3646
    %v3749 = vunpack.c.l.s8.bf16 %v3647
    %v3750 = vunpack.c.l.s8.bf16 %v3648
    %v3751 = vunpack.c.l.s8.bf16 %v3649
    %v3752 = vunpack.c.h.s8.bf16 %v3647
    %v3753 = vunpack.c.h.s8.bf16 %v3648
    %v3754 = vunpack.c.h.s8.bf16 %v3649
    %v3755 = vunpack.c.l.s8.bf16 %v3650
    %v3756 = vunpack.c.l.s8.bf16 %v3651
    %v3757 = vunpack.c.l.s8.bf16 %v3652
    %v3758 = vunpack.c.h.s8.bf16 %v3650
    %v3759 = vunpack.c.h.s8.bf16 %v3651
    %v3760 = vunpack.c.h.s8.bf16 %v3652
    %v3761 = vunpack.c.l.s8.bf16 %v3653
    %v3762 = vunpack.c.l.s8.bf16 %v3654
    %v3763 = vunpack.c.l.s8.bf16 %v3655
    %v3764 = vunpack.c.h.s8.bf16 %v3653
    %v3765 = vunpack.c.h.s8.bf16 %v3654
    %v3766 = vunpack.c.h.s8.bf16 %v3655
    %v3767 = vunpack.c.l.s8.bf16 %v3656
    %v3768 = vunpack.c.l.s8.bf16 %v3657
    %v3769 = vunpack.c.l.s8.bf16 %v3658
    %v3770 = vunpack.c.h.s8.bf16 %v3656
    %v3771 = vunpack.c.h.s8.bf16 %v3657
    %v3772 = vunpack.c.h.s8.bf16 %v3658
    %v3773 = vunpack.c.l.s8.bf16 %v3659
    %v3774 = vunpack.c.l.s8.bf16 %v3660
    %v3775 = vunpack.c.l.s8.bf16 %v3661
    %v3776 = vunpack.c.h.s8.bf16 %v3659
    %v3777 = vunpack.c.h.s8.bf16 %v3660
    %v3778 = vunpack.c.h.s8.bf16 %v3661
    %v3779 = vunpack.c.l.s8.bf16 %v3662
    %v3780 = vunpack.c.l.s8.bf16 %v3663
    %v3781 = vunpack.c.l.s8.bf16 %v3664
    %v3782 = vunpack.c.h.s8.bf16 %v3662
    %v3783 = vunpack.c.h.s8.bf16 %v3663
    %v3784 = vunpack.c.h.s8.bf16 %v3664
    %3785 = vmatprep.subr.bf16.mxu0 %v3666
    %3786 = vmatpush1.bf16.msra.mxu0 %v3665
    %3787 = vmatprep.subr.bf16.mxu0 %v3669
    %3788 = vmatpush1.bf16.msra.mxu0 %v3668
    %3789 = vmatprep.subr.bf16.mxu0 %v3672
    %3790 = vmatpush1.bf16.msra.mxu0 %v3671
    %3791 = vmatprep.subr.bf16.mxu0 %v3675
    %3792 = vmatpush1.bf16.msra.mxu0 %v3674
    %3793 = vmatprep.subr.bf16.mxu0 %v3678
    %3794 = vmatpush1.bf16.msra.mxu0 %v3677
    %3795 = vmatprep.subr.bf16.mxu0 %v3681
    %3796 = vmatpush1.bf16.msra.mxu0 %v3680
    %3797 = vmatprep.subr.bf16.mxu0 %v3684
    %3798 = vmatpush1.bf16.msra.mxu0 %v3683
    %3799 = vmatprep.subr.bf16.mxu0 %v3687
    %3800 = vmatpush1.bf16.msra.mxu0 %v3686
    %3801 = vmatprep.subr.bf16.mxu0 %v3690
    %3802 = vmatpush1.bf16.msra.mxu0 %v3689
    %3803 = vmatprep.subr.bf16.mxu0 %v3693
    %3804 = vmatpush1.bf16.msra.mxu0 %v3692
    %3805 = vmatprep.subr.bf16.mxu0 %v3696
    %3806 = vmatpush1.bf16.msra.mxu0 %v3695
    %3807 = vmatprep.subr.bf16.mxu0 %v3699
    %3808 = vmatpush1.bf16.msra.mxu0 %v3698
    %3809 = vmatprep.subr.bf16.mxu0 %v3702
    %3810 = vmatpush1.bf16.msra.mxu0 %v3701
    %3811 = vmatprep.subr.bf16.mxu0 %v3705
    %3812 = vmatpush1.bf16.msra.mxu0 %v3704
    %3813 = vmatprep.subr.bf16.mxu0 %v3708
    %3814 = vmatpush1.bf16.msra.mxu0 %v3707
    %3815 = vmatprep.subr.bf16.mxu0 %v3711
    %3816 = vmatpush1.bf16.msra.mxu0 %v3710
    %3817 = vmatprep.mubr.bf16.mxu0 %v3601
    %3818 = vmatmul.mubr.bf16.gmra.mrb[0].mxu0 %v3600
    %v3819 = vpop.f32.mrb[0].mxu0
    %v3820 = vadd.f32 0.0, %v3819
    %v3821 = vpop.f32.mrb[0].mxu0
    %v3822 = vadd.f32 0.0, %v3821
    %v3823 = vpop.f32.mrb[0].mxu0
    %v3824 = vpop.f32.mrb[0].mxu0
    %3825 = vdwg.mxu0
    %3826 = vmatprep.subr.bf16.mxu0 %v3714
    %3827 = vmatpush1.bf16.msra.mxu0 %v3713
    %3828 = vmatprep.subr.bf16.mxu0 %v3717
    %3829 = vmatpush1.bf16.msra.mxu0 %v3716
    %3830 = vmatprep.subr.bf16.mxu0 %v3720
    %3831 = vmatpush1.bf16.msra.mxu0 %v3719
    %3832 = vmatprep.subr.bf16.mxu0 %v3723
    %3833 = vmatpush1.bf16.msra.mxu0 %v3722
    %3834 = vmatprep.subr.bf16.mxu0 %v3726
    %3835 = vmatpush1.bf16.msra.mxu0 %v3725
    %3836 = vmatprep.subr.bf16.mxu0 %v3729
    %3837 = vmatpush1.bf16.msra.mxu0 %v3728
    %3838 = vmatprep.subr.bf16.mxu0 %v3732
    %3839 = vmatpush1.bf16.msra.mxu0 %v3731
    %3840 = vmatprep.subr.bf16.mxu0 %v3735
    %3841 = vmatpush1.bf16.msra.mxu0 %v3734
    %3842 = vmatprep.subr.bf16.mxu0 %v3738
    %3843 = vmatpush1.bf16.msra.mxu0 %v3737
    %3844 = vmatprep.subr.bf16.mxu0 %v3741
    %3845 = vmatpush1.bf16.msra.mxu0 %v3740
    %3846 = vmatprep.subr.bf16.mxu0 %v3744
    %3847 = vmatpush1.bf16.msra.mxu0 %v3743
    %3848 = vmatprep.subr.bf16.mxu0 %v3747
    %3849 = vmatpush1.bf16.msra.mxu0 %v3746
    %3850 = vmatprep.subr.bf16.mxu0 %v3750
    %3851 = vmatpush1.bf16.msra.mxu0 %v3749
    %3852 = vmatprep.subr.bf16.mxu0 %v3753
    %3853 = vmatpush1.bf16.msra.mxu0 %v3752
    %3854 = vmatprep.subr.bf16.mxu0 %v3756
    %3855 = vmatpush1.bf16.msra.mxu0 %v3755
    %3856 = vmatprep.subr.bf16.mxu0 %v3759
    %3857 = vmatpush1.bf16.msra.mxu0 %v3758
    %3858 = vmatprep.mubr.bf16.mxu0 %v3603
    %3859 = vmatmul.mubr.bf16.gmra.mrb[0].mxu0 %v3602
    %v3860 = vpop.f32.mrb[0].mxu0
    %v3861 = vadd.f32 %v3820, %v3860
    %v3862 = vpop.f32.mrb[0].mxu0
    %v3863 = vadd.f32 %v3822, %v3862
    %v3864 = vpop.f32.mrb[0].mxu0
    %v3865 = vpop.f32.mrb[0].mxu0
    %3866 = vdwg.mxu0
    %3867 = vmatprep.subr.bf16.mxu0 %v3762
    %3868 = vmatpush1.bf16.msra.mxu0 %v3761
    %3869 = vmatprep.subr.bf16.mxu0 %v3765
    %3870 = vmatpush1.bf16.msra.mxu0 %v3764
    %3871 = vmatprep.subr.bf16.mxu0 %v3768
    %3872 = vmatpush1.bf16.msra.mxu0 %v3767
    %3873 = vmatprep.subr.bf16.mxu0 %v3771
    %3874 = vmatpush1.bf16.msra.mxu0 %v3770
    %3875 = vmatprep.subr.bf16.mxu0 %v3774
    %3876 = vmatpush1.bf16.msra.mxu0 %v3773
    %3877 = vmatprep.subr.bf16.mxu0 %v3777
    %3878 = vmatpush1.bf16.msra.mxu0 %v3776
    %3879 = vmatprep.subr.bf16.mxu0 %v3780
    %3880 = vmatpush1.bf16.msra.mxu0 %v3779
    %3881 = vmatprep.subr.bf16.mxu0 %v3783
    %3882 = vmatpush1.bf16.msra.mxu0 %v3782
    %3883 = vmatprep.subr.bf16.mxu0 0
    %3884 = vmatpush1.bf16.msra.mxu0 0
    %3885 = vmatprep.subr.bf16.mxu0 0
    %3886 = vmatpush1.bf16.msra.mxu0 0
    %3887 = vmatprep.subr.bf16.mxu0 0
    %3888 = vmatpush1.bf16.msra.mxu0 0
    %3889 = vmatprep.subr.bf16.mxu0 0
    %3890 = vmatpush1.bf16.msra.mxu0 0
    %3891 = vmatprep.subr.bf16.mxu0 0
    %3892 = vmatpush1.bf16.msra.mxu0 0
    %3893 = vmatprep.subr.bf16.mxu0 0
    %3894 = vmatpush1.bf16.msra.mxu0 0
    %3895 = vmatprep.subr.bf16.mxu0 0
    %3896 = vmatpush1.bf16.msra.mxu0 0
    %3897 = vmatprep.subr.bf16.mxu0 0
    %3898 = vmatpush1.bf16.msra.mxu0 0
    %3899 = vmatprep.mubr.bf16.mxu0 0
    %3900 = vmatmul.mubr.bf16.gmra.mrb[0].mxu0 %v3604
    %v3901 = vpop.f32.mrb[0].mxu0
    %v3902 = vadd.f32 %v3861, %v3901
    %v3903 = vpop.f32.mrb[0].mxu0
    %v3904 = vadd.f32 %v3863, %v3903
    %v3905 = vpop.f32.mrb[0].mxu0
    %v3906 = vpop.f32.mrb[0].mxu0
    %3907 = vdwg.mxu0
    %3908 = vmatprep.subr.bf16.mxu0 0
    %3909 = vmatpush1.bf16.msra.mxu0 %v3667
    %3910 = vmatprep.subr.bf16.mxu0 0
    %3911 = vmatpush1.bf16.msra.mxu0 %v3670
    %3912 = vmatprep.subr.bf16.mxu0 0
    %3913 = vmatpush1.bf16.msra.mxu0 %v3673
    %3914 = vmatprep.subr.bf16.mxu0 0
    %3915 = vmatpush1.bf16.msra.mxu0 %v3676
    %3916 = vmatprep.subr.bf16.mxu0 0
    %3917 = vmatpush1.bf16.msra.mxu0 %v3679
    %3918 = vmatprep.subr.bf16.mxu0 0
    %3919 = vmatpush1.bf16.msra.mxu0 %v3682
    %3920 = vmatprep.subr.bf16.mxu0 0
    %3921 = vmatpush1.bf16.msra.mxu0 %v3685
    %3922 = vmatprep.subr.bf16.mxu0 0
    %3923 = vmatpush1.bf16.msra.mxu0 %v3688
    %3924 = vmatprep.subr.bf16.mxu0 0
    %3925 = vmatpush1.bf16.msra.mxu0 %v3691
    %3926 = vmatprep.subr.bf16.mxu0 0
    %3927 = vmatpush1.bf16.msra.mxu0 %v3694
    %3928 = vmatprep.subr.bf16.mxu0 0
    %3929 = vmatpush1.bf16.msra.mxu0 %v3697
    %3930 = vmatprep.subr.bf16.mxu0 0
    %3931 = vmatpush1.bf16.msra.mxu0 %v3700
    %3932 = vmatprep.subr.bf16.mxu0 0
    %3933 = vmatpush1.bf16.msra.mxu0 %v3703
    %3934 = vmatprep.subr.bf16.mxu0 0
    %3935 = vmatpush1.bf16.msra.mxu0 %v3706
    %3936 = vmatprep.subr.bf16.mxu0 0
    %3937 = vmatpush1.bf16.msra.mxu0 %v3709
    %3938 = vmatprep.subr.bf16.mxu0 0
    %3939 = vmatpush1.bf16.msra.mxu0 %v3712
    %3940 = vmatprep.mubr.bf16.mxu0 %v3601
    %3941 = vmatmul.mubr.bf16.gmra.mrb[0].mxu0 %v3600
    %v3942 = vpop.f32.mrb[0].mxu0
    %v3943 = vadd.f32 0.0, %v3942
    %v3944 = vpop.f32.mrb[0].mxu0
    %v3945 = vpop.f32.mrb[0].mxu0
    %v3946 = vpop.f32.mrb[0].mxu0
    %3947 = vdwg.mxu0
    %3948 = vmatprep.subr.bf16.mxu0 0
    %3949 = vmatpush1.bf16.msra.mxu0 %v3715
    %3950 = vmatprep.subr.bf16.mxu0 0
    %3951 = vmatpush1.bf16.msra.mxu0 %v3718
    %3952 = vmatprep.subr.bf16.mxu0 0
    %3953 = vmatpush1.bf16.msra.mxu0 %v3721
    %3954 = vmatprep.subr.bf16.mxu0 0
    %3955 = vmatpush1.bf16.msra.mxu0 %v3724
    %3956 = vmatprep.subr.bf16.mxu0 0
    %3957 = vmatpush1.bf16.msra.mxu0 %v3727
    %3958 = vmatprep.subr.bf16.mxu0 0
    %3959 = vmatpush1.bf16.msra.mxu0 %v3730
    %3960 = vmatprep.subr.bf16.mxu0 0
    %3961 = vmatpush1.bf16.msra.mxu0 %v3733
    %3962 = vmatprep.subr.bf16.mxu0 0
    %3963 = vmatpush1.bf16.msra.mxu0 %v3736
    %3964 = vmatprep.subr.bf16.mxu0 0
    %3965 = vmatpush1.bf16.msra.mxu0 %v3739
    %3966 = vmatprep.subr.bf16.mxu0 0
    %3967 = vmatpush1.bf16.msra.mxu0 %v3742
    %3968 = vmatprep.subr.bf16.mxu0 0
    %3969 = vmatpush1.bf16.msra.mxu0 %v3745
    %3970 = vmatprep.subr.bf16.mxu0 0
    %3971 = vmatpush1.bf16.msra.mxu0 %v3748
    %3972 = vmatprep.subr.bf16.mxu0 0
    %3973 = vmatpush1.bf16.msra.mxu0 %v3751
    %3974 = vmatprep.subr.bf16.mxu0 0
    %3975 = vmatpush1.bf16.msra.mxu0 %v3754
    %3976 = vmatprep.subr.bf16.mxu0 0
    %3977 = vmatpush1.bf16.msra.mxu0 %v3757
    %3978 = vmatprep.subr.bf16.mxu0 0
    %3979 = vmatpush1.bf16.msra.mxu0 %v3760
    %3980 = vmatprep.mubr.bf16.mxu0 %v3603
    %3981 = vmatmul.mubr.bf16.gmra.mrb[0].mxu0 %v3602
    %v3982 = vpop.f32.mrb[0].mxu0
    %v3983 = vadd.f32 %v3943, %v3982
    %v3984 = vpop.f32.mrb[0].mxu0
    %v3985 = vpop.f32.mrb[0].mxu0
    %v3986 = vpop.f32.mrb[0].mxu0
    %3987 = vdwg.mxu0
    %3988 = vmatprep.subr.bf16.mxu0 0
    %3989 = vmatpush1.bf16.msra.mxu0 %v3763
    %3990 = vmatprep.subr.bf16.mxu0 0
    %3991 = vmatpush1.bf16.msra.mxu0 %v3766
    %3992 = vmatprep.subr.bf16.mxu0 0
    %3993 = vmatpush1.bf16.msra.mxu0 %v3769
    %3994 = vmatprep.subr.bf16.mxu0 0
    %3995 = vmatpush1.bf16.msra.mxu0 %v3772
    %3996 = vmatprep.subr.bf16.mxu0 0
    %3997 = vmatpush1.bf16.msra.mxu0 %v3775
    %3998 = vmatprep.subr.bf16.mxu0 0
    %3999 = vmatpush1.bf16.msra.mxu0 %v3778
    %4000 = vmatprep.subr.bf16.mxu0 0
    %4001 = vmatpush1.bf16.msra.mxu0 %v3781
    %4002 = vmatprep.subr.bf16.mxu0 0
    %4003 = vmatpush1.bf16.msra.mxu0 %v3784
    %4004 = vmatprep.subr.bf16.mxu0 0
    %4005 = vmatpush1.bf16.msra.mxu0 0
    %4006 = vmatprep.subr.bf16.mxu0 0
    %4007 = vmatpush1.bf16.msra.mxu0 0
    %4008 = vmatprep.subr.bf16.mxu0 0
    %4009 = vmatpush1.bf16.msra.mxu0 0
    %4010 = vmatprep.subr.bf16.mxu0 0
    %4011 = vmatpush1.bf16.msra.mxu0 0
    %4012 = vmatprep.subr.bf16.mxu0 0
    %4013 = vmatpush1.bf16.msra.mxu0 0
    %4014 = vmatprep.subr.bf16.mxu0 0
    %4015 = vmatpush1.bf16.msra.mxu0 0
    %4016 = vmatprep.subr.bf16.mxu0 0
    %4017 = vmatpush1.bf16.msra.mxu0 0
    %4018 = vmatprep.subr.bf16.mxu0 0
    %4019 = vmatpush1.bf16.msra.mxu0 0
    %4020 = vmatprep.mubr.bf16.mxu0 0
    %4021 = vmatmul.mubr.bf16.gmra.mrb[0].mxu0 %v3604
    %v4022 = vpop.f32.mrb[0].mxu0
    %v4023 = vadd.f32 %v3983, %v4022
    %v4024 = vpop.f32.mrb[0].mxu0
    %v4025 = vpop.f32.mrb[0].mxu0
    %v4026 = vpop.f32.mrb[0].mxu0
    %4027 = vdwg.mxu0
    %v4028 = vld [vmem:[#allocation20] sm:$0x7]
    %v4030 = vlaneseq
    %v4031 = vshrl.u32 %v4030, 7
    %v4032 = vsub.s32 0, %v4031
    %v4033 = vrot.slane %v4028, %v4032
    %v4034 = vlaneseq
    %v4035 = vshrl.u32 %v4034, 7
    %v4036 = vsub.s32 1, %v4035
    %v4037 = vrot.slane %v4028, %v4036
    %v4038 = vlaneseq
    %v4039 = vshrl.u32 %v4038, 7
    %v4040 = vsub.s32 2, %v4039
    %v4041 = vrot.slane %v4028, %v4040
    %v4045 = vmul.f32 %v3902, %v4033
    %v4046 = vmul.f32 %v3904, %v4037
    %v4047 = vmul.f32 %v4023, %v4041
    %v4048 = vld [vmem:[#allocation22] sm:$0x7]
    %v4050 = vlaneseq
    %v4051 = vshrl.u32 %v4050, 7
    %v4052 = vsub.s32 0, %v4051
    %v4053 = vrot.slane %v4048, %v4052
    %v4054 = vlaneseq
    %v4055 = vshrl.u32 %v4054, 7
    %v4056 = vsub.s32 1, %v4055
    %v4057 = vrot.slane %v4048, %v4056
    %v4058 = vlaneseq
    %v4059 = vshrl.u32 %v4058, 7
    %v4060 = vsub.s32 2, %v4059
    %v4061 = vrot.slane %v4048, %v4060
    %v4065 = vadd.f32 %v4045, %v4053
    %v4066 = vadd.f32 %v4046, %v4057
    %v4067 = vadd.f32 %v4047, %v4061
    %v4068 = vmax.f32 %v4065, 0.0
    %v4069 = vmax.f32 %v4066, 0.0
    %v4070 = vmax.f32 %v4067, 0.0
    %v4071 = vpack.c.bf16 %v4068, %v4068
    %v4072 = vpack.c.bf16 %v4069, %v4069
    %v4073 = vpack.c.bf16 %v4070, %v4070
    %v4074 = vld [vmem:[#allocation23] sm:$0xff]
    %v4075 = vld [vmem:[#allocation23 + $0x8] sm:$0xff]
    %v4076 = vld [vmem:[#allocation23 + $0x10] sm:$0xff]
    %v4077 = vld [vmem:[#allocation23 + $0x18] sm:$0xff]
    %v4078 = vld [vmem:[#allocation23 + $0x20] sm:$0xff]
    %v4079 = vld [vmem:[#allocation23 + $0x28] sm:$0xff]
    %v4080 = vld [vmem:[#allocation23 + $0x30] sm:$0xff]
    %v4081 = vld [vmem:[#allocation23 + $0x38] sm:$0xff]
    %v4082 = vld [vmem:[#allocation23 + $0x40] sm:$0xff]
    %v4083 = vld [vmem:[#allocation23 + $0x48] sm:$0xff]
    %v4084 = vld [vmem:[#allocation23 + $0x50] sm:$0xff]
    %v4085 = vld [vmem:[#allocation23 + $0x58] sm:$0xff]
    %v4086 = vunpack.c.l.s8.bf16 %v4074
    %v4087 = vunpack.c.h.s8.bf16 %v4074
    %v4088 = vunpack.c.l.s8.bf16 %v4075
    %v4089 = vunpack.c.h.s8.bf16 %v4075
    %v4090 = vunpack.c.l.s8.bf16 %v4076
    %v4091 = vunpack.c.h.s8.bf16 %v4076
    %v4092 = vunpack.c.l.s8.bf16 %v4077
    %v4093 = vunpack.c.h.s8.bf16 %v4077
    %v4094 = vunpack.c.l.s8.bf16 %v4078
    %v4095 = vunpack.c.h.s8.bf16 %v4078
    %v4096 = vunpack.c.l.s8.bf16 %v4079
    %v4097 = vunpack.c.h.s8.bf16 %v4079
    %v4098 = vunpack.c.l.s8.bf16 %v4080
    %v4099 = vunpack.c.h.s8.bf16 %v4080
    %v4100 = vunpack.c.l.s8.bf16 %v4081
    %v4101 = vunpack.c.h.s8.bf16 %v4081
    %v4102 = vunpack.c.l.s8.bf16 %v4082
    %v4103 = vunpack.c.h.s8.bf16 %v4082
    %v4104 = vunpack.c.l.s8.bf16 %v4083
    %v4105 = vunpack.c.h.s8.bf16 %v4083
    %v4106 = vunpack.c.l.s8.bf16 %v4084
    %v4107 = vunpack.c.h.s8.bf16 %v4084
    %v4108 = vunpack.c.l.s8.bf16 %v4085
    %v4109 = vunpack.c.h.s8.bf16 %v4085
    %4110 = vmatprep.subr.bf16.mxu0 0
    %4111 = vmatpush1.bf16.msra.mxu0 %v4086
    %4112 = vmatprep.subr.bf16.mxu0 0
    %4113 = vmatpush1.bf16.msra.mxu0 %v4087
    %4114 = vmatprep.subr.bf16.mxu0 0
    %4115 = vmatpush1.bf16.msra.mxu0 %v4088
    %4116 = vmatprep.subr.bf16.mxu0 0
    %4117 = vmatpush1.bf16.msra.mxu0 %v4089
    %4118 = vmatprep.subr.bf16.mxu0 0
    %4119 = vmatpush1.bf16.msra.mxu0 %v4090
    %4120 = vmatprep.subr.bf16.mxu0 0
    %4121 = vmatpush1.bf16.msra.mxu0 %v4091
    %4122 = vmatprep.subr.bf16.mxu0 0
    %4123 = vmatpush1.bf16.msra.mxu0 %v4092
    %4124 = vmatprep.subr.bf16.mxu0 0
    %4125 = vmatpush1.bf16.msra.mxu0 %v4093
    %4126 = vmatprep.subr.bf16.mxu0 0
    %4127 = vmatpush1.bf16.msra.mxu0 %v4094
    %4128 = vmatprep.subr.bf16.mxu0 0
    %4129 = vmatpush1.bf16.msra.mxu0 %v4095
    %4130 = vmatprep.subr.bf16.mxu0 0
    %4131 = vmatpush1.bf16.msra.mxu0 %v4096
    %4132 = vmatprep.subr.bf16.mxu0 0
    %4133 = vmatpush1.bf16.msra.mxu0 %v4097
    %4134 = vmatprep.subr.bf16.mxu0 0
    %4135 = vmatpush1.bf16.msra.mxu0 %v4098
    %4136 = vmatprep.subr.bf16.mxu0 0
    %4137 = vmatpush1.bf16.msra.mxu0 %v4099
    %4138 = vmatprep.subr.bf16.mxu0 0
    %4139 = vmatpush1.bf16.msra.mxu0 %v4100
    %4140 = vmatprep.subr.bf16.mxu0 0
    %4141 = vmatpush1.bf16.msra.mxu0 %v4101
    %4142 = vmatprep.mubr.bf16.mxu0 %v4072
    %4143 = vmatmul.mubr.bf16.gmra.mrb[0].mxu0 %v4071
    %v4144 = vpop.f32.mrb[0].mxu0
    %v4145 = vadd.f32 0.0, %v4144
    %v4146 = vpop.f32.mrb[0].mxu0
    %v4147 = vpop.f32.mrb[0].mxu0
    %v4148 = vpop.f32.mrb[0].mxu0
    %4149 = vdwg.mxu0
    %4150 = vmatprep.subr.bf16.mxu0 0
    %4151 = vmatpush1.bf16.msra.mxu0 %v4102
    %4152 = vmatprep.subr.bf16.mxu0 0
    %4153 = vmatpush1.bf16.msra.mxu0 %v4103
    %4154 = vmatprep.subr.bf16.mxu0 0
    %4155 = vmatpush1.bf16.msra.mxu0 %v4104
    %4156 = vmatprep.subr.bf16.mxu0 0
    %4157 = vmatpush1.bf16.msra.mxu0 %v4105
    %4158 = vmatprep.subr.bf16.mxu0 0
    %4159 = vmatpush1.bf16.msra.mxu0 %v4106
    %4160 = vmatprep.subr.bf16.mxu0 0
    %4161 = vmatpush1.bf16.msra.mxu0 %v4107
    %4162 = vmatprep.subr.bf16.mxu0 0
    %4163 = vmatpush1.bf16.msra.mxu0 %v4108
    %4164 = vmatprep.subr.bf16.mxu0 0
    %4165 = vmatpush1.bf16.msra.mxu0 %v4109
    %4166 = vmatprep.subr.bf16.mxu0 0
    %4167 = vmatpush1.bf16.msra.mxu0 0
    %4168 = vmatprep.subr.bf16.mxu0 0
    %4169 = vmatpush1.bf16.msra.mxu0 0
    %4170 = vmatprep.subr.bf16.mxu0 0
    %4171 = vmatpush1.bf16.msra.mxu0 0
    %4172 = vmatprep.subr.bf16.mxu0 0
    %4173 = vmatpush1.bf16.msra.mxu0 0
    %4174 = vmatprep.subr.bf16.mxu0 0
    %4175 = vmatpush1.bf16.msra.mxu0 0
    %4176 = vmatprep.subr.bf16.mxu0 0
    %4177 = vmatpush1.bf16.msra.mxu0 0
    %4178 = vmatprep.subr.bf16.mxu0 0
    %4179 = vmatpush1.bf16.msra.mxu0 0
    %4180 = vmatprep.subr.bf16.mxu0 0
    %4181 = vmatpush1.bf16.msra.mxu0 0
    %4182 = vmatprep.mubr.bf16.mxu0 0
    %4183 = vmatmul.mubr.bf16.gmra.mrb[0].mxu0 %v4073
    %v4184 = vpop.f32.mrb[0].mxu0
    %v4185 = vadd.f32 %v4145, %v4184
    %v4186 = vpop.f32.mrb[0].mxu0
    %v4187 = vpop.f32.mrb[0].mxu0
    %v4188 = vpop.f32.mrb[0].mxu0
    %4189 = vdwg.mxu0
    %v4190 = vld [vmem:[#allocation25] sm:$0x1]
    %v4192 = vlaneseq
    %v4193 = vshrl.u32 %v4192, 7
    %v4194 = vsub.s32 0, %v4193
    %v4195 = vrot.slane %v4190, %v4194
    %v4197 = vmul.f32 %v4185, %v4195
    %v4198 = vld [vmem:[#allocation26] sm:$0x1]
    %v4200 = vlaneseq
    %v4201 = vshrl.u32 %v4200, 7
    %v4202 = vsub.s32 0, %v4201
    %v4203 = vrot.slane %v4198, %v4202
    %v4205 = vadd.f32 %v4197, %v4203
    %4206 = vst [vmem:[#allocation28] sm:$0xff] %v4205
    // Predicated region
    $region130: #{tpu_custom_call.1} parent=1 // pred_check
      _
    $region131: #{tpu_custom_call.1} parent=1 // pred_check_branch
      %4208 = sbr.rel (0) target = $region133
    $region132: #{tpu_custom_call.1} parent=1 // pred_region
      %s4210 = ssub.s32 128, 128
      %4211 = vsyncadd [#allocation4], %s4210
      %s4213 = sshll.u32 [#allocation28], 4
      %s4214 = int_to_ptr.vmem [resolvable:$true] %s4213
      %4216 = dma.vmem_to_hbm [thread:$0]  %s4214, 128, %s16, [#allocation4]
    $region133: #{tpu_custom_call.1} parent=1 // pred_fallthru
      _
    // Predicated region
    $region134: #{tpu_custom_call.1} parent=1 // pred_check
      _
    $region135: #{tpu_custom_call.1} parent=1 // pred_check_branch
      %4218 = sbr.rel (0) target = $region137
    $region136: #{tpu_custom_call.1} parent=1 // pred_region
      %4219 = dma.done [#allocation4], 128
    $region137: #{tpu_custom_call.1} parent=1 // pred_fallthru
      _
    %4220 = vsyncpa [#allocation3], 1
    %4221 = vsyncpa [#allocation6], 1
    %4222 = vsyncpa [#allocation9], 1
    %4223 = vsyncpa [#allocation12], 1
    %4224 = vsyncpa [#allocation15], 1
    %4225 = vsyncpa [#allocation18], 1
    %4226 = vsyncpa [#allocation21], 1
    %4227 = vsyncpa [#allocation24], 1
    %4228 = vsyncpa [#allocation27], 1
    %4229 = vsyncpa [#allocation4], 1

</llo_original>
